<compile_context>
chip_gen: v7x
topology: tpu7x:2x2x1
jax: 0.10.0
libtpu: 0.0.40
codegen_flags: <defaults>
</compile_context>

<pallas_src>
import jax
import jax.numpy as jnp
from jax.experimental import pallas as pl
from jax.experimental.pallas import tpu as pltpu

_LANE = 128
_VMEM_LIMIT = 48 * 1024 * 1024   # explicit scoped-VMEM budget (v7x: 64 MiB/TC)


# --------------------------------------------------------------------------
# small static helpers (tile / padding selection; all Python-level)
# --------------------------------------------------------------------------
def _round_up(x, m):
    return ((x + m - 1) // m) * m


def _pad_last(a, target):
    cur = a.shape[-1]
    if cur == target:
        return a
    pad = [(0, 0)] * (a.ndim - 1) + [(0, target - cur)]
    return jnp.pad(a, pad)


def _pad_2d(w, rows, cols):
    r, c = w.shape
    if (r, c) == (rows, cols):
        return w
    return jnp.pad(w, ((0, rows - r), (0, cols - c)))


def _row_tile(n_rows, pref=512):
    """Token-kernel row tile: big (amortize ~0.35us/step) but >=2 grid blocks."""
    if n_rows >= 2 * pref:
        return pref
    t = max(8, -(-n_rows // 2))
    t = _round_up(t, 8)
    return min(t, n_rows)


def _line_tile(n_lines, length, channels, pref=64, vmem_budget=_VMEM_LIMIT // 2):
    """Attention-kernel line tile, capped by a rough VMEM working-set budget."""
    per_line = length * channels * 32 + length * length * 8
    cap = max(1, vmem_budget // max(per_line, 1))
    t = int(min(pref, cap))
    if n_lines < 2 * t:          # keep >=2 grid blocks (v7x: 2 TensorCores)
        t = max(1, -(-n_lines // 2))
    return min(t, n_lines)


# --------------------------------------------------------------------------
# Kernel 1: conv_down (1x1) + folded BN + ReLU   (tokens x channels)
# --------------------------------------------------------------------------
def _conv_bn_relu_kernel(x_ref, w_ref, s_ref, b_ref, o_ref):
    x = x_ref[...].astype(jnp.bfloat16)                          # bf16 MXU input
    y = jnp.dot(x, w_ref[...], preferred_element_type=jnp.float32)
    y = y * s_ref[...] + b_ref[...]                              # bn1 (eval, f32)
    o_ref[...] = jnp.maximum(y, 0.0).astype(o_ref.dtype)


def conv_bn_relu(x_tok, w, scale, bias, *, tile_rows):
    n, cin = x_tok.shape
    cout = w.shape[1]
    return pl.pallas_call(
        _conv_bn_relu_kernel,
        out_shape=jax.ShapeDtypeStruct((n, cout), jnp.bfloat16),
        grid=(pl.cdiv(n, tile_rows),),
        in_specs=[
            pl.BlockSpec((tile_rows, cin), lambda i: (i, 0)),
            pl.BlockSpec((cin, cout), lambda i: (0, 0)),
            pl.BlockSpec((1, cout), lambda i: (0, 0)),
            pl.BlockSpec((1, cout), lambda i: (0, 0)),
        ],
        out_specs=pl.BlockSpec((tile_rows, cout), lambda i: (i, 0)),
        compiler_params=pltpu.CompilerParams(
            dimension_semantics=("parallel",),
            vmem_limit_bytes=_VMEM_LIMIT),
    )(x_tok, w, scale, bias)


# --------------------------------------------------------------------------
# Kernel 2: fused axial attention (QKV 1x1 projections + softmax(QK^T)V):
#   q/k/v = h @ w_{q,k,v} + b_{q,k,v}          (kept in VMEM, never hit HBM)
#   out   = gamma * softmax(q k^T) v + h
# h : [lines, L, C]  (lines = B*W for ColAttention, B*H for RowAttention)
# --------------------------------------------------------------------------
def _axial_attention_kernel(h_ref, wq_ref, wk_ref, wv_ref,
                            bq_ref, bk_ref, bv_ref, gamma_ref, o_ref):
    tb, length, c = h_ref.shape
    h = h_ref[...]                                   # bf16 (tb, L, C)
    h2 = h.reshape(tb * length, c)                   # contiguous -> free reshape

    def proj(w_ref, b_ref):
        y = jnp.dot(h2, w_ref[...], preferred_element_type=jnp.float32)
        y = y + b_ref[...]
        return y.reshape(tb, length, c).astype(jnp.bfloat16)

    q = proj(wq_ref, bq_ref)
    k = proj(wk_ref, bk_ref)
    v = proj(wv_ref, bv_ref)

    e = jnp.einsum("bic,bjc->bij", q, k, preferred_element_type=jnp.float32)
    e = e - jnp.max(e, axis=-1, keepdims=True)
    p = jnp.exp(e)
    inv = pl.reciprocal(jnp.sum(p, axis=-1, keepdims=True), approx=True)  # EUP
    o = jnp.einsum("bij,bjc->bic", p.astype(jnp.bfloat16), v,
                   preferred_element_type=jnp.float32)
    scale = gamma_ref[0] * inv                       # gamma folded into 1/sum
    o_ref[...] = (o * scale + h.astype(jnp.float32)).astype(o_ref.dtype)


def axial_attention(h_lines, wq, wk, wv, bq, bk, bv, gamma, *, tile_b):
    nb, length, c = h_lines.shape
    act_spec = pl.BlockSpec((tile_b, length, c), lambda i: (i, 0, 0))
    w_spec = pl.BlockSpec((c, c), lambda i: (0, 0))
    b_spec = pl.BlockSpec((1, c), lambda i: (0, 0))
    return pl.pallas_call(
        _axial_attention_kernel,
        out_shape=jax.ShapeDtypeStruct((nb, length, c), jnp.bfloat16),
        grid=(pl.cdiv(nb, tile_b),),
        in_specs=[act_spec, w_spec, w_spec, w_spec, b_spec, b_spec, b_spec,
                  pl.BlockSpec(memory_space=pltpu.MemorySpace.SMEM)],  # gamma
        out_specs=act_spec,
        compiler_params=pltpu.CompilerParams(
            dimension_semantics=("parallel",),
            vmem_limit_bytes=_VMEM_LIMIT),
    )(h_lines, wq, wk, wv, bq, bk, bv, gamma)


# --------------------------------------------------------------------------
# Kernel 3: fused tail: relu -> conv_up (1x1) -> bn2 -> +identity -> relu
# --------------------------------------------------------------------------
def _out_proj_kernel(h_ref, idn_ref, w_ref, s_ref, b_ref, o_ref):
    h = jnp.maximum(h_ref[...], 0)                   # relu before conv_up (bf16)
    y = jnp.dot(h, w_ref[...], preferred_element_type=jnp.float32)
    y = y * s_ref[...] + b_ref[...]                  # bn2 (eval, f32)
    y = jnp.maximum(y + idn_ref[...], 0.0)           # residual + relu (f32)
    o_ref[...] = y.astype(o_ref.dtype)


def out_projection(h_tok, identity_tok, w, scale, bias, *, tile_rows):
    n, cin = h_tok.shape
    cout = w.shape[1]
    return pl.pallas_call(
        _out_proj_kernel,
        out_shape=jax.ShapeDtypeStruct((n, cout), jnp.float32),
        grid=(pl.cdiv(n, tile_rows),),
        in_specs=[
            pl.BlockSpec((tile_rows, cin), lambda i: (i, 0)),
            pl.BlockSpec((tile_rows, cout), lambda i: (i, 0)),
            pl.BlockSpec((cin, cout), lambda i: (0, 0)),
            pl.BlockSpec((1, cout), lambda i: (0, 0)),
            pl.BlockSpec((1, cout), lambda i: (0, 0)),
        ],
        out_specs=pl.BlockSpec((tile_rows, cout), lambda i: (i, 0)),
        compiler_params=pltpu.CompilerParams(
            dimension_semantics=("parallel",),
            vmem_limit_bytes=_VMEM_LIMIT),
    )(h_tok, identity_tok, w, scale, bias)


# --------------------------------------------------------------------------
# Wrapper: layout glue + parameter lane-padding (all static / cheap).
# --------------------------------------------------------------------------
def axial_block_forward(x, p):
    B, Cin, H, W = x.shape
    P = p["w_down"].shape[1]
    Cout = 2 * P
    assert Cout == Cin, "downsample=None requires inplanes == planes * expansion"
    Pp = _round_up(P, _LANE)          # lane-padded planes
    Cp = _round_up(Cin, _LANE)        # lane-padded in/out channels

    # ---- lane-pad + bf16-cast parameters (no-op when already 128-aligned) ----
    w_down = _pad_2d(p["w_down"], Cp, Pp).astype(jnp.bfloat16)
    w_up = _pad_2d(p["w_up"], Pp, Cp).astype(jnp.bfloat16)
    bn1_s = _pad_last(p["bn1_scale"], Pp)
    bn1_b = _pad_last(p["bn1_bias"], Pp)
    bn2_s = _pad_last(p["bn2_scale"], Cp)
    bn2_b = _pad_last(p["bn2_bias"], Cp)

    def qkv(prefix):
        ws = [_pad_2d(p[f"{prefix}_w{t}"], Pp, Pp).astype(jnp.bfloat16)
              for t in ("q", "k", "v")]
        bs = [_pad_last(p[f"{prefix}_b{t}"], Pp) for t in ("q", "k", "v")]
        return ws, bs

    (cwq, cwk, cwv), (cbq, cbk, cbv) = qkv("col")
    (rwq, rwk, rwv), (rbq, rbk, rbv) = qkv("row")

    # ---- NCHW -> NHWC boundary layout + channel padding (XLA glue) ----
    x_nhwc = _pad_last(jnp.transpose(x, (0, 2, 3, 1)), Cp)   # (B,H,W,Cp) f32
    x_tok = x_nhwc.reshape(B * H * W, Cp)

    tile_rows = _row_tile(B * H * W)

    # conv_down + bn1 + relu                         -> bf16 (B*H*W, Pp)
    h = conv_bn_relu(x_tok, w_down, bn1_s, bn1_b, tile_rows=tile_rows)

    # ---- hight_block (ColAttention): attend along H per (b, w) column ----
    # one permute of the narrow bf16 activation regroups rows -> columns.
    h_col = jnp.transpose(h.reshape(B, H, W, Pp), (0, 2, 1, 3)).reshape(B * W, H, Pp)
    h_col = axial_attention(h_col, cwq, cwk, cwv, cbq, cbk, cbv, p["col_gamma"],
                            tile_b=_line_tile(B * W, H, Pp))

    # ---- width_block (RowAttention): attend along W per (b, h) row ----
    h_row = jnp.transpose(h_col.reshape(B, W, H, Pp), (0, 2, 1, 3)).reshape(B * H, W, Pp)
    h_row = axial_attention(h_row, rwq, rwk, rwv, rbq, rbk, rbv, p["row_gamma"],
                            tile_b=_line_tile(B * H, W, Pp))

    # ---- relu -> conv_up -> bn2 -> +identity -> relu ----
    out_tok = out_projection(h_row.reshape(B * H * W, Pp), x_tok,
                             w_up, bn2_s, bn2_b, tile_rows=tile_rows)
    out = out_tok.reshape(B, H, W, Cp)[..., :Cout]
    return jnp.transpose(out, (0, 3, 1, 2))          # back to NCHW


# --------------------------------------------------------------------------
# Deterministic parameter construction (synthetic, shapes from __init__).
# --------------------------------------------------------------------------
def init_params(key, inplanes, planes):
    assert inplanes == 2 * planes, "downsample=None requires inplanes == planes*expansion"
    ks = jax.random.split(key, 18)

    def rnd(k, shape, scale=0.1):
        return scale * jax.random.normal(k, shape, dtype=jnp.float32)

    p = {
        "w_down": rnd(ks[0], (inplanes, planes)),        # conv_down (1x1, no bias)
        "bn1_scale": 1.0 + rnd(ks[1], (1, planes)),      # bn1 folded (eval)
        "bn1_bias": rnd(ks[2], (1, planes)),
        # ColAttention query/key/value 1x1 convs (with bias)
        "col_wq": rnd(ks[3], (planes, planes)), "col_bq": rnd(ks[4], (1, planes)),
        "col_wk": rnd(ks[5], (planes, planes)), "col_bk": rnd(ks[6], (1, planes)),
        "col_wv": rnd(ks[7], (planes, planes)), "col_bv": rnd(ks[8], (1, planes)),
        "col_gamma": jnp.array([0.5], dtype=jnp.float32),
        # RowAttention query/key/value 1x1 convs (with bias)
        "row_wq": rnd(ks[9], (planes, planes)), "row_bq": rnd(ks[10], (1, planes)),
        "row_wk": rnd(ks[11], (planes, planes)), "row_bk": rnd(ks[12], (1, planes)),
        "row_wv": rnd(ks[13], (planes, planes)), "row_bv": rnd(ks[14], (1, planes)),
        "row_gamma": jnp.array([0.7], dtype=jnp.float32),
        "w_up": rnd(ks[15], (planes, 2 * planes)),       # conv_up (1x1, no bias)
        "bn2_scale": 1.0 + rnd(ks[16], (1, 2 * planes)), # bn2 folded (eval)
        "bn2_bias": rnd(ks[17], (1, 2 * planes)),
    }
    return p


# --------------------------------------------------------------------------
# Pure-JAX f32 reference (same math, no Pallas) for the sanity check.
# --------------------------------------------------------------------------
def reference_forward(x, p):
    xt = jnp.transpose(x, (0, 2, 3, 1))
    h = jnp.einsum("bhwc,cp->bhwp", xt, p["w_down"])
    h = jnp.maximum(h * p["bn1_scale"][0] + p["bn1_bias"][0], 0.0)

    def attn(h, wq, wk, wv, bq, bk, bv, gamma, over_h):
        q = jnp.einsum("bhwp,pq->bhwq", h, wq) + bq[0]
        k = jnp.einsum("bhwp,pq->bhwq", h, wk) + bk[0]
        v = jnp.einsum("bhwp,pq->bhwq", h, wv) + bv[0]
        if over_h:   # ColAttention: attend over H per column w
            e = jnp.einsum("biwp,bjwp->bwij", q, k)
            a = jax.nn.softmax(e, axis=-1)
            o = jnp.einsum("bwij,bjwp->biwp", a, v)
        else:        # RowAttention: attend over W per row h
            e = jnp.einsum("bhip,bhjp->bhij", q, k)
            a = jax.nn.softmax(e, axis=-1)
            o = jnp.einsum("bhij,bhjp->bhip", a, v)
        return gamma[0] * o + h

    h = attn(h, p["col_wq"], p["col_wk"], p["col_wv"],
             p["col_bq"], p["col_bk"], p["col_bv"], p["col_gamma"], over_h=True)
    h = attn(h, p["row_wq"], p["row_wk"], p["row_wv"],
             p["row_bq"], p["row_bk"], p["row_bv"], p["row_gamma"], over_h=False)
    h = jnp.maximum(h, 0.0)
    y = jnp.einsum("bhwp,pq->bhwq", h, p["w_up"])
    y = y * p["bn2_scale"][0] + p["bn2_bias"][0]
    y = jnp.maximum(y + xt, 0.0)
    return jnp.transpose(y, (0, 3, 1, 2))


if __name__ == "__main__":
    key = jax.random.PRNGKey(0)
    kx, kp = jax.random.split(key)

    B, planes, H, W = 2, 4, 16, 16
    inplanes = 2 * planes           # = planes * expansion, so downsample=None holds
    x = jax.random.normal(kx, (B, inplanes, H, W), dtype=jnp.float32)
    params = init_params(kp, inplanes, planes)

    fwd = jax.jit(axial_block_forward)
    out = jax.block_until_ready(fwd(x, params))
    ref = jax.block_until_ready(reference_forward(x, params))

    assert out.shape == (B, 2 * planes, H, W), out.shape
    err = float(jnp.max(jnp.abs(out - ref)))
    if err > 5e-2:
        raise AssertionError(f"Pallas output mismatch vs reference, max abs err {err}")
    print("KERNEL_OK")
</pallas_src>

<mosaic_0001>
module attributes {stable_mosaic.version = 11 : i64} {
  func.func @_conv_bn_relu_kernel(%arg0: i32, %arg1: memref<256x128xf32, #tpu.memory_space<vmem>>, %arg2: memref<128x128xbf16, #tpu.memory_space<vmem>>, %arg3: memref<1x128xf32, #tpu.memory_space<vmem>>, %arg4: memref<1x128xf32, #tpu.memory_space<vmem>>, %arg5: memref<256x128xbf16, #tpu.memory_space<vmem>>) attributes {dimension_semantics = [#tpu.dimension_semantics<parallel>], iteration_bounds = array<i64: 2>, scalar_prefetch = 0 : i64, scratch_operands = 0 : i64, tpu.core_type = #tpu.core_type<tc>, window_params = [{transform_indices = @transform_0, window_bounds = array<i64: 256, 128>}, {pipeline_mode = #tpu.pipeline_mode<synchronous>, transform_indices = @transform_1, window_bounds = array<i64: 128, 128>}, {pipeline_mode = #tpu.pipeline_mode<synchronous>, transform_indices = @transform_2, window_bounds = array<i64: 1, 128>}, {pipeline_mode = #tpu.pipeline_mode<synchronous>, transform_indices = @transform_3, window_bounds = array<i64: 1, 128>}, {transform_indices = @transform_4, window_bounds = array<i64: 256, 128>}]} {
    %c0 = arith.constant 0 : index
    %c0_0 = arith.constant 0 : index
    %0 = vector.load %arg1[%c0, %c0_0] : memref<256x128xf32, #tpu.memory_space<vmem>>, vector<256x128xf32>
    %1 = arith.truncf %0 : vector<256x128xf32> to vector<256x128xbf16>
    %c0_1 = arith.constant 0 : index
    %c0_2 = arith.constant 0 : index
    %2 = vector.load %arg2[%c0_1, %c0_2] : memref<128x128xbf16, #tpu.memory_space<vmem>>, vector<128x128xbf16>
    %cst = arith.constant dense<0.000000e+00> : vector<256x128xf32>
    %3 = tpu.matmul %1, %2, %cst {dimension_numbers = #tpu.dot_dimension_numbers<[1], [0], [0], [1], [0, 0, 1, 1], [], []>} : vector<256x128xbf16>, vector<128x128xbf16>, vector<256x128xf32> -> vector<256x128xf32>
    %c0_3 = arith.constant 0 : index
    %c0_4 = arith.constant 0 : index
    %4 = vector.load %arg3[%c0_3, %c0_4] : memref<1x128xf32, #tpu.memory_space<vmem>>, vector<1x128xf32>
    %5 = vector.broadcast %4 : vector<1x128xf32> to vector<256x128xf32>
    %6 = arith.mulf %3, %5 : vector<256x128xf32>
    %c0_5 = arith.constant 0 : index
    %c0_6 = arith.constant 0 : index
    %7 = vector.load %arg4[%c0_5, %c0_6] : memref<1x128xf32, #tpu.memory_space<vmem>>, vector<1x128xf32>
    %8 = vector.broadcast %7 : vector<1x128xf32> to vector<256x128xf32>
    %9 = arith.addf %6, %8 : vector<256x128xf32>
    %cst_7 = arith.constant 0.000000e+00 : f32
    %10 = vector.broadcast %cst_7 : f32 to vector<256x128xf32>
    %11 = arith.maximumf %9, %10 : vector<256x128xf32>
    %12 = arith.truncf %11 : vector<256x128xf32> to vector<256x128xbf16>
    %c0_8 = arith.constant 0 : index
    %c0_9 = arith.constant 0 : index
    %13 = vector.load %arg5[%c0_8, %c0_9] : memref<256x128xbf16, #tpu.memory_space<vmem>>, vector<256x128xbf16>
    tpu.vector_store %arg5[%c0_8, %c0_9], %12 {strides = array<i32>} : memref<256x128xbf16, #tpu.memory_space<vmem>>, vector<256x128xbf16>,
    return
  }
  func.func @transform_0(%arg0: i32) -> (i32, i32) {
    %c0_i32 = arith.constant 0 : i32
    %c0_i32_0 = arith.constant 0 : i32
    return %arg0, %c0_i32 : i32, i32
  }
  func.func @transform_1(%arg0: i32) -> (i32, i32) {
    %c0_i32 = arith.constant 0 : i32
    %c0_i32_0 = arith.constant 0 : i32
    %c0_i32_1 = arith.constant 0 : i32
    return %c0_i32, %c0_i32_0 : i32, i32
  }
  func.func @transform_2(%arg0: i32) -> (i32, i32) {
    %c0_i32 = arith.constant 0 : i32
    %c0_i32_0 = arith.constant 0 : i32
    %c0_i32_1 = arith.constant 0 : i32
    return %c0_i32, %c0_i32_0 : i32, i32
  }
  func.func @transform_3(%arg0: i32) -> (i32, i32) {
    %c0_i32 = arith.constant 0 : i32
    %c0_i32_0 = arith.constant 0 : i32
    %c0_i32_1 = arith.constant 0 : i32
    return %c0_i32, %c0_i32_0 : i32, i32
  }
  func.func @transform_4(%arg0: i32) -> (i32, i32) {
    %c0_i32 = arith.constant 0 : i32
    %c0_i32_0 = arith.constant 0 : i32
    return %arg0, %c0_i32 : i32, i32
  }
}

module attributes {stable_mosaic.version = 11 : i64} {
  func.func @_axial_attention_kernel(%arg0: i32, %arg1: memref<16x16x128xbf16, #tpu.memory_space<vmem>>, %arg2: memref<128x128xbf16, #tpu.memory_space<vmem>>, %arg3: memref<128x128xbf16, #tpu.memory_space<vmem>>, %arg4: memref<128x128xbf16, #tpu.memory_space<vmem>>, %arg5: memref<1x128xf32, #tpu.memory_space<vmem>>, %arg6: memref<1x128xf32, #tpu.memory_space<vmem>>, %arg7: memref<1x128xf32, #tpu.memory_space<vmem>>, %arg8: memref<1xf32, #tpu.memory_space<smem>>, %arg9: memref<16x16x128xbf16, #tpu.memory_space<vmem>>) attributes {dimension_semantics = [#tpu.dimension_semantics<parallel>], iteration_bounds = array<i64: 2>, scalar_prefetch = 0 : i64, scratch_operands = 0 : i64, tpu.core_type = #tpu.core_type<tc>, window_params = [{transform_indices = @transform_0, window_bounds = array<i64: 16, 16, 128>}, {pipeline_mode = #tpu.pipeline_mode<synchronous>, transform_indices = @transform_1, window_bounds = array<i64: 128, 128>}, {pipeline_mode = #tpu.pipeline_mode<synchronous>, transform_indices = @transform_2, window_bounds = array<i64: 128, 128>}, {pipeline_mode = #tpu.pipeline_mode<synchronous>, transform_indices = @transform_3, window_bounds = array<i64: 128, 128>}, {pipeline_mode = #tpu.pipeline_mode<synchronous>, transform_indices = @transform_4, window_bounds = array<i64: 1, 128>}, {pipeline_mode = #tpu.pipeline_mode<synchronous>, transform_indices = @transform_5, window_bounds = array<i64: 1, 128>}, {pipeline_mode = #tpu.pipeline_mode<synchronous>, transform_indices = @transform_6, window_bounds = array<i64: 1, 128>}, {transform_indices = @transform_7, window_bounds = array<i64: 1>}, {transform_indices = @transform_8, window_bounds = array<i64: 16, 16, 128>}]} {
    %c0 = arith.constant 0 : index
    %c0_0 = arith.constant 0 : index
    %c0_1 = arith.constant 0 : index
    %0 = vector.load %arg1[%c0, %c0_0, %c0_1] : memref<16x16x128xbf16, #tpu.memory_space<vmem>>, vector<16x16x128xbf16>
    %1 = vector.shape_cast %0 : vector<16x16x128xbf16> to vector<256x128xbf16>
    %c0_2 = arith.constant 0 : index
    %c0_3 = arith.constant 0 : index
    %2 = vector.load %arg2[%c0_2, %c0_3] : memref<128x128xbf16, #tpu.memory_space<vmem>>, vector<128x128xbf16>
    %cst = arith.constant dense<0.000000e+00> : vector<256x128xf32>
    %3 = tpu.matmul %1, %2, %cst {dimension_numbers = #tpu.dot_dimension_numbers<[1], [0], [0], [1], [0, 0, 1, 1], [], []>} : vector<256x128xbf16>, vector<128x128xbf16>, vector<256x128xf32> -> vector<256x128xf32>
    %c0_4 = arith.constant 0 : index
    %c0_5 = arith.constant 0 : index
    %4 = vector.load %arg5[%c0_4, %c0_5] : memref<1x128xf32, #tpu.memory_space<vmem>>, vector<1x128xf32>
    %5 = vector.broadcast %4 : vector<1x128xf32> to vector<256x128xf32>
    %6 = arith.addf %3, %5 : vector<256x128xf32>
    %7 = vector.shape_cast %6 : vector<256x128xf32> to vector<16x16x128xf32>
    %8 = arith.truncf %7 : vector<16x16x128xf32> to vector<16x16x128xbf16>
    %c0_6 = arith.constant 0 : index
    %c0_7 = arith.constant 0 : index
    %9 = vector.load %arg3[%c0_6, %c0_7] : memref<128x128xbf16, #tpu.memory_space<vmem>>, vector<128x128xbf16>
    %cst_8 = arith.constant dense<0.000000e+00> : vector<256x128xf32>
    %10 = tpu.matmul %1, %9, %cst_8 {dimension_numbers = #tpu.dot_dimension_numbers<[1], [0], [0], [1], [0, 0, 1, 1], [], []>} : vector<256x128xbf16>, vector<128x128xbf16>, vector<256x128xf32> -> vector<256x128xf32>
    %c0_9 = arith.constant 0 : index
    %c0_10 = arith.constant 0 : index
    %11 = vector.load %arg6[%c0_9, %c0_10] : memref<1x128xf32, #tpu.memory_space<vmem>>, vector<1x128xf32>
    %12 = vector.broadcast %11 : vector<1x128xf32> to vector<256x128xf32>
    %13 = arith.addf %10, %12 : vector<256x128xf32>
    %14 = vector.shape_cast %13 : vector<256x128xf32> to vector<16x16x128xf32>
    %15 = arith.truncf %14 : vector<16x16x128xf32> to vector<16x16x128xbf16>
    %c0_11 = arith.constant 0 : index
    %c0_12 = arith.constant 0 : index
    %16 = vector.load %arg4[%c0_11, %c0_12] : memref<128x128xbf16, #tpu.memory_space<vmem>>, vector<128x128xbf16>
    %cst_13 = arith.constant dense<0.000000e+00> : vector<256x128xf32>
    %17 = tpu.matmul %1, %16, %cst_13 {dimension_numbers = #tpu.dot_dimension_numbers<[1], [0], [0], [1], [0, 0, 1, 1], [], []>} : vector<256x128xbf16>, vector<128x128xbf16>, vector<256x128xf32> -> vector<256x128xf32>
    %c0_14 = arith.constant 0 : index
    %c0_15 = arith.constant 0 : index
    %18 = vector.load %arg7[%c0_14, %c0_15] : memref<1x128xf32, #tpu.memory_space<vmem>>, vector<1x128xf32>
    %19 = vector.broadcast %18 : vector<1x128xf32> to vector<256x128xf32>
    %20 = arith.addf %17, %19 : vector<256x128xf32>
    %21 = vector.shape_cast %20 : vector<256x128xf32> to vector<16x16x128xf32>
    %22 = arith.truncf %21 : vector<16x16x128xf32> to vector<16x16x128xbf16>
    "tpu.trace_start"() <{level = 10 : i32, message = "bic,bjc->bij"}> : () -> ()
    %cst_16 = arith.constant dense<0.000000e+00> : vector<16x16x16xf32>
    %23 = tpu.matmul %8, %15, %cst_16 {dimension_numbers = #tpu.dot_dimension_numbers<[2], [2], [1], [1], [0, 0, 0, 1, 1, 1], [0], [0]>} : vector<16x16x128xbf16>, vector<16x16x128xbf16>, vector<16x16x16xf32> -> vector<16x16x16xf32>
    "tpu.trace_stop"() : () -> ()
    %cst_17 = arith.constant dense<0xFF800000> : vector<16x16xf32>
    %24 = vector.multi_reduction <maximumf>, %23, %cst_17 [2] : vector<16x16x16xf32> to vector<16x16xf32>
    %25 = vector.shape_cast %24 : vector<16x16xf32> to vector<16x16x1xf32>
    %26 = vector.broadcast %25 : vector<16x16x1xf32> to vector<16x16x16xf32>
    %27 = arith.subf %23, %26 : vector<16x16x16xf32>
    %28 = math.exp %27 : vector<16x16x16xf32>
    %cst_18 = arith.constant dense<0.000000e+00> : vector<16x16xf32>
    %29 = vector.multi_reduction <add>, %28, %cst_18 [2] : vector<16x16x16xf32> to vector<16x16xf32>
    %30 = vector.shape_cast %29 : vector<16x16xf32> to vector<16x16x1xf32>
    %31 = tpu.reciprocal %30 {approx = true} : vector<16x16x1xf32> -> vector<16x16x1xf32>
    %32 = arith.truncf %28 : vector<16x16x16xf32> to vector<16x16x16xbf16>
    "tpu.trace_start"() <{level = 10 : i32, message = "bij,bjc->bic"}> : () -> ()
    %cst_19 = arith.constant dense<0.000000e+00> : vector<16x16x128xf32>
    %33 = tpu.matmul %32, %22, %cst_19 {dimension_numbers = #tpu.dot_dimension_numbers<[2], [1], [1], [2], [0, 0, 0, 1, 1, 2], [0], [0]>} : vector<16x16x16xbf16>, vector<16x16x128xbf16>, vector<16x16x128xf32> -> vector<16x16x128xf32>
    "tpu.trace_stop"() : () -> ()
    %c0_20 = arith.constant 0 : index
    %34 = memref.load %arg8[%c0_20] : memref<1xf32, #tpu.memory_space<smem>>
    %35 = vector.broadcast %34 : f32 to vector<16x16x1xf32>
    %36 = arith.mulf %35, %31 : vector<16x16x1xf32>
    %37 = vector.broadcast %36 : vector<16x16x1xf32> to vector<16x16x128xf32>
    %38 = arith.mulf %33, %37 : vector<16x16x128xf32>
    %39 = arith.extf %0 : vector<16x16x128xbf16> to vector<16x16x128xf32>
    %40 = arith.addf %38, %39 : vector<16x16x128xf32>
    %41 = arith.truncf %40 : vector<16x16x128xf32> to vector<16x16x128xbf16>
    %c0_21 = arith.constant 0 : index
    %c0_22 = arith.constant 0 : index
    %c0_23 = arith.constant 0 : index
    %42 = vector.load %arg9[%c0_21, %c0_22, %c0_23] : memref<16x16x128xbf16, #tpu.memory_space<vmem>>, vector<16x16x128xbf16>
    tpu.vector_store %arg9[%c0_21, %c0_22, %c0_23], %41 {strides = array<i32>} : memref<16x16x128xbf16, #tpu.memory_space<vmem>>, vector<16x16x128xbf16>,
    return
  }
  func.func @transform_0(%arg0: i32) -> (i32, i32, i32) {
    %c0_i32 = arith.constant 0 : i32
    %c0_i32_0 = arith.constant 0 : i32
    %c0_i32_1 = arith.constant 0 : i32
    return %arg0, %c0_i32, %c0_i32_0 : i32, i32, i32
  }
  func.func @transform_1(%arg0: i32) -> (i32, i32) {
    %c0_i32 = arith.constant 0 : i32
    %c0_i32_0 = arith.constant 0 : i32
    %c0_i32_1 = arith.constant 0 : i32
    return %c0_i32, %c0_i32_0 : i32, i32
  }
  func.func @transform_2(%arg0: i32) -> (i32, i32) {
    %c0_i32 = arith.constant 0 : i32
    %c0_i32_0 = arith.constant 0 : i32
    %c0_i32_1 = arith.constant 0 : i32
    return %c0_i32, %c0_i32_0 : i32, i32
  }
  func.func @transform_3(%arg0: i32) -> (i32, i32) {
    %c0_i32 = arith.constant 0 : i32
    %c0_i32_0 = arith.constant 0 : i32
    %c0_i32_1 = arith.constant 0 : i32
    return %c0_i32, %c0_i32_0 : i32, i32
  }
  func.func @transform_4(%arg0: i32) -> (i32, i32) {
    %c0_i32 = arith.constant 0 : i32
    %c0_i32_0 = arith.constant 0 : i32
    %c0_i32_1 = arith.constant 0 : i32
    return %c0_i32, %c0_i32_0 : i32, i32
  }
  func.func @transform_5(%arg0: i32) -> (i32, i32) {
    %c0_i32 = arith.constant 0 : i32
    %c0_i32_0 = arith.constant 0 : i32
    %c0_i32_1 = arith.constant 0 : i32
    return %c0_i32, %c0_i32_0 : i32, i32
  }
  func.func @transform_6(%arg0: i32) -> (i32, i32) {
    %c0_i32 = arith.constant 0 : i32
    %c0_i32_0 = arith.constant 0 : i32
    %c0_i32_1 = arith.constant 0 : i32
    return %c0_i32, %c0_i32_0 : i32, i32
  }
  func.func @transform_7(%arg0: i32) -> i32 {
    %c0_i32 = arith.constant 0 : i32
    %c0_i32_0 = arith.constant 0 : i32
    return %c0_i32 : i32
  }
  func.func @transform_8(%arg0: i32) -> (i32, i32, i32) {
    %c0_i32 = arith.constant 0 : i32
    %c0_i32_0 = arith.constant 0 : i32
    %c0_i32_1 = arith.constant 0 : i32
    return %arg0, %c0_i32, %c0_i32_0 : i32, i32, i32
  }
}

module attributes {stable_mosaic.version = 11 : i64} {
  func.func @_out_proj_kernel(%arg0: i32, %arg1: memref<256x128xbf16, #tpu.memory_space<vmem>>, %arg2: memref<256x128xf32, #tpu.memory_space<vmem>>, %arg3: memref<128x128xbf16, #tpu.memory_space<vmem>>, %arg4: memref<1x128xf32, #tpu.memory_space<vmem>>, %arg5: memref<1x128xf32, #tpu.memory_space<vmem>>, %arg6: memref<256x128xf32, #tpu.memory_space<vmem>>) attributes {dimension_semantics = [#tpu.dimension_semantics<parallel>], iteration_bounds = array<i64: 2>, scalar_prefetch = 0 : i64, scratch_operands = 0 : i64, tpu.core_type = #tpu.core_type<tc>, window_params = [{transform_indices = @transform_0, window_bounds = array<i64: 256, 128>}, {transform_indices = @transform_1, window_bounds = array<i64: 256, 128>}, {pipeline_mode = #tpu.pipeline_mode<synchronous>, transform_indices = @transform_2, window_bounds = array<i64: 128, 128>}, {pipeline_mode = #tpu.pipeline_mode<synchronous>, transform_indices = @transform_3, window_bounds = array<i64: 1, 128>}, {pipeline_mode = #tpu.pipeline_mode<synchronous>, transform_indices = @transform_4, window_bounds = array<i64: 1, 128>}, {transform_indices = @transform_5, window_bounds = array<i64: 256, 128>}]} {
    %c0 = arith.constant 0 : index
    %c0_0 = arith.constant 0 : index
    %0 = vector.load %arg1[%c0, %c0_0] : memref<256x128xbf16, #tpu.memory_space<vmem>>, vector<256x128xbf16>
    %cst = arith.constant 0.000000e+00 : bf16
    %1 = vector.broadcast %cst : bf16 to vector<256x128xbf16>
    %2 = arith.maximumf %0, %1 : vector<256x128xbf16>
    %c0_1 = arith.constant 0 : index
    %c0_2 = arith.constant 0 : index
    %3 = vector.load %arg3[%c0_1, %c0_2] : memref<128x128xbf16, #tpu.memory_space<vmem>>, vector<128x128xbf16>
    %cst_3 = arith.constant dense<0.000000e+00> : vector<256x128xf32>
    %4 = tpu.matmul %2, %3, %cst_3 {dimension_numbers = #tpu.dot_dimension_numbers<[1], [0], [0], [1], [0, 0, 1, 1], [], []>} : vector<256x128xbf16>, vector<128x128xbf16>, vector<256x128xf32> -> vector<256x128xf32>
    %c0_4 = arith.constant 0 : index
    %c0_5 = arith.constant 0 : index
    %5 = vector.load %arg4[%c0_4, %c0_5] : memref<1x128xf32, #tpu.memory_space<vmem>>, vector<1x128xf32>
    %6 = vector.broadcast %5 : vector<1x128xf32> to vector<256x128xf32>
    %7 = arith.mulf %4, %6 : vector<256x128xf32>
    %c0_6 = arith.constant 0 : index
    %c0_7 = arith.constant 0 : index
    %8 = vector.load %arg5[%c0_6, %c0_7] : memref<1x128xf32, #tpu.memory_space<vmem>>, vector<1x128xf32>
    %9 = vector.broadcast %8 : vector<1x128xf32> to vector<256x128xf32>
    %10 = arith.addf %7, %9 : vector<256x128xf32>
    %c0_8 = arith.constant 0 : index
    %c0_9 = arith.constant 0 : index
    %11 = vector.load %arg2[%c0_8, %c0_9] : memref<256x128xf32, #tpu.memory_space<vmem>>, vector<256x128xf32>
    %12 = arith.addf %10, %11 : vector<256x128xf32>
    %cst_10 = arith.constant 0.000000e+00 : f32
    %13 = vector.broadcast %cst_10 : f32 to vector<256x128xf32>
    %14 = arith.maximumf %12, %13 : vector<256x128xf32>
    %c0_11 = arith.constant 0 : index
    %c0_12 = arith.constant 0 : index
    %15 = vector.load %arg6[%c0_11, %c0_12] : memref<256x128xf32, #tpu.memory_space<vmem>>, vector<256x128xf32>
    tpu.vector_store %arg6[%c0_11, %c0_12], %14 {strides = array<i32>} : memref<256x128xf32, #tpu.memory_space<vmem>>, vector<256x128xf32>,
    return
  }
  func.func @transform_0(%arg0: i32) -> (i32, i32) {
    %c0_i32 = arith.constant 0 : i32
    %c0_i32_0 = arith.constant 0 : i32
    return %arg0, %c0_i32 : i32, i32
  }
  func.func @transform_1(%arg0: i32) -> (i32, i32) {
    %c0_i32 = arith.constant 0 : i32
    %c0_i32_0 = arith.constant 0 : i32
    return %arg0, %c0_i32 : i32, i32
  }
  func.func @transform_2(%arg0: i32) -> (i32, i32) {
    %c0_i32 = arith.constant 0 : i32
    %c0_i32_0 = arith.constant 0 : i32
    %c0_i32_1 = arith.constant 0 : i32
    return %c0_i32, %c0_i32_0 : i32, i32
  }
  func.func @transform_3(%arg0: i32) -> (i32, i32) {
    %c0_i32 = arith.constant 0 : i32
    %c0_i32_0 = arith.constant 0 : i32
    %c0_i32_1 = arith.constant 0 : i32
    return %c0_i32, %c0_i32_0 : i32, i32
  }
  func.func @transform_4(%arg0: i32) -> (i32, i32) {
    %c0_i32 = arith.constant 0 : i32
    %c0_i32_0 = arith.constant 0 : i32
    %c0_i32_1 = arith.constant 0 : i32
    return %c0_i32, %c0_i32_0 : i32, i32
  }
  func.func @transform_5(%arg0: i32) -> (i32, i32) {
    %c0_i32 = arith.constant 0 : i32
    %c0_i32_0 = arith.constant 0 : i32
    return %arg0, %c0_i32 : i32, i32
  }
}

</mosaic_0001>

<llo_original>
// kernel: axial_block_forward.4
$region0: #{axial_block_forward.4}
  #allocation0 [shape = 'u32[]', space=smem, size = 0x4, offset = 0x4, fixed_abs, tag = 'smem constant byte address 0x4 - core index']
  #allocation1 [shape = 'u32[144,128]{1,0:T(1,128)}', space=vmem, size = 0x12000, scoped, tag = 'internal scratch']
  %s0 = inlined_call_operand.vmem [shape: f32[512,128], index: 0, kind: input, shape index: {}]
  %s1 = inlined_call_operand.vmem [shape: bf16[128,128], index: 1, kind: input, shape index: {}]
  %s2 = inlined_call_operand.vmem [shape: f32[1,128], index: 2, kind: input, shape index: {}]
  %s3 = inlined_call_operand.vmem [shape: f32[1,128], index: 3, kind: input, shape index: {}]
  %s4 = inlined_call_operand.vmem [shape: bf16[512,128], index: 4, kind: output, shape index: {}]
  %s5 = sld [smem:[#allocation0]]
  $region49: #{axial_block_forward.4} parent=0
    _
  %s7 = ssub.s32 1, %s5
  %s8 = scalar_select 0, %s7, %s5
  loop: start=0, step=1, limit=4
  $region2: #{axial_block_forward.4} parent=0 // loop_pre_header
    _
  $region3: #{axial_block_forward.4} parent=0 // loop_header
    %s10 = sphi 0, %s14
    %p11 = scmp.ge.s32.totalorder %s10, 4
    %s20 = sphi 0, %s22
    %s23 = sphi 0, %s20
    %s24 = sphi 0, %s23
    %s40 = sphi 0, %s24
    %s44 = sphi 0, %s44
    %s46 = sphi 0, %s44
    %s47 = sphi 0, %s46
    %s61 = sphi 0, %s47
    %s65 = sphi 0, %s65
    %s67 = sphi 0, %s65
    %s68 = sphi 0, %s67
    %s82 = sphi 0, %s68
    %s86 = sphi 0, %s86
    %s88 = sphi 0, %s86
    %s89 = sphi 0, %s88
    %s103 = sphi 0, %s89
    %s109 = sphi 0, %s111
    %s112 = sphi 0, %s109
    %s113 = sphi 0, %s112
    %s129 = sphi 0, %s113
  $region4: #{axial_block_forward.4} parent=0 // loop_header_branch
    %13 = sbr.rel (%p11) target = $region8
  $region5: #{axial_block_forward.4} parent=0 // loop_body
    %s15 = ssub.s32 %s10, 1
    %s16 = ssub.s32 %s10, 2
    %s17 = sadd.s32 %s10, 1
    %s18 = ssub.s32 %s10, %s17
    %p19 = scmp.eq.s32.totalorder %s18, 0
    %s21 = sadd.s32 %s20, 1
    %s22 = scalar_select %p19, %s20, %s21
    %p25 = pneg %p19
    %p26 = scmp.eq.s32.totalorder %s10, 1
    %p27 = por %p25, %p26
    %p28 = scmp.ne.s32.totalorder %s20, %s23
    %p29 = scmp.eq.s32.totalorder %s10, 0
    %p30 = por %p28, %p29
    %p31 = scmp.ne.s32.totalorder %s20, %s23
    %p32 = scmp.eq.s32.totalorder %s15, 1
    %p33 = por %p31, %p32
    %p34 = scmp.ne.s32.totalorder %s23, %s24
    %p35 = scmp.eq.s32.totalorder %s15, 0
    %p36 = por %p34, %p35
    %p37 = scmp.ne.s32.totalorder %s23, %s24
    %p38 = scmp.eq.s32.totalorder %s16, 1
    %p39 = por %p37, %p38
    %p41 = scmp.ne.s32.totalorder %s24, %s40
    %p42 = scmp.eq.s32.totalorder %s16, 0
    %p43 = por %p41, %p42
    %s45 = sadd.s32 %s44, 1
    %p48 = scmp.eq.s32.totalorder %s10, 1
    %p49 = scmp.ne.s32.totalorder %s44, %s46
    %p50 = scmp.eq.s32.totalorder %s10, 0
    %p51 = por %p49, %p50
    %p52 = scmp.ne.s32.totalorder %s44, %s46
    %p53 = scmp.eq.s32.totalorder %s15, 1
    %p54 = por %p52, %p53
    %p55 = scmp.ne.s32.totalorder %s46, %s47
    %p56 = scmp.eq.s32.totalorder %s15, 0
    %p57 = por %p55, %p56
    %p58 = scmp.ne.s32.totalorder %s46, %s47
    %p59 = scmp.eq.s32.totalorder %s16, 1
    %p60 = por %p58, %p59
    %p62 = scmp.ne.s32.totalorder %s47, %s61
    %p63 = scmp.eq.s32.totalorder %s16, 0
    %p64 = por %p62, %p63
    %s66 = sadd.s32 %s65, 1
    %p69 = scmp.eq.s32.totalorder %s10, 1
    %p70 = scmp.ne.s32.totalorder %s65, %s67
    %p71 = scmp.eq.s32.totalorder %s10, 0
    %p72 = por %p70, %p71
    %p73 = scmp.ne.s32.totalorder %s65, %s67
    %p74 = scmp.eq.s32.totalorder %s15, 1
    %p75 = por %p73, %p74
    %p76 = scmp.ne.s32.totalorder %s67, %s68
    %p77 = scmp.eq.s32.totalorder %s15, 0
    %p78 = por %p76, %p77
    %p79 = scmp.ne.s32.totalorder %s67, %s68
    %p80 = scmp.eq.s32.totalorder %s16, 1
    %p81 = por %p79, %p80
    %p83 = scmp.ne.s32.totalorder %s68, %s82
    %p84 = scmp.eq.s32.totalorder %s16, 0
    %p85 = por %p83, %p84
    %s87 = sadd.s32 %s86, 1
    %p90 = scmp.eq.s32.totalorder %s10, 1
    %p91 = scmp.ne.s32.totalorder %s86, %s88
    %p92 = scmp.eq.s32.totalorder %s10, 0
    %p93 = por %p91, %p92
    %p94 = scmp.ne.s32.totalorder %s86, %s88
    %p95 = scmp.eq.s32.totalorder %s15, 1
    %p96 = por %p94, %p95
    %p97 = scmp.ne.s32.totalorder %s88, %s89
    %p98 = scmp.eq.s32.totalorder %s15, 0
    %p99 = por %p97, %p98
    %p100 = scmp.ne.s32.totalorder %s88, %s89
    %p101 = scmp.eq.s32.totalorder %s16, 1
    %p102 = por %p100, %p101
    %p104 = scmp.ne.s32.totalorder %s89, %s103
    %p105 = scmp.eq.s32.totalorder %s16, 0
    %p106 = por %p104, %p105
    %s107 = ssub.s32 %s10, %s17
    %p108 = scmp.eq.s32.totalorder %s107, 0
    %s110 = sadd.s32 %s109, 1
    %s111 = scalar_select %p108, %s109, %s110
    %p114 = pneg %p108
    %p115 = scmp.eq.s32.totalorder %s10, 1
    %p116 = por %p114, %p115
    %p117 = scmp.ne.s32.totalorder %s109, %s112
    %p118 = scmp.eq.s32.totalorder %s10, 0
    %p119 = por %p117, %p118
    %p120 = scmp.ne.s32.totalorder %s109, %s112
    %p121 = scmp.eq.s32.totalorder %s15, 1
    %p122 = por %p120, %p121
    %p123 = scmp.ne.s32.totalorder %s112, %s113
    %p124 = scmp.eq.s32.totalorder %s15, 0
    %p125 = por %p123, %p124
    %p126 = scmp.ne.s32.totalorder %s112, %s113
    %p127 = scmp.eq.s32.totalorder %s16, 1
    %p128 = por %p126, %p127
    %p130 = scmp.ne.s32.totalorder %s113, %s129
    %p131 = scmp.eq.s32.totalorder %s16, 0
    %p132 = por %p130, %p131
    %p133 = scmp.le.s32.totalorder 1, %s10
    %p134 = scmp.lt.s32.totalorder %s10, 3
    %p135 = pnand %p133, %p134
    %p136 = pneg %p135
    // Predicated region
    $region9: #{axial_block_forward.4} parent=5 // pred_check
      _
    $region10: #{axial_block_forward.4} parent=5 // pred_check_branch
      %138 = sbr.rel (%p135) target = $region12
    $region11: #{axial_block_forward.4} parent=5 // pred_region
      %s139 = ssub.s32 %s10, 1
      // Predicated region
      $region13: #{axial_block_forward.4} parent=11 // pred_check
        %p140 = pneg %p57
      $region14: #{axial_block_forward.4} parent=11 // pred_check_branch
        %142 = sbr.rel (%p140) target = $region16
      $region15: #{axial_block_forward.4} parent=11 // pred_region
        _
      $region16: #{axial_block_forward.4} parent=11 // pred_fallthru
        _
      // Predicated region
      $region17: #{axial_block_forward.4} parent=11 // pred_check
        %p143 = pneg %p78
      $region18: #{axial_block_forward.4} parent=11 // pred_check_branch
        %145 = sbr.rel (%p143) target = $region20
      $region19: #{axial_block_forward.4} parent=11 // pred_region
        _
      $region20: #{axial_block_forward.4} parent=11 // pred_fallthru
        _
      // Predicated region
      $region21: #{axial_block_forward.4} parent=11 // pred_check
        %p146 = pneg %p99
      $region22: #{axial_block_forward.4} parent=11 // pred_check_branch
        %148 = sbr.rel (%p146) target = $region24
      $region23: #{axial_block_forward.4} parent=11 // pred_region
        _
      $region24: #{axial_block_forward.4} parent=11 // pred_fallthru
        _
    $region12: #{axial_block_forward.4} parent=5 // pred_fallthru
      _
    %p149 = scmp.lt.s32.totalorder %s10, 2
    // Predicated region
    $region25: #{axial_block_forward.4} parent=5 // pred_check
      %p150 = pneg %p149
    $region26: #{axial_block_forward.4} parent=5 // pred_check_branch
      %152 = sbr.rel (%p150) target = $region28
    $region27: #{axial_block_forward.4} parent=5 // pred_region
      // Predicated region
      $region29: #{axial_block_forward.4} parent=27 // pred_check
        %p153 = pneg %p30
      $region30: #{axial_block_forward.4} parent=27 // pred_check_branch
        %155 = sbr.rel (%p153) target = $region32
      $region31: #{axial_block_forward.4} parent=27 // pred_region
        %s156 = smul.u32 32, %s10
        %p157 = scmp.lt.s32.totalorder %s156, 63
        %s158 = scalar_select %p157, %s156, 63
        %s159 = smul.addr %s158, 8
        %s160 = scalar_lea.vmem %s0, %s159
        %s161 = smul.u32 32, %s10
      $region32: #{axial_block_forward.4} parent=27 // pred_fallthru
        _
    $region28: #{axial_block_forward.4} parent=5 // pred_fallthru
      _
    %p162 = scmp.le.s32.totalorder 1, %s10
    %p163 = scmp.lt.s32.totalorder %s10, 3
    %p164 = pnand %p162, %p163
    %p165 = pneg %p164
    // Predicated region
    $region33: #{axial_block_forward.4} parent=5 // pred_check
      _
    $region34: #{axial_block_forward.4} parent=5 // pred_check_branch
      %167 = sbr.rel (%p164) target = $region36
    $region35: #{axial_block_forward.4} parent=5 // pred_region
      %s168 = ssub.s32 %s10, 1
      %s169 = smul.u32 32, %s15
      %p170 = scmp.lt.s32.totalorder %s169, 63
      %s171 = scalar_select %p170, %s169, 63
      %s172 = smul.addr %s171, 8
      %s173 = scalar_lea.vmem %s0, %s172
      %p174 = pneg %p36
      %p175 = pneg %p33
      %p176 = pneg %p57
      %p177 = pneg %p54
      %p178 = pneg %p78
      %p179 = pneg %p75
      %p180 = pneg %p99
      %p181 = pneg %p96
      %p182 = pneg %p125
      %p183 = pneg %p122
      %s184 = smul.u32 32, %s15
      %p185 = scmp.lt.s32.totalorder %s184, 63
      %s186 = scalar_select %p185, %s184, 63
      %s187 = smul.addr %s186, 4
      %s188 = scalar_lea.vmem %s4, %s187
      %s189 = smul.u32 32, %s15
      %p190 = scmp.lt.s32.totalorder %s189, 63
      %s191 = scalar_select %p190, %s189, 63
      %s192 = smul.addr %s191, 8
      %s193 = scalar_lea.vmem %s0, %s192
      %s194 = smul.u32 32, %s15
      %s195 = smul.u32 32, %s15
      %p196 = scmp.lt.s32.totalorder %s195, 63
      %s197 = scalar_select %p196, %s195, 63
      %s198 = smul.addr %s197, 4
      %s199 = scalar_lea.vmem %s4, %s198
      %s200 = smul.u32 32, %s15
      %v202 = vld [vmem:[%s193] sm:$0xff]
      %v203 = vld [vmem:[%s193 + $0x8] sm:$0xff]
      %v204 = vld [vmem:[%s193 + $0x10] sm:$0xff]
      %v205 = vld [vmem:[%s193 + $0x18] sm:$0xff]
      %v206 = vld [vmem:[%s193 + $0x20] sm:$0xff]
      %v207 = vld [vmem:[%s193 + $0x28] sm:$0xff]
      %v208 = vld [vmem:[%s193 + $0x30] sm:$0xff]
      %v209 = vld [vmem:[%s193 + $0x38] sm:$0xff]
      %v210 = vld [vmem:[%s193 + $0x40] sm:$0xff]
      %v211 = vld [vmem:[%s193 + $0x48] sm:$0xff]
      %v212 = vld [vmem:[%s193 + $0x50] sm:$0xff]
      %v213 = vld [vmem:[%s193 + $0x58] sm:$0xff]
      %v214 = vld [vmem:[%s193 + $0x60] sm:$0xff]
      %v215 = vld [vmem:[%s193 + $0x68] sm:$0xff]
      %v216 = vld [vmem:[%s193 + $0x70] sm:$0xff]
      %v217 = vld [vmem:[%s193 + $0x78] sm:$0xff]
      %v218 = vld [vmem:[%s193 + $0x80] sm:$0xff]
      %v219 = vld [vmem:[%s193 + $0x88] sm:$0xff]
      %v220 = vld [vmem:[%s193 + $0x90] sm:$0xff]
      %v221 = vld [vmem:[%s193 + $0x98] sm:$0xff]
      %v222 = vld [vmem:[%s193 + $0xa0] sm:$0xff]
      %v223 = vld [vmem:[%s193 + $0xa8] sm:$0xff]
      %v224 = vld [vmem:[%s193 + $0xb0] sm:$0xff]
      %v225 = vld [vmem:[%s193 + $0xb8] sm:$0xff]
      %v226 = vld [vmem:[%s193 + $0xc0] sm:$0xff]
      %v227 = vld [vmem:[%s193 + $0xc8] sm:$0xff]
      %v228 = vld [vmem:[%s193 + $0xd0] sm:$0xff]
      %v229 = vld [vmem:[%s193 + $0xd8] sm:$0xff]
      %v230 = vld [vmem:[%s193 + $0xe0] sm:$0xff]
      %v231 = vld [vmem:[%s193 + $0xe8] sm:$0xff]
      %v232 = vld [vmem:[%s193 + $0xf0] sm:$0xff]
      %v233 = vld [vmem:[%s193 + $0xf8] sm:$0xff]
      %v234 = vpack.c.bf16 %v203, %v202
      %v235 = vpack.c.bf16 %v205, %v204
      %v236 = vpack.c.bf16 %v207, %v206
      %v237 = vpack.c.bf16 %v209, %v208
      %v238 = vpack.c.bf16 %v211, %v210
      %v239 = vpack.c.bf16 %v213, %v212
      %v240 = vpack.c.bf16 %v215, %v214
      %v241 = vpack.c.bf16 %v217, %v216
      %v242 = vpack.c.bf16 %v219, %v218
      %v243 = vpack.c.bf16 %v221, %v220
      %v244 = vpack.c.bf16 %v223, %v222
      %v245 = vpack.c.bf16 %v225, %v224
      %v246 = vpack.c.bf16 %v227, %v226
      %v247 = vpack.c.bf16 %v229, %v228
      %v248 = vpack.c.bf16 %v231, %v230
      %v249 = vpack.c.bf16 %v233, %v232
      %v250 = vld [vmem:[%s1] sm:$0xf]
      %v251 = vld [vmem:[%s1 + $0x4] sm:$0xf]
      %v252 = vld [vmem:[%s1 + $0x8] sm:$0xf]
      %v253 = vld [vmem:[%s1 + $0xc] sm:$0xf]
      %v254 = vld [vmem:[%s1 + $0x10] sm:$0xf]
      %v255 = vld [vmem:[%s1 + $0x14] sm:$0xf]
      %v256 = vld [vmem:[%s1 + $0x18] sm:$0xf]
      %v257 = vld [vmem:[%s1 + $0x1c] sm:$0xf]
      %v258 = vld [vmem:[%s1 + $0x20] sm:$0xf]
      %v259 = vld [vmem:[%s1 + $0x24] sm:$0xf]
      %v260 = vld [vmem:[%s1 + $0x28] sm:$0xf]
      %v261 = vld [vmem:[%s1 + $0x2c] sm:$0xf]
      %v262 = vld [vmem:[%s1 + $0x30] sm:$0xf]
      %v263 = vld [vmem:[%s1 + $0x34] sm:$0xf]
      %v264 = vld [vmem:[%s1 + $0x38] sm:$0xf]
      %v265 = vld [vmem:[%s1 + $0x3c] sm:$0xf]
      %v282 = vunpack.c.l.b16 %v250
      %v283 = vunpack.c.l.b16 %v251
      %v284 = vunpack.c.l.b16 %v252
      %v285 = vunpack.c.l.b16 %v253
      %v286 = vunpack.c.l.b16 %v254
      %v287 = vunpack.c.l.b16 %v255
      %v288 = vunpack.c.l.b16 %v256
      %v289 = vunpack.c.l.b16 %v257
      %v290 = vunpack.c.l.b16 %v258
      %v291 = vunpack.c.l.b16 %v259
      %v292 = vunpack.c.l.b16 %v260
      %v293 = vunpack.c.l.b16 %v261
      %v294 = vunpack.c.l.b16 %v262
      %v295 = vunpack.c.l.b16 %v263
      %v296 = vunpack.c.l.b16 %v264
      %v297 = vunpack.c.l.b16 %v265
      %v298 = vpack.c.b16 %v283, %v282
      %v299 = vpack.c.b16 %v285, %v284
      %v300 = vpack.c.b16 %v287, %v286
      %v301 = vpack.c.b16 %v289, %v288
      %v302 = vpack.c.b16 %v291, %v290
      %v303 = vpack.c.b16 %v293, %v292
      %v304 = vpack.c.b16 %v295, %v294
      %v305 = vpack.c.b16 %v297, %v296
      %314 = vmatprep.subr.bf16.mxu0 0
      %315 = vmatpush1.bf16.msra.mxu0 %v298
      %316 = vmatprep.subr.bf16.mxu0 0
      %317 = vmatpush1.bf16.msra.mxu0 %v299
      %318 = vmatprep.subr.bf16.mxu0 0
      %319 = vmatpush1.bf16.msra.mxu0 %v300
      %320 = vmatprep.subr.bf16.mxu0 0
      %321 = vmatpush1.bf16.msra.mxu0 %v301
      %322 = vmatprep.subr.bf16.mxu0 0
      %323 = vmatpush1.bf16.msra.mxu0 %v302
      %324 = vmatprep.subr.bf16.mxu0 0
      %325 = vmatpush1.bf16.msra.mxu0 %v303
      %326 = vmatprep.subr.bf16.mxu0 0
      %327 = vmatpush1.bf16.msra.mxu0 %v304
      %328 = vmatprep.subr.bf16.mxu0 0
      %329 = vmatpush1.bf16.msra.mxu0 %v305
      %330 = vmatprep.subr.bf16.mxu0 0
      %331 = vmatpush1.bf16.msra.mxu0 0
      %332 = vmatprep.subr.bf16.mxu0 0
      %333 = vmatpush1.bf16.msra.mxu0 0
      %334 = vmatprep.subr.bf16.mxu0 0
      %335 = vmatpush1.bf16.msra.mxu0 0
      %336 = vmatprep.subr.bf16.mxu0 0
      %337 = vmatpush1.bf16.msra.mxu0 0
      %338 = vmatprep.subr.bf16.mxu0 0
      %339 = vmatpush1.bf16.msra.mxu0 0
      %340 = vmatprep.subr.bf16.mxu0 0
      %341 = vmatpush1.bf16.msra.mxu0 0
      %342 = vmatprep.subr.bf16.mxu0 0
      %343 = vmatpush1.bf16.msra.mxu0 0
      %344 = vmatprep.subr.bf16.mxu0 0
      %345 = vmatpush1.bf16.msra.mxu0 0
      %346 = vmatprep.mubr.bf16.mxu0 0
      %347 = vmatmul.mubr.bf16.gmra.mrb[0].mxu0 %v234
      %v348 = vpop.f32.mrb[0].mxu0
      %v349 = vadd.f32 0.0, %v348
      %v350 = vpop.f32.mrb[0].mxu0
      %v351 = vpop.f32.mrb[0].mxu0
      %v352 = vadd.f32 0.0, %v351
      %v353 = vpop.f32.mrb[0].mxu0
      %354 = vmatprep.mubr.bf16.mxu0 0
      %355 = vmatmul.mubr.bf16.gmra.mrb[0].mxu0 %v235
      %v356 = vpop.f32.mrb[0].mxu0
      %v357 = vadd.f32 0.0, %v356
      %v358 = vpop.f32.mrb[0].mxu0
      %v359 = vpop.f32.mrb[0].mxu0
      %v360 = vadd.f32 0.0, %v359
      %v361 = vpop.f32.mrb[0].mxu0
      %362 = vmatprep.mubr.bf16.mxu0 0
      %363 = vmatmul.mubr.bf16.gmra.mrb[0].mxu0 %v236
      %v364 = vpop.f32.mrb[0].mxu0
      %v365 = vadd.f32 0.0, %v364
      %v366 = vpop.f32.mrb[0].mxu0
      %v367 = vpop.f32.mrb[0].mxu0
      %v368 = vadd.f32 0.0, %v367
      %v369 = vpop.f32.mrb[0].mxu0
      %370 = vmatprep.mubr.bf16.mxu0 0
      %371 = vmatmul.mubr.bf16.gmra.mrb[0].mxu0 %v237
      %v372 = vpop.f32.mrb[0].mxu0
      %v373 = vadd.f32 0.0, %v372
      %v374 = vpop.f32.mrb[0].mxu0
      %v375 = vpop.f32.mrb[0].mxu0
      %v376 = vadd.f32 0.0, %v375
      %v377 = vpop.f32.mrb[0].mxu0
      %378 = vmatprep.mubr.bf16.mxu0 0
      %379 = vmatmul.mubr.bf16.gmra.mrb[0].mxu0 %v238
      %v380 = vpop.f32.mrb[0].mxu0
      %v381 = vadd.f32 0.0, %v380
      %v382 = vpop.f32.mrb[0].mxu0
      %v383 = vpop.f32.mrb[0].mxu0
      %v384 = vadd.f32 0.0, %v383
      %v385 = vpop.f32.mrb[0].mxu0
      %386 = vmatprep.mubr.bf16.mxu0 0
      %387 = vmatmul.mubr.bf16.gmra.mrb[0].mxu0 %v239
      %v388 = vpop.f32.mrb[0].mxu0
      %v389 = vadd.f32 0.0, %v388
      %v390 = vpop.f32.mrb[0].mxu0
      %v391 = vpop.f32.mrb[0].mxu0
      %v392 = vadd.f32 0.0, %v391
      %v393 = vpop.f32.mrb[0].mxu0
      %394 = vmatprep.mubr.bf16.mxu0 0
      %395 = vmatmul.mubr.bf16.gmra.mrb[0].mxu0 %v240
      %v396 = vpop.f32.mrb[0].mxu0
      %v397 = vadd.f32 0.0, %v396
      %v398 = vpop.f32.mrb[0].mxu0
      %v399 = vpop.f32.mrb[0].mxu0
      %v400 = vadd.f32 0.0, %v399
      %v401 = vpop.f32.mrb[0].mxu0
      %402 = vmatprep.mubr.bf16.mxu0 0
      %403 = vmatmul.mubr.bf16.gmra.mrb[0].mxu0 %v241
      %v404 = vpop.f32.mrb[0].mxu0
      %v405 = vadd.f32 0.0, %v404
      %v406 = vpop.f32.mrb[0].mxu0
      %v407 = vpop.f32.mrb[0].mxu0
      %v408 = vadd.f32 0.0, %v407
      %v409 = vpop.f32.mrb[0].mxu0
      %410 = vmatprep.mubr.bf16.mxu0 0
      %411 = vmatmul.mubr.bf16.gmra.mrb[0].mxu0 %v242
      %v412 = vpop.f32.mrb[0].mxu0
      %v413 = vadd.f32 0.0, %v412
      %v414 = vpop.f32.mrb[0].mxu0
      %v415 = vpop.f32.mrb[0].mxu0
      %v416 = vadd.f32 0.0, %v415
      %v417 = vpop.f32.mrb[0].mxu0
      %418 = vmatprep.mubr.bf16.mxu0 0
      %419 = vmatmul.mubr.bf16.gmra.mrb[0].mxu0 %v243
      %v420 = vpop.f32.mrb[0].mxu0
      %v421 = vadd.f32 0.0, %v420
      %v422 = vpop.f32.mrb[0].mxu0
      %v423 = vpop.f32.mrb[0].mxu0
      %v424 = vadd.f32 0.0, %v423
      %v425 = vpop.f32.mrb[0].mxu0
      %426 = vmatprep.mubr.bf16.mxu0 0
      %427 = vmatmul.mubr.bf16.gmra.mrb[0].mxu0 %v244
      %v428 = vpop.f32.mrb[0].mxu0
      %v429 = vadd.f32 0.0, %v428
      %v430 = vpop.f32.mrb[0].mxu0
      %v431 = vpop.f32.mrb[0].mxu0
      %v432 = vadd.f32 0.0, %v431
      %v433 = vpop.f32.mrb[0].mxu0
      %434 = vmatprep.mubr.bf16.mxu0 0
      %435 = vmatmul.mubr.bf16.gmra.mrb[0].mxu0 %v245
      %v436 = vpop.f32.mrb[0].mxu0
      %v437 = vadd.f32 0.0, %v436
      %v438 = vpop.f32.mrb[0].mxu0
      %v439 = vpop.f32.mrb[0].mxu0
      %v440 = vadd.f32 0.0, %v439
      %v441 = vpop.f32.mrb[0].mxu0
      %442 = vmatprep.mubr.bf16.mxu0 0
      %443 = vmatmul.mubr.bf16.gmra.mrb[0].mxu0 %v246
      %v444 = vpop.f32.mrb[0].mxu0
      %v445 = vadd.f32 0.0, %v444
      %v446 = vpop.f32.mrb[0].mxu0
      %v447 = vpop.f32.mrb[0].mxu0
      %v448 = vadd.f32 0.0, %v447
      %v449 = vpop.f32.mrb[0].mxu0
      %450 = vmatprep.mubr.bf16.mxu0 0
      %451 = vmatmul.mubr.bf16.gmra.mrb[0].mxu0 %v247
      %v452 = vpop.f32.mrb[0].mxu0
      %v453 = vadd.f32 0.0, %v452
      %v454 = vpop.f32.mrb[0].mxu0
      %v455 = vpop.f32.mrb[0].mxu0
      %v456 = vadd.f32 0.0, %v455
      %v457 = vpop.f32.mrb[0].mxu0
      %458 = vmatprep.mubr.bf16.mxu0 0
      %459 = vmatmul.mubr.bf16.gmra.mrb[0].mxu0 %v248
      %v460 = vpop.f32.mrb[0].mxu0
      %v461 = vadd.f32 0.0, %v460
      %v462 = vpop.f32.mrb[0].mxu0
      %v463 = vpop.f32.mrb[0].mxu0
      %v464 = vadd.f32 0.0, %v463
      %v465 = vpop.f32.mrb[0].mxu0
      %466 = vmatprep.mubr.bf16.mxu0 0
      %467 = vmatmul.mubr.bf16.gmra.mrb[0].mxu0 %v249
      %v468 = vpop.f32.mrb[0].mxu0
      %v469 = vadd.f32 0.0, %v468
      %v470 = vpop.f32.mrb[0].mxu0
      %v471 = vpop.f32.mrb[0].mxu0
      %v472 = vadd.f32 0.0, %v471
      %v473 = vpop.f32.mrb[0].mxu0
      %474 = vdwg.mxu0
      %v475 = vld [vmem:[%s2] sm:$0x1]
      %v477 = vlaneseq
      %v478 = vshrl.u32 %v477, 7
      %v479 = vsub.s32 0, %v478
      %v480 = vrot.slane %v475, %v479
      %v482 = vmul.f32 %v349, %v480
      %v483 = vmul.f32 %v352, %v480
      %v484 = vmul.f32 %v357, %v480
      %v485 = vmul.f32 %v360, %v480
      %v486 = vmul.f32 %v365, %v480
      %v487 = vmul.f32 %v368, %v480
      %v488 = vmul.f32 %v373, %v480
      %v489 = vmul.f32 %v376, %v480
      %v490 = vmul.f32 %v381, %v480
      %v491 = vmul.f32 %v384, %v480
      %v492 = vmul.f32 %v389, %v480
      %v493 = vmul.f32 %v392, %v480
      %v494 = vmul.f32 %v397, %v480
      %v495 = vmul.f32 %v400, %v480
      %v496 = vmul.f32 %v405, %v480
      %v497 = vmul.f32 %v408, %v480
      %v498 = vmul.f32 %v413, %v480
      %v499 = vmul.f32 %v416, %v480
      %v500 = vmul.f32 %v421, %v480
      %v501 = vmul.f32 %v424, %v480
      %v502 = vmul.f32 %v429, %v480
      %v503 = vmul.f32 %v432, %v480
      %v504 = vmul.f32 %v437, %v480
      %v505 = vmul.f32 %v440, %v480
      %v506 = vmul.f32 %v445, %v480
      %v507 = vmul.f32 %v448, %v480
      %v508 = vmul.f32 %v453, %v480
      %v509 = vmul.f32 %v456, %v480
      %v510 = vmul.f32 %v461, %v480
      %v511 = vmul.f32 %v464, %v480
      %v512 = vmul.f32 %v469, %v480
      %v513 = vmul.f32 %v472, %v480
      %v514 = vld [vmem:[%s3] sm:$0x1]
      %v516 = vlaneseq
      %v517 = vshrl.u32 %v516, 7
      %v518 = vsub.s32 0, %v517
      %v519 = vrot.slane %v514, %v518
      %v521 = vadd.f32 %v482, %v519
      %v522 = vadd.f32 %v483, %v519
      %v523 = vadd.f32 %v484, %v519
      %v524 = vadd.f32 %v485, %v519
      %v525 = vadd.f32 %v486, %v519
      %v526 = vadd.f32 %v487, %v519
      %v527 = vadd.f32 %v488, %v519
      %v528 = vadd.f32 %v489, %v519
      %v529 = vadd.f32 %v490, %v519
      %v530 = vadd.f32 %v491, %v519
      %v531 = vadd.f32 %v492, %v519
      %v532 = vadd.f32 %v493, %v519
      %v533 = vadd.f32 %v494, %v519
      %v534 = vadd.f32 %v495, %v519
      %v535 = vadd.f32 %v496, %v519
      %v536 = vadd.f32 %v497, %v519
      %v537 = vadd.f32 %v498, %v519
      %v538 = vadd.f32 %v499, %v519
      %v539 = vadd.f32 %v500, %v519
      %v540 = vadd.f32 %v501, %v519
      %v541 = vadd.f32 %v502, %v519
      %v542 = vadd.f32 %v503, %v519
      %v543 = vadd.f32 %v504, %v519
      %v544 = vadd.f32 %v505, %v519
      %v545 = vadd.f32 %v506, %v519
      %v546 = vadd.f32 %v507, %v519
      %v547 = vadd.f32 %v508, %v519
      %v548 = vadd.f32 %v509, %v519
      %v549 = vadd.f32 %v510, %v519
      %v550 = vadd.f32 %v511, %v519
      %v551 = vadd.f32 %v512, %v519
      %v552 = vadd.f32 %v513, %v519
      %v553 = vmax.f32 %v521, 0.0
      %v554 = vmax.f32 %v522, 0.0
      %v555 = vmax.f32 %v523, 0.0
      %v556 = vmax.f32 %v524, 0.0
      %v557 = vmax.f32 %v525, 0.0
      %v558 = vmax.f32 %v526, 0.0
      %v559 = vmax.f32 %v527, 0.0
      %v560 = vmax.f32 %v528, 0.0
      %v561 = vmax.f32 %v529, 0.0
      %v562 = vmax.f32 %v530, 0.0
      %v563 = vmax.f32 %v531, 0.0
      %v564 = vmax.f32 %v532, 0.0
      %v565 = vmax.f32 %v533, 0.0
      %v566 = vmax.f32 %v534, 0.0
      %v567 = vmax.f32 %v535, 0.0
      %v568 = vmax.f32 %v536, 0.0
      %v569 = vmax.f32 %v537, 0.0
      %v570 = vmax.f32 %v538, 0.0
      %v571 = vmax.f32 %v539, 0.0
      %v572 = vmax.f32 %v540, 0.0
      %v573 = vmax.f32 %v541, 0.0
      %v574 = vmax.f32 %v542, 0.0
      %v575 = vmax.f32 %v543, 0.0
      %v576 = vmax.f32 %v544, 0.0
      %v577 = vmax.f32 %v545, 0.0
      %v578 = vmax.f32 %v546, 0.0
      %v579 = vmax.f32 %v547, 0.0
      %v580 = vmax.f32 %v548, 0.0
      %v581 = vmax.f32 %v549, 0.0
      %v582 = vmax.f32 %v550, 0.0
      %v583 = vmax.f32 %v551, 0.0
      %v584 = vmax.f32 %v552, 0.0
      %v585 = vpack.c.bf16 %v554, %v553
      %v586 = vpack.c.bf16 %v556, %v555
      %v587 = vpack.c.bf16 %v558, %v557
      %v588 = vpack.c.bf16 %v560, %v559
      %v589 = vpack.c.bf16 %v562, %v561
      %v590 = vpack.c.bf16 %v564, %v563
      %v591 = vpack.c.bf16 %v566, %v565
      %v592 = vpack.c.bf16 %v568, %v567
      %v593 = vpack.c.bf16 %v570, %v569
      %v594 = vpack.c.bf16 %v572, %v571
      %v595 = vpack.c.bf16 %v574, %v573
      %v596 = vpack.c.bf16 %v576, %v575
      %v597 = vpack.c.bf16 %v578, %v577
      %v598 = vpack.c.bf16 %v580, %v579
      %v599 = vpack.c.bf16 %v582, %v581
      %v600 = vpack.c.bf16 %v584, %v583
      %v617 = vunpack.c.l.b16 %v585
      %v618 = vunpack.c.h.b16 %v585
      %v619 = vunpack.c.l.b16 %v586
      %v620 = vunpack.c.h.b16 %v586
      %v621 = vunpack.c.l.b16 %v587
      %v622 = vunpack.c.h.b16 %v587
      %v623 = vunpack.c.l.b16 %v588
      %v624 = vunpack.c.h.b16 %v588
      %v625 = vunpack.c.l.b16 %v589
      %v626 = vunpack.c.h.b16 %v589
      %v627 = vunpack.c.l.b16 %v590
      %v628 = vunpack.c.h.b16 %v590
      %v629 = vunpack.c.l.b16 %v591
      %v630 = vunpack.c.h.b16 %v591
      %v631 = vunpack.c.l.b16 %v592
      %v632 = vunpack.c.h.b16 %v592
      %v633 = vunpack.c.l.b16 %v593
      %v634 = vunpack.c.h.b16 %v593
      %v635 = vunpack.c.l.b16 %v594
      %v636 = vunpack.c.h.b16 %v594
      %v637 = vunpack.c.l.b16 %v595
      %v638 = vunpack.c.h.b16 %v595
      %v639 = vunpack.c.l.b16 %v596
      %v640 = vunpack.c.h.b16 %v596
      %v641 = vunpack.c.l.b16 %v597
      %v642 = vunpack.c.h.b16 %v597
      %v643 = vunpack.c.l.b16 %v598
      %v644 = vunpack.c.h.b16 %v598
      %v645 = vunpack.c.l.b16 %v599
      %v646 = vunpack.c.h.b16 %v599
      %v647 = vunpack.c.l.b16 %v600
      %v648 = vunpack.c.h.b16 %v600
      %v649 = vpack.c.b16 %v617, %v617
      %v650 = vpack.c.b16 %v618, %v618
      %v651 = vpack.c.b16 %v619, %v619
      %v652 = vpack.c.b16 %v620, %v620
      %v653 = vpack.c.b16 %v621, %v621
      %v654 = vpack.c.b16 %v622, %v622
      %v655 = vpack.c.b16 %v623, %v623
      %v656 = vpack.c.b16 %v624, %v624
      %v657 = vpack.c.b16 %v625, %v625
      %v658 = vpack.c.b16 %v626, %v626
      %v659 = vpack.c.b16 %v627, %v627
      %v660 = vpack.c.b16 %v628, %v628
      %v661 = vpack.c.b16 %v629, %v629
      %v662 = vpack.c.b16 %v630, %v630
      %v663 = vpack.c.b16 %v631, %v631
      %v664 = vpack.c.b16 %v632, %v632
      %v665 = vpack.c.b16 %v633, %v633
      %v666 = vpack.c.b16 %v634, %v634
      %v667 = vpack.c.b16 %v635, %v635
      %v668 = vpack.c.b16 %v636, %v636
      %v669 = vpack.c.b16 %v637, %v637
      %v670 = vpack.c.b16 %v638, %v638
      %v671 = vpack.c.b16 %v639, %v639
      %v672 = vpack.c.b16 %v640, %v640
      %v673 = vpack.c.b16 %v641, %v641
      %v674 = vpack.c.b16 %v642, %v642
      %v675 = vpack.c.b16 %v643, %v643
      %v676 = vpack.c.b16 %v644, %v644
      %v677 = vpack.c.b16 %v645, %v645
      %v678 = vpack.c.b16 %v646, %v646
      %v679 = vpack.c.b16 %v647, %v647
      %v680 = vpack.c.b16 %v648, %v648
      %713 = vst [vmem:[%s199] sm:$0xf] %v649
      %714 = vst [vmem:[%s199 + $0x4] sm:$0xf] %v650
      %715 = vst [vmem:[%s199 + $0x8] sm:$0xf] %v651
      %716 = vst [vmem:[%s199 + $0xc] sm:$0xf] %v652
      %717 = vst [vmem:[%s199 + $0x10] sm:$0xf] %v653
      %718 = vst [vmem:[%s199 + $0x14] sm:$0xf] %v654
      %719 = vst [vmem:[%s199 + $0x18] sm:$0xf] %v655
      %720 = vst [vmem:[%s199 + $0x1c] sm:$0xf] %v656
      %721 = vst [vmem:[%s199 + $0x20] sm:$0xf] %v657
      %722 = vst [vmem:[%s199 + $0x24] sm:$0xf] %v658
      %723 = vst [vmem:[%s199 + $0x28] sm:$0xf] %v659
      %724 = vst [vmem:[%s199 + $0x2c] sm:$0xf] %v660
      %725 = vst [vmem:[%s199 + $0x30] sm:$0xf] %v661
      %726 = vst [vmem:[%s199 + $0x34] sm:$0xf] %v662
      %727 = vst [vmem:[%s199 + $0x38] sm:$0xf] %v663
      %728 = vst [vmem:[%s199 + $0x3c] sm:$0xf] %v664
      %729 = vst [vmem:[%s199 + $0x40] sm:$0xf] %v665
      %730 = vst [vmem:[%s199 + $0x44] sm:$0xf] %v666
      %731 = vst [vmem:[%s199 + $0x48] sm:$0xf] %v667
      %732 = vst [vmem:[%s199 + $0x4c] sm:$0xf] %v668
      %733 = vst [vmem:[%s199 + $0x50] sm:$0xf] %v669
      %734 = vst [vmem:[%s199 + $0x54] sm:$0xf] %v670
      %735 = vst [vmem:[%s199 + $0x58] sm:$0xf] %v671
      %736 = vst [vmem:[%s199 + $0x5c] sm:$0xf] %v672
      %737 = vst [vmem:[%s199 + $0x60] sm:$0xf] %v673
      %738 = vst [vmem:[%s199 + $0x64] sm:$0xf] %v674
      %739 = vst [vmem:[%s199 + $0x68] sm:$0xf] %v675
      %740 = vst [vmem:[%s199 + $0x6c] sm:$0xf] %v676
      %741 = vst [vmem:[%s199 + $0x70] sm:$0xf] %v677
      %742 = vst [vmem:[%s199 + $0x74] sm:$0xf] %v678
      %743 = vst [vmem:[%s199 + $0x78] sm:$0xf] %v679
      %744 = vst [vmem:[%s199 + $0x7c] sm:$0xf] %v680
      %s745 = smul.u32 32, %s15
      %p746 = scmp.lt.s32.totalorder %s745, 63
      %s747 = scalar_select %p746, %s745, 63
      %s748 = smul.addr %s747, 4
      %s749 = scalar_lea.vmem %s4, %s748
      // Predicated region
      $region37: #{axial_block_forward.4} parent=35 // pred_check
        %p750 = pneg %p122
      $region38: #{axial_block_forward.4} parent=35 // pred_check_branch
        %752 = sbr.rel (%p750) target = $region40
      $region39: #{axial_block_forward.4} parent=35 // pred_region
        %s753 = smul.u32 32, %s15
      $region40: #{axial_block_forward.4} parent=35 // pred_fallthru
        _
    $region36: #{axial_block_forward.4} parent=5 // pred_fallthru
      _
    %p754 = scmp.le.s32.totalorder 2, %s10
    // Predicated region
    $region41: #{axial_block_forward.4} parent=5 // pred_check
      %p755 = pneg %p754
    $region42: #{axial_block_forward.4} parent=5 // pred_check_branch
      %757 = sbr.rel (%p755) target = $region44
    $region43: #{axial_block_forward.4} parent=5 // pred_region
      %s758 = ssub.s32 %s10, 2
      // Predicated region
      $region45: #{axial_block_forward.4} parent=43 // pred_check
        %p759 = pneg %p128
      $region46: #{axial_block_forward.4} parent=43 // pred_check_branch
        %761 = sbr.rel (%p759) target = $region48
      $region47: #{axial_block_forward.4} parent=43 // pred_region
        %s762 = smul.u32 32, %s16
        %p763 = scmp.lt.s32.totalorder %s762, 63
        %s764 = scalar_select %p763, %s762, 63
        %s765 = smul.addr %s764, 4
        %s766 = scalar_lea.vmem %s4, %s765
      $region48: #{axial_block_forward.4} parent=43 // pred_fallthru
        _
    $region44: #{axial_block_forward.4} parent=5 // pred_fallthru
      _
  $region6: #{axial_block_forward.4} parent=0 // loop_footer
    %s14 = sadd.s32 1, %s10
  $region7: #{axial_block_forward.4} parent=0 // loop_footer_branch
    %9 = sbr.rel target = $region3
  $region8: #{axial_block_forward.4} parent=0 // loop_exit
    _

// kernel: axial_block_forward.7
$region0: #{axial_block_forward.7}
  #allocation0 [shape = 'u32[]', space=smem, size = 0x4, offset = 0x4, fixed_abs, tag = 'smem constant byte address 0x4 - core index']
  #allocation1 [shape = 'u32[144,128]{1,0:T(1,128)}', space=vmem, size = 0x12000, scoped, tag = 'internal scratch']
  %s0 = inlined_call_operand.vmem [shape: bf16[512,128], index: 0, kind: input, shape index: {}]
  %s1 = inlined_call_operand.vmem [shape: f32[512,128], index: 1, kind: input, shape index: {}]
  %s2 = inlined_call_operand.vmem [shape: bf16[128,128], index: 2, kind: input, shape index: {}]
  %s3 = inlined_call_operand.vmem [shape: f32[1,128], index: 3, kind: input, shape index: {}]
  %s4 = inlined_call_operand.vmem [shape: f32[1,128], index: 4, kind: input, shape index: {}]
  %s5 = inlined_call_operand.vmem [shape: f32[512,128], index: 5, kind: output, shape index: {}]
  %s6 = sld [smem:[#allocation0]]
  $region53: #{axial_block_forward.7} parent=0
    _
  %s8 = ssub.s32 1, %s6
  %s9 = scalar_select 0, %s8, %s6
  loop: start=0, step=1, limit=4
  $region2: #{axial_block_forward.7} parent=0 // loop_pre_header
    _
  $region3: #{axial_block_forward.7} parent=0 // loop_header
    %s11 = sphi 0, %s15
    %p12 = scmp.ge.s32.totalorder %s11, 4
    %s21 = sphi 0, %s23
    %s24 = sphi 0, %s21
    %s25 = sphi 0, %s24
    %s41 = sphi 0, %s25
    %s47 = sphi 0, %s49
    %s50 = sphi 0, %s47
    %s51 = sphi 0, %s50
    %s67 = sphi 0, %s51
    %s71 = sphi 0, %s71
    %s73 = sphi 0, %s71
    %s74 = sphi 0, %s73
    %s88 = sphi 0, %s74
    %s92 = sphi 0, %s92
    %s94 = sphi 0, %s92
    %s95 = sphi 0, %s94
    %s109 = sphi 0, %s95
    %s113 = sphi 0, %s113
    %s115 = sphi 0, %s113
    %s116 = sphi 0, %s115
    %s130 = sphi 0, %s116
    %s136 = sphi 0, %s138
    %s139 = sphi 0, %s136
    %s140 = sphi 0, %s139
    %s156 = sphi 0, %s140
  $region4: #{axial_block_forward.7} parent=0 // loop_header_branch
    %14 = sbr.rel (%p12) target = $region8
  $region5: #{axial_block_forward.7} parent=0 // loop_body
    %s16 = ssub.s32 %s11, 1
    %s17 = ssub.s32 %s11, 2
    %s18 = sadd.s32 %s11, 1
    %s19 = ssub.s32 %s11, %s18
    %p20 = scmp.eq.s32.totalorder %s19, 0
    %s22 = sadd.s32 %s21, 1
    %s23 = scalar_select %p20, %s21, %s22
    %p26 = pneg %p20
    %p27 = scmp.eq.s32.totalorder %s11, 1
    %p28 = por %p26, %p27
    %p29 = scmp.ne.s32.totalorder %s21, %s24
    %p30 = scmp.eq.s32.totalorder %s11, 0
    %p31 = por %p29, %p30
    %p32 = scmp.ne.s32.totalorder %s21, %s24
    %p33 = scmp.eq.s32.totalorder %s16, 1
    %p34 = por %p32, %p33
    %p35 = scmp.ne.s32.totalorder %s24, %s25
    %p36 = scmp.eq.s32.totalorder %s16, 0
    %p37 = por %p35, %p36
    %p38 = scmp.ne.s32.totalorder %s24, %s25
    %p39 = scmp.eq.s32.totalorder %s17, 1
    %p40 = por %p38, %p39
    %p42 = scmp.ne.s32.totalorder %s25, %s41
    %p43 = scmp.eq.s32.totalorder %s17, 0
    %p44 = por %p42, %p43
    %s45 = ssub.s32 %s11, %s18
    %p46 = scmp.eq.s32.totalorder %s45, 0
    %s48 = sadd.s32 %s47, 1
    %s49 = scalar_select %p46, %s47, %s48
    %p52 = pneg %p46
    %p53 = scmp.eq.s32.totalorder %s11, 1
    %p54 = por %p52, %p53
    %p55 = scmp.ne.s32.totalorder %s47, %s50
    %p56 = scmp.eq.s32.totalorder %s11, 0
    %p57 = por %p55, %p56
    %p58 = scmp.ne.s32.totalorder %s47, %s50
    %p59 = scmp.eq.s32.totalorder %s16, 1
    %p60 = por %p58, %p59
    %p61 = scmp.ne.s32.totalorder %s50, %s51
    %p62 = scmp.eq.s32.totalorder %s16, 0
    %p63 = por %p61, %p62
    %p64 = scmp.ne.s32.totalorder %s50, %s51
    %p65 = scmp.eq.s32.totalorder %s17, 1
    %p66 = por %p64, %p65
    %p68 = scmp.ne.s32.totalorder %s51, %s67
    %p69 = scmp.eq.s32.totalorder %s17, 0
    %p70 = por %p68, %p69
    %s72 = sadd.s32 %s71, 1
    %p75 = scmp.eq.s32.totalorder %s11, 1
    %p76 = scmp.ne.s32.totalorder %s71, %s73
    %p77 = scmp.eq.s32.totalorder %s11, 0
    %p78 = por %p76, %p77
    %p79 = scmp.ne.s32.totalorder %s71, %s73
    %p80 = scmp.eq.s32.totalorder %s16, 1
    %p81 = por %p79, %p80
    %p82 = scmp.ne.s32.totalorder %s73, %s74
    %p83 = scmp.eq.s32.totalorder %s16, 0
    %p84 = por %p82, %p83
    %p85 = scmp.ne.s32.totalorder %s73, %s74
    %p86 = scmp.eq.s32.totalorder %s17, 1
    %p87 = por %p85, %p86
    %p89 = scmp.ne.s32.totalorder %s74, %s88
    %p90 = scmp.eq.s32.totalorder %s17, 0
    %p91 = por %p89, %p90
    %s93 = sadd.s32 %s92, 1
    %p96 = scmp.eq.s32.totalorder %s11, 1
    %p97 = scmp.ne.s32.totalorder %s92, %s94
    %p98 = scmp.eq.s32.totalorder %s11, 0
    %p99 = por %p97, %p98
    %p100 = scmp.ne.s32.totalorder %s92, %s94
    %p101 = scmp.eq.s32.totalorder %s16, 1
    %p102 = por %p100, %p101
    %p103 = scmp.ne.s32.totalorder %s94, %s95
    %p104 = scmp.eq.s32.totalorder %s16, 0
    %p105 = por %p103, %p104
    %p106 = scmp.ne.s32.totalorder %s94, %s95
    %p107 = scmp.eq.s32.totalorder %s17, 1
    %p108 = por %p106, %p107
    %p110 = scmp.ne.s32.totalorder %s95, %s109
    %p111 = scmp.eq.s32.totalorder %s17, 0
    %p112 = por %p110, %p111
    %s114 = sadd.s32 %s113, 1
    %p117 = scmp.eq.s32.totalorder %s11, 1
    %p118 = scmp.ne.s32.totalorder %s113, %s115
    %p119 = scmp.eq.s32.totalorder %s11, 0
    %p120 = por %p118, %p119
    %p121 = scmp.ne.s32.totalorder %s113, %s115
    %p122 = scmp.eq.s32.totalorder %s16, 1
    %p123 = por %p121, %p122
    %p124 = scmp.ne.s32.totalorder %s115, %s116
    %p125 = scmp.eq.s32.totalorder %s16, 0
    %p126 = por %p124, %p125
    %p127 = scmp.ne.s32.totalorder %s115, %s116
    %p128 = scmp.eq.s32.totalorder %s17, 1
    %p129 = por %p127, %p128
    %p131 = scmp.ne.s32.totalorder %s116, %s130
    %p132 = scmp.eq.s32.totalorder %s17, 0
    %p133 = por %p131, %p132
    %s134 = ssub.s32 %s11, %s18
    %p135 = scmp.eq.s32.totalorder %s134, 0
    %s137 = sadd.s32 %s136, 1
    %s138 = scalar_select %p135, %s136, %s137
    %p141 = pneg %p135
    %p142 = scmp.eq.s32.totalorder %s11, 1
    %p143 = por %p141, %p142
    %p144 = scmp.ne.s32.totalorder %s136, %s139
    %p145 = scmp.eq.s32.totalorder %s11, 0
    %p146 = por %p144, %p145
    %p147 = scmp.ne.s32.totalorder %s136, %s139
    %p148 = scmp.eq.s32.totalorder %s16, 1
    %p149 = por %p147, %p148
    %p150 = scmp.ne.s32.totalorder %s139, %s140
    %p151 = scmp.eq.s32.totalorder %s16, 0
    %p152 = por %p150, %p151
    %p153 = scmp.ne.s32.totalorder %s139, %s140
    %p154 = scmp.eq.s32.totalorder %s17, 1
    %p155 = por %p153, %p154
    %p157 = scmp.ne.s32.totalorder %s140, %s156
    %p158 = scmp.eq.s32.totalorder %s17, 0
    %p159 = por %p157, %p158
    %p160 = scmp.le.s32.totalorder 1, %s11
    %p161 = scmp.lt.s32.totalorder %s11, 3
    %p162 = pnand %p160, %p161
    %p163 = pneg %p162
    // Predicated region
    $region9: #{axial_block_forward.7} parent=5 // pred_check
      _
    $region10: #{axial_block_forward.7} parent=5 // pred_check_branch
      %165 = sbr.rel (%p162) target = $region12
    $region11: #{axial_block_forward.7} parent=5 // pred_region
      %s166 = ssub.s32 %s11, 1
      // Predicated region
      $region13: #{axial_block_forward.7} parent=11 // pred_check
        %p167 = pneg %p84
      $region14: #{axial_block_forward.7} parent=11 // pred_check_branch
        %169 = sbr.rel (%p167) target = $region16
      $region15: #{axial_block_forward.7} parent=11 // pred_region
        _
      $region16: #{axial_block_forward.7} parent=11 // pred_fallthru
        _
      // Predicated region
      $region17: #{axial_block_forward.7} parent=11 // pred_check
        %p170 = pneg %p105
      $region18: #{axial_block_forward.7} parent=11 // pred_check_branch
        %172 = sbr.rel (%p170) target = $region20
      $region19: #{axial_block_forward.7} parent=11 // pred_region
        _
      $region20: #{axial_block_forward.7} parent=11 // pred_fallthru
        _
      // Predicated region
      $region21: #{axial_block_forward.7} parent=11 // pred_check
        %p173 = pneg %p126
      $region22: #{axial_block_forward.7} parent=11 // pred_check_branch
        %175 = sbr.rel (%p173) target = $region24
      $region23: #{axial_block_forward.7} parent=11 // pred_region
        _
      $region24: #{axial_block_forward.7} parent=11 // pred_fallthru
        _
    $region12: #{axial_block_forward.7} parent=5 // pred_fallthru
      _
    %p176 = scmp.lt.s32.totalorder %s11, 2
    // Predicated region
    $region25: #{axial_block_forward.7} parent=5 // pred_check
      %p177 = pneg %p176
    $region26: #{axial_block_forward.7} parent=5 // pred_check_branch
      %179 = sbr.rel (%p177) target = $region28
    $region27: #{axial_block_forward.7} parent=5 // pred_region
      // Predicated region
      $region29: #{axial_block_forward.7} parent=27 // pred_check
        %p180 = pneg %p31
      $region30: #{axial_block_forward.7} parent=27 // pred_check_branch
        %182 = sbr.rel (%p180) target = $region32
      $region31: #{axial_block_forward.7} parent=27 // pred_region
        %s183 = smul.u32 32, %s11
        %p184 = scmp.lt.s32.totalorder %s183, 63
        %s185 = scalar_select %p184, %s183, 63
        %s186 = smul.addr %s185, 4
        %s187 = scalar_lea.vmem %s0, %s186
        %s188 = smul.u32 32, %s11
      $region32: #{axial_block_forward.7} parent=27 // pred_fallthru
        _
      // Predicated region
      $region33: #{axial_block_forward.7} parent=27 // pred_check
        %p189 = pneg %p57
      $region34: #{axial_block_forward.7} parent=27 // pred_check_branch
        %191 = sbr.rel (%p189) target = $region36
      $region35: #{axial_block_forward.7} parent=27 // pred_region
        %s192 = smul.u32 32, %s11
        %p193 = scmp.lt.s32.totalorder %s192, 63
        %s194 = scalar_select %p193, %s192, 63
        %s195 = smul.addr %s194, 8
        %s196 = scalar_lea.vmem %s1, %s195
        %s197 = smul.u32 32, %s11
      $region36: #{axial_block_forward.7} parent=27 // pred_fallthru
        _
    $region28: #{axial_block_forward.7} parent=5 // pred_fallthru
      _
    %p198 = scmp.le.s32.totalorder 1, %s11
    %p199 = scmp.lt.s32.totalorder %s11, 3
    %p200 = pnand %p198, %p199
    %p201 = pneg %p200
    // Predicated region
    $region37: #{axial_block_forward.7} parent=5 // pred_check
      _
    $region38: #{axial_block_forward.7} parent=5 // pred_check_branch
      %203 = sbr.rel (%p200) target = $region40
    $region39: #{axial_block_forward.7} parent=5 // pred_region
      %s204 = ssub.s32 %s11, 1
      %s205 = smul.u32 32, %s16
      %p206 = scmp.lt.s32.totalorder %s205, 63
      %s207 = scalar_select %p206, %s205, 63
      %s208 = smul.addr %s207, 4
      %s209 = scalar_lea.vmem %s0, %s208
      %p210 = pneg %p37
      %p211 = pneg %p34
      %s212 = smul.u32 32, %s16
      %p213 = scmp.lt.s32.totalorder %s212, 63
      %s214 = scalar_select %p213, %s212, 63
      %s215 = smul.addr %s214, 8
      %s216 = scalar_lea.vmem %s1, %s215
      %p217 = pneg %p63
      %p218 = pneg %p60
      %p219 = pneg %p84
      %p220 = pneg %p81
      %p221 = pneg %p105
      %p222 = pneg %p102
      %p223 = pneg %p126
      %p224 = pneg %p123
      %p225 = pneg %p152
      %p226 = pneg %p149
      %s227 = smul.u32 32, %s16
      %p228 = scmp.lt.s32.totalorder %s227, 63
      %s229 = scalar_select %p228, %s227, 63
      %s230 = smul.addr %s229, 8
      %s231 = scalar_lea.vmem %s5, %s230
      %s232 = smul.u32 32, %s16
      %p233 = scmp.lt.s32.totalorder %s232, 63
      %s234 = scalar_select %p233, %s232, 63
      %s235 = smul.addr %s234, 4
      %s236 = scalar_lea.vmem %s0, %s235
      %s237 = smul.u32 32, %s16
      %s238 = smul.u32 32, %s16
      %p239 = scmp.lt.s32.totalorder %s238, 63
      %s240 = scalar_select %p239, %s238, 63
      %s241 = smul.addr %s240, 8
      %s242 = scalar_lea.vmem %s1, %s241
      %s243 = smul.u32 32, %s16
      %s244 = smul.u32 32, %s16
      %p245 = scmp.lt.s32.totalorder %s244, 63
      %s246 = scalar_select %p245, %s244, 63
      %s247 = smul.addr %s246, 8
      %s248 = scalar_lea.vmem %s5, %s247
      %s249 = smul.u32 32, %s16
      %v251 = vld [vmem:[%s236] sm:$0xf]
      %v252 = vld [vmem:[%s236 + $0x4] sm:$0xf]
      %v253 = vld [vmem:[%s236 + $0x8] sm:$0xf]
      %v254 = vld [vmem:[%s236 + $0xc] sm:$0xf]
      %v255 = vld [vmem:[%s236 + $0x10] sm:$0xf]
      %v256 = vld [vmem:[%s236 + $0x14] sm:$0xf]
      %v257 = vld [vmem:[%s236 + $0x18] sm:$0xf]
      %v258 = vld [vmem:[%s236 + $0x1c] sm:$0xf]
      %v259 = vld [vmem:[%s236 + $0x20] sm:$0xf]
      %v260 = vld [vmem:[%s236 + $0x24] sm:$0xf]
      %v261 = vld [vmem:[%s236 + $0x28] sm:$0xf]
      %v262 = vld [vmem:[%s236 + $0x2c] sm:$0xf]
      %v263 = vld [vmem:[%s236 + $0x30] sm:$0xf]
      %v264 = vld [vmem:[%s236 + $0x34] sm:$0xf]
      %v265 = vld [vmem:[%s236 + $0x38] sm:$0xf]
      %v266 = vld [vmem:[%s236 + $0x3c] sm:$0xf]
      %v267 = vld [vmem:[%s236 + $0x40] sm:$0xf]
      %v268 = vld [vmem:[%s236 + $0x44] sm:$0xf]
      %v269 = vld [vmem:[%s236 + $0x48] sm:$0xf]
      %v270 = vld [vmem:[%s236 + $0x4c] sm:$0xf]
      %v271 = vld [vmem:[%s236 + $0x50] sm:$0xf]
      %v272 = vld [vmem:[%s236 + $0x54] sm:$0xf]
      %v273 = vld [vmem:[%s236 + $0x58] sm:$0xf]
      %v274 = vld [vmem:[%s236 + $0x5c] sm:$0xf]
      %v275 = vld [vmem:[%s236 + $0x60] sm:$0xf]
      %v276 = vld [vmem:[%s236 + $0x64] sm:$0xf]
      %v277 = vld [vmem:[%s236 + $0x68] sm:$0xf]
      %v278 = vld [vmem:[%s236 + $0x6c] sm:$0xf]
      %v279 = vld [vmem:[%s236 + $0x70] sm:$0xf]
      %v280 = vld [vmem:[%s236 + $0x74] sm:$0xf]
      %v281 = vld [vmem:[%s236 + $0x78] sm:$0xf]
      %v282 = vld [vmem:[%s236 + $0x7c] sm:$0xf]
      %v283 = vmax.bf16 %v251, 0
      %v284 = vmax.bf16 %v252, 0
      %v285 = vmax.bf16 %v253, 0
      %v286 = vmax.bf16 %v254, 0
      %v287 = vmax.bf16 %v255, 0
      %v288 = vmax.bf16 %v256, 0
      %v289 = vmax.bf16 %v257, 0
      %v290 = vmax.bf16 %v258, 0
      %v291 = vmax.bf16 %v259, 0
      %v292 = vmax.bf16 %v260, 0
      %v293 = vmax.bf16 %v261, 0
      %v294 = vmax.bf16 %v262, 0
      %v295 = vmax.bf16 %v263, 0
      %v296 = vmax.bf16 %v264, 0
      %v297 = vmax.bf16 %v265, 0
      %v298 = vmax.bf16 %v266, 0
      %v299 = vmax.bf16 %v267, 0
      %v300 = vmax.bf16 %v268, 0
      %v301 = vmax.bf16 %v269, 0
      %v302 = vmax.bf16 %v270, 0
      %v303 = vmax.bf16 %v271, 0
      %v304 = vmax.bf16 %v272, 0
      %v305 = vmax.bf16 %v273, 0
      %v306 = vmax.bf16 %v274, 0
      %v307 = vmax.bf16 %v275, 0
      %v308 = vmax.bf16 %v276, 0
      %v309 = vmax.bf16 %v277, 0
      %v310 = vmax.bf16 %v278, 0
      %v311 = vmax.bf16 %v279, 0
      %v312 = vmax.bf16 %v280, 0
      %v313 = vmax.bf16 %v281, 0
      %v314 = vmax.bf16 %v282, 0
      %v315 = vld [vmem:[%s2] sm:$0xf]
      %v316 = vld [vmem:[%s2 + $0x4] sm:$0xf]
      %v317 = vld [vmem:[%s2 + $0x8] sm:$0xf]
      %v318 = vld [vmem:[%s2 + $0xc] sm:$0xf]
      %v319 = vld [vmem:[%s2 + $0x10] sm:$0xf]
      %v320 = vld [vmem:[%s2 + $0x14] sm:$0xf]
      %v321 = vld [vmem:[%s2 + $0x18] sm:$0xf]
      %v322 = vld [vmem:[%s2 + $0x1c] sm:$0xf]
      %v323 = vld [vmem:[%s2 + $0x20] sm:$0xf]
      %v324 = vld [vmem:[%s2 + $0x24] sm:$0xf]
      %v325 = vld [vmem:[%s2 + $0x28] sm:$0xf]
      %v326 = vld [vmem:[%s2 + $0x2c] sm:$0xf]
      %v327 = vld [vmem:[%s2 + $0x30] sm:$0xf]
      %v328 = vld [vmem:[%s2 + $0x34] sm:$0xf]
      %v329 = vld [vmem:[%s2 + $0x38] sm:$0xf]
      %v330 = vld [vmem:[%s2 + $0x3c] sm:$0xf]
      %v363 = vunpack.c.l.b16 %v283
      %v364 = vunpack.c.l.b16 %v284
      %v365 = vunpack.c.l.b16 %v285
      %v366 = vunpack.c.l.b16 %v286
      %v367 = vunpack.c.l.b16 %v287
      %v368 = vunpack.c.l.b16 %v288
      %v369 = vunpack.c.l.b16 %v289
      %v370 = vunpack.c.l.b16 %v290
      %v371 = vunpack.c.l.b16 %v291
      %v372 = vunpack.c.l.b16 %v292
      %v373 = vunpack.c.l.b16 %v293
      %v374 = vunpack.c.l.b16 %v294
      %v375 = vunpack.c.l.b16 %v295
      %v376 = vunpack.c.l.b16 %v296
      %v377 = vunpack.c.l.b16 %v297
      %v378 = vunpack.c.l.b16 %v298
      %v379 = vunpack.c.l.b16 %v299
      %v380 = vunpack.c.l.b16 %v300
      %v381 = vunpack.c.l.b16 %v301
      %v382 = vunpack.c.l.b16 %v302
      %v383 = vunpack.c.l.b16 %v303
      %v384 = vunpack.c.l.b16 %v304
      %v385 = vunpack.c.l.b16 %v305
      %v386 = vunpack.c.l.b16 %v306
      %v387 = vunpack.c.l.b16 %v307
      %v388 = vunpack.c.l.b16 %v308
      %v389 = vunpack.c.l.b16 %v309
      %v390 = vunpack.c.l.b16 %v310
      %v391 = vunpack.c.l.b16 %v311
      %v392 = vunpack.c.l.b16 %v312
      %v393 = vunpack.c.l.b16 %v313
      %v394 = vunpack.c.l.b16 %v314
      %v395 = vpack.c.b16 %v364, %v363
      %v396 = vpack.c.b16 %v366, %v365
      %v397 = vpack.c.b16 %v368, %v367
      %v398 = vpack.c.b16 %v370, %v369
      %v399 = vpack.c.b16 %v372, %v371
      %v400 = vpack.c.b16 %v374, %v373
      %v401 = vpack.c.b16 %v376, %v375
      %v402 = vpack.c.b16 %v378, %v377
      %v403 = vpack.c.b16 %v380, %v379
      %v404 = vpack.c.b16 %v382, %v381
      %v405 = vpack.c.b16 %v384, %v383
      %v406 = vpack.c.b16 %v386, %v385
      %v407 = vpack.c.b16 %v388, %v387
      %v408 = vpack.c.b16 %v390, %v389
      %v409 = vpack.c.b16 %v392, %v391
      %v410 = vpack.c.b16 %v394, %v393
      %v443 = vunpack.c.l.b16 %v315
      %v444 = vunpack.c.l.b16 %v316
      %v445 = vunpack.c.l.b16 %v317
      %v446 = vunpack.c.l.b16 %v318
      %v447 = vunpack.c.l.b16 %v319
      %v448 = vunpack.c.l.b16 %v320
      %v449 = vunpack.c.l.b16 %v321
      %v450 = vunpack.c.l.b16 %v322
      %v451 = vunpack.c.l.b16 %v323
      %v452 = vunpack.c.l.b16 %v324
      %v453 = vunpack.c.l.b16 %v325
      %v454 = vunpack.c.l.b16 %v326
      %v455 = vunpack.c.l.b16 %v327
      %v456 = vunpack.c.l.b16 %v328
      %v457 = vunpack.c.l.b16 %v329
      %v458 = vunpack.c.l.b16 %v330
      %v459 = vpack.c.b16 %v444, %v443
      %v460 = vpack.c.b16 %v446, %v445
      %v461 = vpack.c.b16 %v448, %v447
      %v462 = vpack.c.b16 %v450, %v449
      %v463 = vpack.c.b16 %v452, %v451
      %v464 = vpack.c.b16 %v454, %v453
      %v465 = vpack.c.b16 %v456, %v455
      %v466 = vpack.c.b16 %v458, %v457
      %475 = vmatprep.subr.bf16.mxu0 0
      %476 = vmatpush1.bf16.msra.mxu0 %v459
      %477 = vmatprep.subr.bf16.mxu0 0
      %478 = vmatpush1.bf16.msra.mxu0 %v460
      %479 = vmatprep.subr.bf16.mxu0 0
      %480 = vmatpush1.bf16.msra.mxu0 %v461
      %481 = vmatprep.subr.bf16.mxu0 0
      %482 = vmatpush1.bf16.msra.mxu0 %v462
      %483 = vmatprep.subr.bf16.mxu0 0
      %484 = vmatpush1.bf16.msra.mxu0 %v463
      %485 = vmatprep.subr.bf16.mxu0 0
      %486 = vmatpush1.bf16.msra.mxu0 %v464
      %487 = vmatprep.subr.bf16.mxu0 0
      %488 = vmatpush1.bf16.msra.mxu0 %v465
      %489 = vmatprep.subr.bf16.mxu0 0
      %490 = vmatpush1.bf16.msra.mxu0 %v466
      %491 = vmatprep.subr.bf16.mxu0 0
      %492 = vmatpush1.bf16.msra.mxu0 0
      %493 = vmatprep.subr.bf16.mxu0 0
      %494 = vmatpush1.bf16.msra.mxu0 0
      %495 = vmatprep.subr.bf16.mxu0 0
      %496 = vmatpush1.bf16.msra.mxu0 0
      %497 = vmatprep.subr.bf16.mxu0 0
      %498 = vmatpush1.bf16.msra.mxu0 0
      %499 = vmatprep.subr.bf16.mxu0 0
      %500 = vmatpush1.bf16.msra.mxu0 0
      %501 = vmatprep.subr.bf16.mxu0 0
      %502 = vmatpush1.bf16.msra.mxu0 0
      %503 = vmatprep.subr.bf16.mxu0 0
      %504 = vmatpush1.bf16.msra.mxu0 0
      %505 = vmatprep.subr.bf16.mxu0 0
      %506 = vmatpush1.bf16.msra.mxu0 0
      %507 = vmatprep.mubr.bf16.mxu0 0
      %508 = vmatmul.mubr.bf16.gmra.mrb[0].mxu0 %v395
      %v509 = vpop.f32.mrb[0].mxu0
      %v510 = vadd.f32 0.0, %v509
      %v511 = vpop.f32.mrb[0].mxu0
      %v512 = vpop.f32.mrb[0].mxu0
      %v513 = vadd.f32 0.0, %v512
      %v514 = vpop.f32.mrb[0].mxu0
      %515 = vmatprep.mubr.bf16.mxu0 0
      %516 = vmatmul.mubr.bf16.gmra.mrb[0].mxu0 %v396
      %v517 = vpop.f32.mrb[0].mxu0
      %v518 = vadd.f32 0.0, %v517
      %v519 = vpop.f32.mrb[0].mxu0
      %v520 = vpop.f32.mrb[0].mxu0
      %v521 = vadd.f32 0.0, %v520
      %v522 = vpop.f32.mrb[0].mxu0
      %523 = vmatprep.mubr.bf16.mxu0 0
      %524 = vmatmul.mubr.bf16.gmra.mrb[0].mxu0 %v397
      %v525 = vpop.f32.mrb[0].mxu0
      %v526 = vadd.f32 0.0, %v525
      %v527 = vpop.f32.mrb[0].mxu0
      %v528 = vpop.f32.mrb[0].mxu0
      %v529 = vadd.f32 0.0, %v528
      %v530 = vpop.f32.mrb[0].mxu0
      %531 = vmatprep.mubr.bf16.mxu0 0
      %532 = vmatmul.mubr.bf16.gmra.mrb[0].mxu0 %v398
      %v533 = vpop.f32.mrb[0].mxu0
      %v534 = vadd.f32 0.0, %v533
      %v535 = vpop.f32.mrb[0].mxu0
      %v536 = vpop.f32.mrb[0].mxu0
      %v537 = vadd.f32 0.0, %v536
      %v538 = vpop.f32.mrb[0].mxu0
      %539 = vmatprep.mubr.bf16.mxu0 0
      %540 = vmatmul.mubr.bf16.gmra.mrb[0].mxu0 %v399
      %v541 = vpop.f32.mrb[0].mxu0
      %v542 = vadd.f32 0.0, %v541
      %v543 = vpop.f32.mrb[0].mxu0
      %v544 = vpop.f32.mrb[0].mxu0
      %v545 = vadd.f32 0.0, %v544
      %v546 = vpop.f32.mrb[0].mxu0
      %547 = vmatprep.mubr.bf16.mxu0 0
      %548 = vmatmul.mubr.bf16.gmra.mrb[0].mxu0 %v400
      %v549 = vpop.f32.mrb[0].mxu0
      %v550 = vadd.f32 0.0, %v549
      %v551 = vpop.f32.mrb[0].mxu0
      %v552 = vpop.f32.mrb[0].mxu0
      %v553 = vadd.f32 0.0, %v552
      %v554 = vpop.f32.mrb[0].mxu0
      %555 = vmatprep.mubr.bf16.mxu0 0
      %556 = vmatmul.mubr.bf16.gmra.mrb[0].mxu0 %v401
      %v557 = vpop.f32.mrb[0].mxu0
      %v558 = vadd.f32 0.0, %v557
      %v559 = vpop.f32.mrb[0].mxu0
      %v560 = vpop.f32.mrb[0].mxu0
      %v561 = vadd.f32 0.0, %v560
      %v562 = vpop.f32.mrb[0].mxu0
      %563 = vmatprep.mubr.bf16.mxu0 0
      %564 = vmatmul.mubr.bf16.gmra.mrb[0].mxu0 %v402
      %v565 = vpop.f32.mrb[0].mxu0
      %v566 = vadd.f32 0.0, %v565
      %v567 = vpop.f32.mrb[0].mxu0
      %v568 = vpop.f32.mrb[0].mxu0
      %v569 = vadd.f32 0.0, %v568
      %v570 = vpop.f32.mrb[0].mxu0
      %571 = vmatprep.mubr.bf16.mxu0 0
      %572 = vmatmul.mubr.bf16.gmra.mrb[0].mxu0 %v403
      %v573 = vpop.f32.mrb[0].mxu0
      %v574 = vadd.f32 0.0, %v573
      %v575 = vpop.f32.mrb[0].mxu0
      %v576 = vpop.f32.mrb[0].mxu0
      %v577 = vadd.f32 0.0, %v576
      %v578 = vpop.f32.mrb[0].mxu0
      %579 = vmatprep.mubr.bf16.mxu0 0
      %580 = vmatmul.mubr.bf16.gmra.mrb[0].mxu0 %v404
      %v581 = vpop.f32.mrb[0].mxu0
      %v582 = vadd.f32 0.0, %v581
      %v583 = vpop.f32.mrb[0].mxu0
      %v584 = vpop.f32.mrb[0].mxu0
      %v585 = vadd.f32 0.0, %v584
      %v586 = vpop.f32.mrb[0].mxu0
      %587 = vmatprep.mubr.bf16.mxu0 0
      %588 = vmatmul.mubr.bf16.gmra.mrb[0].mxu0 %v405
      %v589 = vpop.f32.mrb[0].mxu0
      %v590 = vadd.f32 0.0, %v589
      %v591 = vpop.f32.mrb[0].mxu0
      %v592 = vpop.f32.mrb[0].mxu0
      %v593 = vadd.f32 0.0, %v592
      %v594 = vpop.f32.mrb[0].mxu0
      %595 = vmatprep.mubr.bf16.mxu0 0
      %596 = vmatmul.mubr.bf16.gmra.mrb[0].mxu0 %v406
      %v597 = vpop.f32.mrb[0].mxu0
      %v598 = vadd.f32 0.0, %v597
      %v599 = vpop.f32.mrb[0].mxu0
      %v600 = vpop.f32.mrb[0].mxu0
      %v601 = vadd.f32 0.0, %v600
      %v602 = vpop.f32.mrb[0].mxu0
      %603 = vmatprep.mubr.bf16.mxu0 0
      %604 = vmatmul.mubr.bf16.gmra.mrb[0].mxu0 %v407
      %v605 = vpop.f32.mrb[0].mxu0
      %v606 = vadd.f32 0.0, %v605
      %v607 = vpop.f32.mrb[0].mxu0
      %v608 = vpop.f32.mrb[0].mxu0
      %v609 = vadd.f32 0.0, %v608
      %v610 = vpop.f32.mrb[0].mxu0
      %611 = vmatprep.mubr.bf16.mxu0 0
      %612 = vmatmul.mubr.bf16.gmra.mrb[0].mxu0 %v408
      %v613 = vpop.f32.mrb[0].mxu0
      %v614 = vadd.f32 0.0, %v613
      %v615 = vpop.f32.mrb[0].mxu0
      %v616 = vpop.f32.mrb[0].mxu0
      %v617 = vadd.f32 0.0, %v616
      %v618 = vpop.f32.mrb[0].mxu0
      %619 = vmatprep.mubr.bf16.mxu0 0
      %620 = vmatmul.mubr.bf16.gmra.mrb[0].mxu0 %v409
      %v621 = vpop.f32.mrb[0].mxu0
      %v622 = vadd.f32 0.0, %v621
      %v623 = vpop.f32.mrb[0].mxu0
      %v624 = vpop.f32.mrb[0].mxu0
      %v625 = vadd.f32 0.0, %v624
      %v626 = vpop.f32.mrb[0].mxu0
      %627 = vmatprep.mubr.bf16.mxu0 0
      %628 = vmatmul.mubr.bf16.gmra.mrb[0].mxu0 %v410
      %v629 = vpop.f32.mrb[0].mxu0
      %v630 = vadd.f32 0.0, %v629
      %v631 = vpop.f32.mrb[0].mxu0
      %v632 = vpop.f32.mrb[0].mxu0
      %v633 = vadd.f32 0.0, %v632
      %v634 = vpop.f32.mrb[0].mxu0
      %635 = vdwg.mxu0
      %v636 = vld [vmem:[%s3] sm:$0x1]
      %v638 = vlaneseq
      %v639 = vshrl.u32 %v638, 7
      %v640 = vsub.s32 0, %v639
      %v641 = vrot.slane %v636, %v640
      %v643 = vmul.f32 %v510, %v641
      %v644 = vmul.f32 %v513, %v641
      %v645 = vmul.f32 %v518, %v641
      %v646 = vmul.f32 %v521, %v641
      %v647 = vmul.f32 %v526, %v641
      %v648 = vmul.f32 %v529, %v641
      %v649 = vmul.f32 %v534, %v641
      %v650 = vmul.f32 %v537, %v641
      %v651 = vmul.f32 %v542, %v641
      %v652 = vmul.f32 %v545, %v641
      %v653 = vmul.f32 %v550, %v641
      %v654 = vmul.f32 %v553, %v641
      %v655 = vmul.f32 %v558, %v641
      %v656 = vmul.f32 %v561, %v641
      %v657 = vmul.f32 %v566, %v641
      %v658 = vmul.f32 %v569, %v641
      %v659 = vmul.f32 %v574, %v641
      %v660 = vmul.f32 %v577, %v641
      %v661 = vmul.f32 %v582, %v641
      %v662 = vmul.f32 %v585, %v641
      %v663 = vmul.f32 %v590, %v641
      %v664 = vmul.f32 %v593, %v641
      %v665 = vmul.f32 %v598, %v641
      %v666 = vmul.f32 %v601, %v641
      %v667 = vmul.f32 %v606, %v641
      %v668 = vmul.f32 %v609, %v641
      %v669 = vmul.f32 %v614, %v641
      %v670 = vmul.f32 %v617, %v641
      %v671 = vmul.f32 %v622, %v641
      %v672 = vmul.f32 %v625, %v641
      %v673 = vmul.f32 %v630, %v641
      %v674 = vmul.f32 %v633, %v641
      %v675 = vld [vmem:[%s4] sm:$0x1]
      %v677 = vlaneseq
      %v678 = vshrl.u32 %v677, 7
      %v679 = vsub.s32 0, %v678
      %v680 = vrot.slane %v675, %v679
      %v682 = vadd.f32 %v643, %v680
      %v683 = vadd.f32 %v644, %v680
      %v684 = vadd.f32 %v645, %v680
      %v685 = vadd.f32 %v646, %v680
      %v686 = vadd.f32 %v647, %v680
      %v687 = vadd.f32 %v648, %v680
      %v688 = vadd.f32 %v649, %v680
      %v689 = vadd.f32 %v650, %v680
      %v690 = vadd.f32 %v651, %v680
      %v691 = vadd.f32 %v652, %v680
      %v692 = vadd.f32 %v653, %v680
      %v693 = vadd.f32 %v654, %v680
      %v694 = vadd.f32 %v655, %v680
      %v695 = vadd.f32 %v656, %v680
      %v696 = vadd.f32 %v657, %v680
      %v697 = vadd.f32 %v658, %v680
      %v698 = vadd.f32 %v659, %v680
      %v699 = vadd.f32 %v660, %v680
      %v700 = vadd.f32 %v661, %v680
      %v701 = vadd.f32 %v662, %v680
      %v702 = vadd.f32 %v663, %v680
      %v703 = vadd.f32 %v664, %v680
      %v704 = vadd.f32 %v665, %v680
      %v705 = vadd.f32 %v666, %v680
      %v706 = vadd.f32 %v667, %v680
      %v707 = vadd.f32 %v668, %v680
      %v708 = vadd.f32 %v669, %v680
      %v709 = vadd.f32 %v670, %v680
      %v710 = vadd.f32 %v671, %v680
      %v711 = vadd.f32 %v672, %v680
      %v712 = vadd.f32 %v673, %v680
      %v713 = vadd.f32 %v674, %v680
      %v714 = vld [vmem:[%s242] sm:$0xff]
      %v715 = vld [vmem:[%s242 + $0x8] sm:$0xff]
      %v716 = vld [vmem:[%s242 + $0x10] sm:$0xff]
      %v717 = vld [vmem:[%s242 + $0x18] sm:$0xff]
      %v718 = vld [vmem:[%s242 + $0x20] sm:$0xff]
      %v719 = vld [vmem:[%s242 + $0x28] sm:$0xff]
      %v720 = vld [vmem:[%s242 + $0x30] sm:$0xff]
      %v721 = vld [vmem:[%s242 + $0x38] sm:$0xff]
      %v722 = vld [vmem:[%s242 + $0x40] sm:$0xff]
      %v723 = vld [vmem:[%s242 + $0x48] sm:$0xff]
      %v724 = vld [vmem:[%s242 + $0x50] sm:$0xff]
      %v725 = vld [vmem:[%s242 + $0x58] sm:$0xff]
      %v726 = vld [vmem:[%s242 + $0x60] sm:$0xff]
      %v727 = vld [vmem:[%s242 + $0x68] sm:$0xff]
      %v728 = vld [vmem:[%s242 + $0x70] sm:$0xff]
      %v729 = vld [vmem:[%s242 + $0x78] sm:$0xff]
      %v730 = vld [vmem:[%s242 + $0x80] sm:$0xff]
      %v731 = vld [vmem:[%s242 + $0x88] sm:$0xff]
      %v732 = vld [vmem:[%s242 + $0x90] sm:$0xff]
      %v733 = vld [vmem:[%s242 + $0x98] sm:$0xff]
      %v734 = vld [vmem:[%s242 + $0xa0] sm:$0xff]
      %v735 = vld [vmem:[%s242 + $0xa8] sm:$0xff]
      %v736 = vld [vmem:[%s242 + $0xb0] sm:$0xff]
      %v737 = vld [vmem:[%s242 + $0xb8] sm:$0xff]
      %v738 = vld [vmem:[%s242 + $0xc0] sm:$0xff]
      %v739 = vld [vmem:[%s242 + $0xc8] sm:$0xff]
      %v740 = vld [vmem:[%s242 + $0xd0] sm:$0xff]
      %v741 = vld [vmem:[%s242 + $0xd8] sm:$0xff]
      %v742 = vld [vmem:[%s242 + $0xe0] sm:$0xff]
      %v743 = vld [vmem:[%s242 + $0xe8] sm:$0xff]
      %v744 = vld [vmem:[%s242 + $0xf0] sm:$0xff]
      %v745 = vld [vmem:[%s242 + $0xf8] sm:$0xff]
      %v746 = vadd.f32 %v682, %v714
      %v747 = vadd.f32 %v683, %v715
      %v748 = vadd.f32 %v684, %v716
      %v749 = vadd.f32 %v685, %v717
      %v750 = vadd.f32 %v686, %v718
      %v751 = vadd.f32 %v687, %v719
      %v752 = vadd.f32 %v688, %v720
      %v753 = vadd.f32 %v689, %v721
      %v754 = vadd.f32 %v690, %v722
      %v755 = vadd.f32 %v691, %v723
      %v756 = vadd.f32 %v692, %v724
      %v757 = vadd.f32 %v693, %v725
      %v758 = vadd.f32 %v694, %v726
      %v759 = vadd.f32 %v695, %v727
      %v760 = vadd.f32 %v696, %v728
      %v761 = vadd.f32 %v697, %v729
      %v762 = vadd.f32 %v698, %v730
      %v763 = vadd.f32 %v699, %v731
      %v764 = vadd.f32 %v700, %v732
      %v765 = vadd.f32 %v701, %v733
      %v766 = vadd.f32 %v702, %v734
      %v767 = vadd.f32 %v703, %v735
      %v768 = vadd.f32 %v704, %v736
      %v769 = vadd.f32 %v705, %v737
      %v770 = vadd.f32 %v706, %v738
      %v771 = vadd.f32 %v707, %v739
      %v772 = vadd.f32 %v708, %v740
      %v773 = vadd.f32 %v709, %v741
      %v774 = vadd.f32 %v710, %v742
      %v775 = vadd.f32 %v711, %v743
      %v776 = vadd.f32 %v712, %v744
      %v777 = vadd.f32 %v713, %v745
      %v778 = vmax.f32 %v746, 0.0
      %v779 = vmax.f32 %v747, 0.0
      %v780 = vmax.f32 %v748, 0.0
      %v781 = vmax.f32 %v749, 0.0
      %v782 = vmax.f32 %v750, 0.0
      %v783 = vmax.f32 %v751, 0.0
      %v784 = vmax.f32 %v752, 0.0
      %v785 = vmax.f32 %v753, 0.0
      %v786 = vmax.f32 %v754, 0.0
      %v787 = vmax.f32 %v755, 0.0
      %v788 = vmax.f32 %v756, 0.0
      %v789 = vmax.f32 %v757, 0.0
      %v790 = vmax.f32 %v758, 0.0
      %v791 = vmax.f32 %v759, 0.0
      %v792 = vmax.f32 %v760, 0.0
      %v793 = vmax.f32 %v761, 0.0
      %v794 = vmax.f32 %v762, 0.0
      %v795 = vmax.f32 %v763, 0.0
      %v796 = vmax.f32 %v764, 0.0
      %v797 = vmax.f32 %v765, 0.0
      %v798 = vmax.f32 %v766, 0.0
      %v799 = vmax.f32 %v767, 0.0
      %v800 = vmax.f32 %v768, 0.0
      %v801 = vmax.f32 %v769, 0.0
      %v802 = vmax.f32 %v770, 0.0
      %v803 = vmax.f32 %v771, 0.0
      %v804 = vmax.f32 %v772, 0.0
      %v805 = vmax.f32 %v773, 0.0
      %v806 = vmax.f32 %v774, 0.0
      %v807 = vmax.f32 %v775, 0.0
      %v808 = vmax.f32 %v776, 0.0
      %v809 = vmax.f32 %v777, 0.0
      %810 = vst [vmem:[%s248] sm:$0xff] %v778
      %811 = vst [vmem:[%s248 + $0x8] sm:$0xff] %v779
      %812 = vst [vmem:[%s248 + $0x10] sm:$0xff] %v780
      %813 = vst [vmem:[%s248 + $0x18] sm:$0xff] %v781
      %814 = vst [vmem:[%s248 + $0x20] sm:$0xff] %v782
      %815 = vst [vmem:[%s248 + $0x28] sm:$0xff] %v783
      %816 = vst [vmem:[%s248 + $0x30] sm:$0xff] %v784
      %817 = vst [vmem:[%s248 + $0x38] sm:$0xff] %v785
      %818 = vst [vmem:[%s248 + $0x40] sm:$0xff] %v786
      %819 = vst [vmem:[%s248 + $0x48] sm:$0xff] %v787
      %820 = vst [vmem:[%s248 + $0x50] sm:$0xff] %v788
      %821 = vst [vmem:[%s248 + $0x58] sm:$0xff] %v789
      %822 = vst [vmem:[%s248 + $0x60] sm:$0xff] %v790
      %823 = vst [vmem:[%s248 + $0x68] sm:$0xff] %v791
      %824 = vst [vmem:[%s248 + $0x70] sm:$0xff] %v792
      %825 = vst [vmem:[%s248 + $0x78] sm:$0xff] %v793
      %826 = vst [vmem:[%s248 + $0x80] sm:$0xff] %v794
      %827 = vst [vmem:[%s248 + $0x88] sm:$0xff] %v795
      %828 = vst [vmem:[%s248 + $0x90] sm:$0xff] %v796
      %829 = vst [vmem:[%s248 + $0x98] sm:$0xff] %v797
      %830 = vst [vmem:[%s248 + $0xa0] sm:$0xff] %v798
      %831 = vst [vmem:[%s248 + $0xa8] sm:$0xff] %v799
      %832 = vst [vmem:[%s248 + $0xb0] sm:$0xff] %v800
      %833 = vst [vmem:[%s248 + $0xb8] sm:$0xff] %v801
      %834 = vst [vmem:[%s248 + $0xc0] sm:$0xff] %v802
      %835 = vst [vmem:[%s248 + $0xc8] sm:$0xff] %v803
      %836 = vst [vmem:[%s248 + $0xd0] sm:$0xff] %v804
      %837 = vst [vmem:[%s248 + $0xd8] sm:$0xff] %v805
      %838 = vst [vmem:[%s248 + $0xe0] sm:$0xff] %v806
      %839 = vst [vmem:[%s248 + $0xe8] sm:$0xff] %v807
      %840 = vst [vmem:[%s248 + $0xf0] sm:$0xff] %v808
      %841 = vst [vmem:[%s248 + $0xf8] sm:$0xff] %v809
      %s842 = smul.u32 32, %s16
      %p843 = scmp.lt.s32.totalorder %s842, 63
      %s844 = scalar_select %p843, %s842, 63
      %s845 = smul.addr %s844, 8
      %s846 = scalar_lea.vmem %s5, %s845
      // Predicated region
      $region41: #{axial_block_forward.7} parent=39 // pred_check
        %p847 = pneg %p149
      $region42: #{axial_block_forward.7} parent=39 // pred_check_branch
        %849 = sbr.rel (%p847) target = $region44
      $region43: #{axial_block_forward.7} parent=39 // pred_region
        %s850 = smul.u32 32, %s16
      $region44: #{axial_block_forward.7} parent=39 // pred_fallthru
        _
    $region40: #{axial_block_forward.7} parent=5 // pred_fallthru
      _
    %p851 = scmp.le.s32.totalorder 2, %s11
    // Predicated region
    $region45: #{axial_block_forward.7} parent=5 // pred_check
      %p852 = pneg %p851
    $region46: #{axial_block_forward.7} parent=5 // pred_check_branch
      %854 = sbr.rel (%p852) target = $region48
    $region47: #{axial_block_forward.7} parent=5 // pred_region
      %s855 = ssub.s32 %s11, 2
      // Predicated region
      $region49: #{axial_block_forward.7} parent=47 // pred_check
        %p856 = pneg %p155
      $region50: #{axial_block_forward.7} parent=47 // pred_check_branch
        %858 = sbr.rel (%p856) target = $region52
      $region51: #{axial_block_forward.7} parent=47 // pred_region
        %s859 = smul.u32 32, %s17
        %p860 = scmp.lt.s32.totalorder %s859, 63
        %s861 = scalar_select %p860, %s859, 63
        %s862 = smul.addr %s861, 8
        %s863 = scalar_lea.vmem %s5, %s862
      $region52: #{axial_block_forward.7} parent=47 // pred_fallthru
        _
    $region48: #{axial_block_forward.7} parent=5 // pred_fallthru
      _
  $region6: #{axial_block_forward.7} parent=0 // loop_footer
    %s15 = sadd.s32 1, %s11
  $region7: #{axial_block_forward.7} parent=0 // loop_footer_branch
    %10 = sbr.rel target = $region3
  $region8: #{axial_block_forward.7} parent=0 // loop_exit
    _

// kernel: axial_block_forward.5
$region0: #{axial_block_forward.5}
  #allocation0 [shape = 'u32[]', space=smem, size = 0x4, offset = 0x4, fixed_abs, tag = 'smem constant byte address 0x4 - core index']
  #allocation1 [shape = 'u32[144,128]{1,0:T(1,128)}', space=vmem, size = 0x12000, scoped, tag = 'internal scratch']
  #allocation2 [shape = 'f32[1]{0:T(128)S(6)}', space=smem, size = 0x200, scoped, tag = 'scoped memory for axial_block_forward.5']
  %s0 = inlined_call_operand.vmem [shape: bf16[32,16,128], index: 0, kind: input, shape index: {}]
  %s1 = inlined_call_operand.vmem [shape: bf16[128,128], index: 1, kind: input, shape index: {}]
  %s2 = inlined_call_operand.vmem [shape: bf16[128,128], index: 2, kind: input, shape index: {}]
  %s3 = inlined_call_operand.vmem [shape: bf16[128,128], index: 3, kind: input, shape index: {}]
  %s4 = inlined_call_operand.vmem [shape: f32[1,128], index: 4, kind: input, shape index: {}]
  %s5 = inlined_call_operand.vmem [shape: f32[1,128], index: 5, kind: input, shape index: {}]
  %s6 = inlined_call_operand.vmem [shape: f32[1,128], index: 6, kind: input, shape index: {}]
  %s7 = inlined_call_operand.<no memory space> [shape: f32[1], index: 7, kind: input, shape index: {}]
  %s8 = inlined_call_operand.vmem [shape: bf16[32,16,128], index: 8, kind: output, shape index: {}]
  %s9 = sld [smem:[#allocation0]]
  $region65: #{axial_block_forward.5} parent=0
    _
  %s11 = ssub.s32 1, %s9
  %s12 = scalar_select 0, %s11, %s9
  %13 = sst [smem:[#allocation2]] %s7
  loop: start=0, step=1, limit=4
  $region2: #{axial_block_forward.5} parent=0 // loop_pre_header
    _
  $region3: #{axial_block_forward.5} parent=0 // loop_header
    %s15 = sphi 0, %s19
    %p16 = scmp.ge.s32.totalorder %s15, 4
    %s25 = sphi 0, %s27
    %s28 = sphi 0, %s25
    %s29 = sphi 0, %s28
    %s45 = sphi 0, %s29
    %s49 = sphi 0, %s49
    %s51 = sphi 0, %s49
    %s52 = sphi 0, %s51
    %s66 = sphi 0, %s52
    %s70 = sphi 0, %s70
    %s72 = sphi 0, %s70
    %s73 = sphi 0, %s72
    %s87 = sphi 0, %s73
    %s91 = sphi 0, %s91
    %s93 = sphi 0, %s91
    %s94 = sphi 0, %s93
    %s108 = sphi 0, %s94
    %s112 = sphi 0, %s112
    %s114 = sphi 0, %s112
    %s115 = sphi 0, %s114
    %s129 = sphi 0, %s115
    %s133 = sphi 0, %s133
    %s135 = sphi 0, %s133
    %s136 = sphi 0, %s135
    %s150 = sphi 0, %s136
    %s154 = sphi 0, %s154
    %s156 = sphi 0, %s154
    %s157 = sphi 0, %s156
    %s171 = sphi 0, %s157
    %s175 = sphi 0, %s175
    %s177 = sphi 0, %s175
    %s178 = sphi 0, %s177
    %s192 = sphi 0, %s178
    %s198 = sphi 0, %s200
    %s201 = sphi 0, %s198
    %s202 = sphi 0, %s201
    %s218 = sphi 0, %s202
  $region4: #{axial_block_forward.5} parent=0 // loop_header_branch
    %18 = sbr.rel (%p16) target = $region8
  $region5: #{axial_block_forward.5} parent=0 // loop_body
    %s20 = ssub.s32 %s15, 1
    %s21 = ssub.s32 %s15, 2
    %s22 = sadd.s32 %s15, 1
    %s23 = ssub.s32 %s15, %s22
    %p24 = scmp.eq.s32.totalorder %s23, 0
    %s26 = sadd.s32 %s25, 1
    %s27 = scalar_select %p24, %s25, %s26
    %p30 = pneg %p24
    %p31 = scmp.eq.s32.totalorder %s15, 1
    %p32 = por %p30, %p31
    %p33 = scmp.ne.s32.totalorder %s25, %s28
    %p34 = scmp.eq.s32.totalorder %s15, 0
    %p35 = por %p33, %p34
    %p36 = scmp.ne.s32.totalorder %s25, %s28
    %p37 = scmp.eq.s32.totalorder %s20, 1
    %p38 = por %p36, %p37
    %p39 = scmp.ne.s32.totalorder %s28, %s29
    %p40 = scmp.eq.s32.totalorder %s20, 0
    %p41 = por %p39, %p40
    %p42 = scmp.ne.s32.totalorder %s28, %s29
    %p43 = scmp.eq.s32.totalorder %s21, 1
    %p44 = por %p42, %p43
    %p46 = scmp.ne.s32.totalorder %s29, %s45
    %p47 = scmp.eq.s32.totalorder %s21, 0
    %p48 = por %p46, %p47
    %s50 = sadd.s32 %s49, 1
    %p53 = scmp.eq.s32.totalorder %s15, 1
    %p54 = scmp.ne.s32.totalorder %s49, %s51
    %p55 = scmp.eq.s32.totalorder %s15, 0
    %p56 = por %p54, %p55
    %p57 = scmp.ne.s32.totalorder %s49, %s51
    %p58 = scmp.eq.s32.totalorder %s20, 1
    %p59 = por %p57, %p58
    %p60 = scmp.ne.s32.totalorder %s51, %s52
    %p61 = scmp.eq.s32.totalorder %s20, 0
    %p62 = por %p60, %p61
    %p63 = scmp.ne.s32.totalorder %s51, %s52
    %p64 = scmp.eq.s32.totalorder %s21, 1
    %p65 = por %p63, %p64
    %p67 = scmp.ne.s32.totalorder %s52, %s66
    %p68 = scmp.eq.s32.totalorder %s21, 0
    %p69 = por %p67, %p68
    %s71 = sadd.s32 %s70, 1
    %p74 = scmp.eq.s32.totalorder %s15, 1
    %p75 = scmp.ne.s32.totalorder %s70, %s72
    %p76 = scmp.eq.s32.totalorder %s15, 0
    %p77 = por %p75, %p76
    %p78 = scmp.ne.s32.totalorder %s70, %s72
    %p79 = scmp.eq.s32.totalorder %s20, 1
    %p80 = por %p78, %p79
    %p81 = scmp.ne.s32.totalorder %s72, %s73
    %p82 = scmp.eq.s32.totalorder %s20, 0
    %p83 = por %p81, %p82
    %p84 = scmp.ne.s32.totalorder %s72, %s73
    %p85 = scmp.eq.s32.totalorder %s21, 1
    %p86 = por %p84, %p85
    %p88 = scmp.ne.s32.totalorder %s73, %s87
    %p89 = scmp.eq.s32.totalorder %s21, 0
    %p90 = por %p88, %p89
    %s92 = sadd.s32 %s91, 1
    %p95 = scmp.eq.s32.totalorder %s15, 1
    %p96 = scmp.ne.s32.totalorder %s91, %s93
    %p97 = scmp.eq.s32.totalorder %s15, 0
    %p98 = por %p96, %p97
    %p99 = scmp.ne.s32.totalorder %s91, %s93
    %p100 = scmp.eq.s32.totalorder %s20, 1
    %p101 = por %p99, %p100
    %p102 = scmp.ne.s32.totalorder %s93, %s94
    %p103 = scmp.eq.s32.totalorder %s20, 0
    %p104 = por %p102, %p103
    %p105 = scmp.ne.s32.totalorder %s93, %s94
    %p106 = scmp.eq.s32.totalorder %s21, 1
    %p107 = por %p105, %p106
    %p109 = scmp.ne.s32.totalorder %s94, %s108
    %p110 = scmp.eq.s32.totalorder %s21, 0
    %p111 = por %p109, %p110
    %s113 = sadd.s32 %s112, 1
    %p116 = scmp.eq.s32.totalorder %s15, 1
    %p117 = scmp.ne.s32.totalorder %s112, %s114
    %p118 = scmp.eq.s32.totalorder %s15, 0
    %p119 = por %p117, %p118
    %p120 = scmp.ne.s32.totalorder %s112, %s114
    %p121 = scmp.eq.s32.totalorder %s20, 1
    %p122 = por %p120, %p121
    %p123 = scmp.ne.s32.totalorder %s114, %s115
    %p124 = scmp.eq.s32.totalorder %s20, 0
    %p125 = por %p123, %p124
    %p126 = scmp.ne.s32.totalorder %s114, %s115
    %p127 = scmp.eq.s32.totalorder %s21, 1
    %p128 = por %p126, %p127
    %p130 = scmp.ne.s32.totalorder %s115, %s129
    %p131 = scmp.eq.s32.totalorder %s21, 0
    %p132 = por %p130, %p131
    %s134 = sadd.s32 %s133, 1
    %p137 = scmp.eq.s32.totalorder %s15, 1
    %p138 = scmp.ne.s32.totalorder %s133, %s135
    %p139 = scmp.eq.s32.totalorder %s15, 0
    %p140 = por %p138, %p139
    %p141 = scmp.ne.s32.totalorder %s133, %s135
    %p142 = scmp.eq.s32.totalorder %s20, 1
    %p143 = por %p141, %p142
    %p144 = scmp.ne.s32.totalorder %s135, %s136
    %p145 = scmp.eq.s32.totalorder %s20, 0
    %p146 = por %p144, %p145
    %p147 = scmp.ne.s32.totalorder %s135, %s136
    %p148 = scmp.eq.s32.totalorder %s21, 1
    %p149 = por %p147, %p148
    %p151 = scmp.ne.s32.totalorder %s136, %s150
    %p152 = scmp.eq.s32.totalorder %s21, 0
    %p153 = por %p151, %p152
    %s155 = sadd.s32 %s154, 1
    %p158 = scmp.eq.s32.totalorder %s15, 1
    %p159 = scmp.ne.s32.totalorder %s154, %s156
    %p160 = scmp.eq.s32.totalorder %s15, 0
    %p161 = por %p159, %p160
    %p162 = scmp.ne.s32.totalorder %s154, %s156
    %p163 = scmp.eq.s32.totalorder %s20, 1
    %p164 = por %p162, %p163
    %p165 = scmp.ne.s32.totalorder %s156, %s157
    %p166 = scmp.eq.s32.totalorder %s20, 0
    %p167 = por %p165, %p166
    %p168 = scmp.ne.s32.totalorder %s156, %s157
    %p169 = scmp.eq.s32.totalorder %s21, 1
    %p170 = por %p168, %p169
    %p172 = scmp.ne.s32.totalorder %s157, %s171
    %p173 = scmp.eq.s32.totalorder %s21, 0
    %p174 = por %p172, %p173
    %s176 = sadd.s32 %s175, 1
    %p179 = scmp.eq.s32.totalorder %s15, 1
    %p180 = scmp.ne.s32.totalorder %s175, %s177
    %p181 = scmp.eq.s32.totalorder %s15, 0
    %p182 = por %p180, %p181
    %p183 = scmp.ne.s32.totalorder %s175, %s177
    %p184 = scmp.eq.s32.totalorder %s20, 1
    %p185 = por %p183, %p184
    %p186 = scmp.ne.s32.totalorder %s177, %s178
    %p187 = scmp.eq.s32.totalorder %s20, 0
    %p188 = por %p186, %p187
    %p189 = scmp.ne.s32.totalorder %s177, %s178
    %p190 = scmp.eq.s32.totalorder %s21, 1
    %p191 = por %p189, %p190
    %p193 = scmp.ne.s32.totalorder %s178, %s192
    %p194 = scmp.eq.s32.totalorder %s21, 0
    %p195 = por %p193, %p194
    %s196 = ssub.s32 %s15, %s22
    %p197 = scmp.eq.s32.totalorder %s196, 0
    %s199 = sadd.s32 %s198, 1
    %s200 = scalar_select %p197, %s198, %s199
    %p203 = pneg %p197
    %p204 = scmp.eq.s32.totalorder %s15, 1
    %p205 = por %p203, %p204
    %p206 = scmp.ne.s32.totalorder %s198, %s201
    %p207 = scmp.eq.s32.totalorder %s15, 0
    %p208 = por %p206, %p207
    %p209 = scmp.ne.s32.totalorder %s198, %s201
    %p210 = scmp.eq.s32.totalorder %s20, 1
    %p211 = por %p209, %p210
    %p212 = scmp.ne.s32.totalorder %s201, %s202
    %p213 = scmp.eq.s32.totalorder %s20, 0
    %p214 = por %p212, %p213
    %p215 = scmp.ne.s32.totalorder %s201, %s202
    %p216 = scmp.eq.s32.totalorder %s21, 1
    %p217 = por %p215, %p216
    %p219 = scmp.ne.s32.totalorder %s202, %s218
    %p220 = scmp.eq.s32.totalorder %s21, 0
    %p221 = por %p219, %p220
    %p222 = scmp.le.s32.totalorder 1, %s15
    %p223 = scmp.lt.s32.totalorder %s15, 3
    %p224 = pnand %p222, %p223
    %p225 = pneg %p224
    // Predicated region
    $region9: #{axial_block_forward.5} parent=5 // pred_check
      _
    $region10: #{axial_block_forward.5} parent=5 // pred_check_branch
      %227 = sbr.rel (%p224) target = $region12
    $region11: #{axial_block_forward.5} parent=5 // pred_region
      %s228 = ssub.s32 %s15, 1
      // Predicated region
      $region13: #{axial_block_forward.5} parent=11 // pred_check
        %p229 = pneg %p62
      $region14: #{axial_block_forward.5} parent=11 // pred_check_branch
        %231 = sbr.rel (%p229) target = $region16
      $region15: #{axial_block_forward.5} parent=11 // pred_region
        _
      $region16: #{axial_block_forward.5} parent=11 // pred_fallthru
        _
      // Predicated region
      $region17: #{axial_block_forward.5} parent=11 // pred_check
        %p232 = pneg %p83
      $region18: #{axial_block_forward.5} parent=11 // pred_check_branch
        %234 = sbr.rel (%p232) target = $region20
      $region19: #{axial_block_forward.5} parent=11 // pred_region
        _
      $region20: #{axial_block_forward.5} parent=11 // pred_fallthru
        _
      // Predicated region
      $region21: #{axial_block_forward.5} parent=11 // pred_check
        %p235 = pneg %p104
      $region22: #{axial_block_forward.5} parent=11 // pred_check_branch
        %237 = sbr.rel (%p235) target = $region24
      $region23: #{axial_block_forward.5} parent=11 // pred_region
        _
      $region24: #{axial_block_forward.5} parent=11 // pred_fallthru
        _
      // Predicated region
      $region25: #{axial_block_forward.5} parent=11 // pred_check
        %p238 = pneg %p125
      $region26: #{axial_block_forward.5} parent=11 // pred_check_branch
        %240 = sbr.rel (%p238) target = $region28
      $region27: #{axial_block_forward.5} parent=11 // pred_region
        _
      $region28: #{axial_block_forward.5} parent=11 // pred_fallthru
        _
      // Predicated region
      $region29: #{axial_block_forward.5} parent=11 // pred_check
        %p241 = pneg %p146
      $region30: #{axial_block_forward.5} parent=11 // pred_check_branch
        %243 = sbr.rel (%p241) target = $region32
      $region31: #{axial_block_forward.5} parent=11 // pred_region
        _
      $region32: #{axial_block_forward.5} parent=11 // pred_fallthru
        _
      // Predicated region
      $region33: #{axial_block_forward.5} parent=11 // pred_check
        %p244 = pneg %p167
      $region34: #{axial_block_forward.5} parent=11 // pred_check_branch
        %246 = sbr.rel (%p244) target = $region36
      $region35: #{axial_block_forward.5} parent=11 // pred_region
        _
      $region36: #{axial_block_forward.5} parent=11 // pred_fallthru
        _
      // Predicated region
      $region37: #{axial_block_forward.5} parent=11 // pred_check
        %p247 = pneg %p188
      $region38: #{axial_block_forward.5} parent=11 // pred_check_branch
        %249 = sbr.rel (%p247) target = $region40
      $region39: #{axial_block_forward.5} parent=11 // pred_region
        _
      $region40: #{axial_block_forward.5} parent=11 // pred_fallthru
        _
    $region12: #{axial_block_forward.5} parent=5 // pred_fallthru
      _
    %p250 = scmp.lt.s32.totalorder %s15, 2
    // Predicated region
    $region41: #{axial_block_forward.5} parent=5 // pred_check
      %p251 = pneg %p250
    $region42: #{axial_block_forward.5} parent=5 // pred_check_branch
      %253 = sbr.rel (%p251) target = $region44
    $region43: #{axial_block_forward.5} parent=5 // pred_region
      // Predicated region
      $region45: #{axial_block_forward.5} parent=43 // pred_check
        %p254 = pneg %p35
      $region46: #{axial_block_forward.5} parent=43 // pred_check_branch
        %256 = sbr.rel (%p254) target = $region48
      $region47: #{axial_block_forward.5} parent=43 // pred_region
        %s257 = smul.u32 16, %s15
        %p258 = scmp.lt.s32.totalorder %s257, 31
        %s259 = scalar_select %p258, %s257, 31
        %s260 = smul.addr %s259, 2
        %s261 = smul.addr %s260, 4
        %s262 = scalar_lea.vmem %s0, %s261
        %s263 = smul.u32 16, %s15
      $region48: #{axial_block_forward.5} parent=43 // pred_fallthru
        _
    $region44: #{axial_block_forward.5} parent=5 // pred_fallthru
      _
    %p264 = scmp.le.s32.totalorder 1, %s15
    %p265 = scmp.lt.s32.totalorder %s15, 3
    %p266 = pnand %p264, %p265
    %p267 = pneg %p266
    // Predicated region
    $region49: #{axial_block_forward.5} parent=5 // pred_check
      _
    $region50: #{axial_block_forward.5} parent=5 // pred_check_branch
      %269 = sbr.rel (%p266) target = $region52
    $region51: #{axial_block_forward.5} parent=5 // pred_region
      %s270 = ssub.s32 %s15, 1
      %s271 = smul.u32 16, %s20
      %p272 = scmp.lt.s32.totalorder %s271, 31
      %s273 = scalar_select %p272, %s271, 31
      %s274 = smul.addr %s273, 2
      %s275 = smul.addr %s274, 4
      %s276 = scalar_lea.vmem %s0, %s275
      %p277 = pneg %p41
      %p278 = pneg %p38
      %p279 = pneg %p62
      %p280 = pneg %p59
      %p281 = pneg %p83
      %p282 = pneg %p80
      %p283 = pneg %p104
      %p284 = pneg %p101
      %p285 = pneg %p125
      %p286 = pneg %p122
      %p287 = pneg %p146
      %p288 = pneg %p143
      %p289 = pneg %p167
      %p290 = pneg %p164
      %p291 = pneg %p188
      %p292 = pneg %p185
      %p293 = pneg %p214
      %p294 = pneg %p211
      %s295 = smul.u32 16, %s20
      %p296 = scmp.lt.s32.totalorder %s295, 31
      %s297 = scalar_select %p296, %s295, 31
      %s298 = smul.addr %s297, 2
      %s299 = smul.addr %s298, 4
      %s300 = scalar_lea.vmem %s8, %s299
      %s301 = smul.u32 16, %s20
      %p302 = scmp.lt.s32.totalorder %s301, 31
      %s303 = scalar_select %p302, %s301, 31
      %s304 = smul.addr %s303, 2
      %s305 = smul.addr %s304, 4
      %s306 = scalar_lea.vmem %s0, %s305
      %s307 = smul.u32 16, %s20
      %s308 = smul.u32 16, %s20
      %p309 = scmp.lt.s32.totalorder %s308, 31
      %s310 = scalar_select %p309, %s308, 31
      %s311 = smul.addr %s310, 2
      %s312 = smul.addr %s311, 4
      %s313 = scalar_lea.vmem %s8, %s312
      %s314 = smul.u32 16, %s20
      %v316 = vld [vmem:[%s306] sm:$0xf]
      %v317 = vld [vmem:[%s306 + $0x4] sm:$0xf]
      %v318 = vld [vmem:[%s306 + $0x8] sm:$0xf]
      %v319 = vld [vmem:[%s306 + $0xc] sm:$0xf]
      %v320 = vld [vmem:[%s306 + $0x10] sm:$0xf]
      %v321 = vld [vmem:[%s306 + $0x14] sm:$0xf]
      %v322 = vld [vmem:[%s306 + $0x18] sm:$0xf]
      %v323 = vld [vmem:[%s306 + $0x1c] sm:$0xf]
      %v324 = vld [vmem:[%s306 + $0x20] sm:$0xf]
      %v325 = vld [vmem:[%s306 + $0x24] sm:$0xf]
      %v326 = vld [vmem:[%s306 + $0x28] sm:$0xf]
      %v327 = vld [vmem:[%s306 + $0x2c] sm:$0xf]
      %v328 = vld [vmem:[%s306 + $0x30] sm:$0xf]
      %v329 = vld [vmem:[%s306 + $0x34] sm:$0xf]
      %v330 = vld [vmem:[%s306 + $0x38] sm:$0xf]
      %v331 = vld [vmem:[%s306 + $0x3c] sm:$0xf]
      %v332 = vld [vmem:[%s306 + $0x40] sm:$0xf]
      %v333 = vld [vmem:[%s306 + $0x44] sm:$0xf]
      %v334 = vld [vmem:[%s306 + $0x48] sm:$0xf]
      %v335 = vld [vmem:[%s306 + $0x4c] sm:$0xf]
      %v336 = vld [vmem:[%s306 + $0x50] sm:$0xf]
      %v337 = vld [vmem:[%s306 + $0x54] sm:$0xf]
      %v338 = vld [vmem:[%s306 + $0x58] sm:$0xf]
      %v339 = vld [vmem:[%s306 + $0x5c] sm:$0xf]
      %v340 = vld [vmem:[%s306 + $0x60] sm:$0xf]
      %v341 = vld [vmem:[%s306 + $0x64] sm:$0xf]
      %v342 = vld [vmem:[%s306 + $0x68] sm:$0xf]
      %v343 = vld [vmem:[%s306 + $0x6c] sm:$0xf]
      %v344 = vld [vmem:[%s306 + $0x70] sm:$0xf]
      %v345 = vld [vmem:[%s306 + $0x74] sm:$0xf]
      %v346 = vld [vmem:[%s306 + $0x78] sm:$0xf]
      %v347 = vld [vmem:[%s306 + $0x7c] sm:$0xf]
      %v348 = vld [vmem:[%s1] sm:$0xf]
      %v349 = vld [vmem:[%s1 + $0x4] sm:$0xf]
      %v350 = vld [vmem:[%s1 + $0x8] sm:$0xf]
      %v351 = vld [vmem:[%s1 + $0xc] sm:$0xf]
      %v352 = vld [vmem:[%s1 + $0x10] sm:$0xf]
      %v353 = vld [vmem:[%s1 + $0x14] sm:$0xf]
      %v354 = vld [vmem:[%s1 + $0x18] sm:$0xf]
      %v355 = vld [vmem:[%s1 + $0x1c] sm:$0xf]
      %v356 = vld [vmem:[%s1 + $0x20] sm:$0xf]
      %v357 = vld [vmem:[%s1 + $0x24] sm:$0xf]
      %v358 = vld [vmem:[%s1 + $0x28] sm:$0xf]
      %v359 = vld [vmem:[%s1 + $0x2c] sm:$0xf]
      %v360 = vld [vmem:[%s1 + $0x30] sm:$0xf]
      %v361 = vld [vmem:[%s1 + $0x34] sm:$0xf]
      %v362 = vld [vmem:[%s1 + $0x38] sm:$0xf]
      %v363 = vld [vmem:[%s1 + $0x3c] sm:$0xf]
      %v364 = vld [vmem:[%s4] sm:$0x1]
      %v366 = vlaneseq
      %v367 = vshrl.u32 %v366, 7
      %v368 = vsub.s32 0, %v367
      %v369 = vrot.slane %v364, %v368
      %v403 = vunpack.c.l.b16 %v316
      %v404 = vunpack.c.l.b16 %v317
      %v405 = vunpack.c.l.b16 %v318
      %v406 = vunpack.c.l.b16 %v319
      %v407 = vunpack.c.l.b16 %v320
      %v408 = vunpack.c.l.b16 %v321
      %v409 = vunpack.c.l.b16 %v322
      %v410 = vunpack.c.l.b16 %v323
      %v411 = vunpack.c.l.b16 %v324
      %v412 = vunpack.c.l.b16 %v325
      %v413 = vunpack.c.l.b16 %v326
      %v414 = vunpack.c.l.b16 %v327
      %v415 = vunpack.c.l.b16 %v328
      %v416 = vunpack.c.l.b16 %v329
      %v417 = vunpack.c.l.b16 %v330
      %v418 = vunpack.c.l.b16 %v331
      %v419 = vunpack.c.l.b16 %v332
      %v420 = vunpack.c.l.b16 %v333
      %v421 = vunpack.c.l.b16 %v334
      %v422 = vunpack.c.l.b16 %v335
      %v423 = vunpack.c.l.b16 %v336
      %v424 = vunpack.c.l.b16 %v337
      %v425 = vunpack.c.l.b16 %v338
      %v426 = vunpack.c.l.b16 %v339
      %v427 = vunpack.c.l.b16 %v340
      %v428 = vunpack.c.l.b16 %v341
      %v429 = vunpack.c.l.b16 %v342
      %v430 = vunpack.c.l.b16 %v343
      %v431 = vunpack.c.l.b16 %v344
      %v432 = vunpack.c.l.b16 %v345
      %v433 = vunpack.c.l.b16 %v346
      %v434 = vunpack.c.l.b16 %v347
      %v435 = vpack.c.b16 %v404, %v403
      %v436 = vpack.c.b16 %v406, %v405
      %v437 = vpack.c.b16 %v408, %v407
      %v438 = vpack.c.b16 %v410, %v409
      %v439 = vpack.c.b16 %v412, %v411
      %v440 = vpack.c.b16 %v414, %v413
      %v441 = vpack.c.b16 %v416, %v415
      %v442 = vpack.c.b16 %v418, %v417
      %v443 = vpack.c.b16 %v420, %v419
      %v444 = vpack.c.b16 %v422, %v421
      %v445 = vpack.c.b16 %v424, %v423
      %v446 = vpack.c.b16 %v426, %v425
      %v447 = vpack.c.b16 %v428, %v427
      %v448 = vpack.c.b16 %v430, %v429
      %v449 = vpack.c.b16 %v432, %v431
      %v450 = vpack.c.b16 %v434, %v433
      %v483 = vunpack.c.l.b16 %v348
      %v484 = vunpack.c.l.b16 %v349
      %v485 = vunpack.c.l.b16 %v350
      %v486 = vunpack.c.l.b16 %v351
      %v487 = vunpack.c.l.b16 %v352
      %v488 = vunpack.c.l.b16 %v353
      %v489 = vunpack.c.l.b16 %v354
      %v490 = vunpack.c.l.b16 %v355
      %v491 = vunpack.c.l.b16 %v356
      %v492 = vunpack.c.l.b16 %v357
      %v493 = vunpack.c.l.b16 %v358
      %v494 = vunpack.c.l.b16 %v359
      %v495 = vunpack.c.l.b16 %v360
      %v496 = vunpack.c.l.b16 %v361
      %v497 = vunpack.c.l.b16 %v362
      %v498 = vunpack.c.l.b16 %v363
      %v499 = vpack.c.b16 %v484, %v483
      %v500 = vpack.c.b16 %v486, %v485
      %v501 = vpack.c.b16 %v488, %v487
      %v502 = vpack.c.b16 %v490, %v489
      %v503 = vpack.c.b16 %v492, %v491
      %v504 = vpack.c.b16 %v494, %v493
      %v505 = vpack.c.b16 %v496, %v495
      %v506 = vpack.c.b16 %v498, %v497
      %515 = vmatprep.subr.bf16.mxu0 0
      %516 = vmatpush1.bf16.msra.mxu0 %v499
      %517 = vmatprep.subr.bf16.mxu0 0
      %518 = vmatpush1.bf16.msra.mxu0 %v500
      %519 = vmatprep.subr.bf16.mxu0 0
      %520 = vmatpush1.bf16.msra.mxu0 %v501
      %521 = vmatprep.subr.bf16.mxu0 0
      %522 = vmatpush1.bf16.msra.mxu0 %v502
      %523 = vmatprep.subr.bf16.mxu0 0
      %524 = vmatpush1.bf16.msra.mxu0 %v503
      %525 = vmatprep.subr.bf16.mxu0 0
      %526 = vmatpush1.bf16.msra.mxu0 %v504
      %527 = vmatprep.subr.bf16.mxu0 0
      %528 = vmatpush1.bf16.msra.mxu0 %v505
      %529 = vmatprep.subr.bf16.mxu0 0
      %530 = vmatpush1.bf16.msra.mxu0 %v506
      %531 = vmatprep.subr.bf16.mxu0 0
      %532 = vmatpush1.bf16.msra.mxu0 0
      %533 = vmatprep.subr.bf16.mxu0 0
      %534 = vmatpush1.bf16.msra.mxu0 0
      %535 = vmatprep.subr.bf16.mxu0 0
      %536 = vmatpush1.bf16.msra.mxu0 0
      %537 = vmatprep.subr.bf16.mxu0 0
      %538 = vmatpush1.bf16.msra.mxu0 0
      %539 = vmatprep.subr.bf16.mxu0 0
      %540 = vmatpush1.bf16.msra.mxu0 0
      %541 = vmatprep.subr.bf16.mxu0 0
      %542 = vmatpush1.bf16.msra.mxu0 0
      %543 = vmatprep.subr.bf16.mxu0 0
      %544 = vmatpush1.bf16.msra.mxu0 0
      %545 = vmatprep.subr.bf16.mxu0 0
      %546 = vmatpush1.bf16.msra.mxu0 0
      %547 = vmatprep.mubr.bf16.mxu0 0
      %548 = vmatmul.mubr.bf16.gmra.mrb[0].mxu0 %v435
      %v549 = vpop.f32.mrb[0].mxu0
      %v550 = vadd.f32 %v369, %v549
      %v551 = vpop.f32.mrb[0].mxu0
      %v552 = vpop.f32.mrb[0].mxu0
      %v553 = vadd.f32 %v369, %v552
      %v554 = vpop.f32.mrb[0].mxu0
      %555 = vmatprep.mubr.bf16.mxu0 0
      %556 = vmatmul.mubr.bf16.gmra.mrb[0].mxu0 %v436
      %v557 = vpop.f32.mrb[0].mxu0
      %v558 = vadd.f32 %v369, %v557
      %v559 = vpop.f32.mrb[0].mxu0
      %v560 = vpop.f32.mrb[0].mxu0
      %v561 = vadd.f32 %v369, %v560
      %v562 = vpop.f32.mrb[0].mxu0
      %563 = vmatprep.mubr.bf16.mxu0 0
      %564 = vmatmul.mubr.bf16.gmra.mrb[0].mxu0 %v437
      %v565 = vpop.f32.mrb[0].mxu0
      %v566 = vadd.f32 %v369, %v565
      %v567 = vpop.f32.mrb[0].mxu0
      %v568 = vpop.f32.mrb[0].mxu0
      %v569 = vadd.f32 %v369, %v568
      %v570 = vpop.f32.mrb[0].mxu0
      %571 = vmatprep.mubr.bf16.mxu0 0
      %572 = vmatmul.mubr.bf16.gmra.mrb[0].mxu0 %v438
      %v573 = vpop.f32.mrb[0].mxu0
      %v574 = vadd.f32 %v369, %v573
      %v575 = vpop.f32.mrb[0].mxu0
      %v576 = vpop.f32.mrb[0].mxu0
      %v577 = vadd.f32 %v369, %v576
      %v578 = vpop.f32.mrb[0].mxu0
      %579 = vmatprep.mubr.bf16.mxu0 0
      %580 = vmatmul.mubr.bf16.gmra.mrb[0].mxu0 %v439
      %v581 = vpop.f32.mrb[0].mxu0
      %v582 = vadd.f32 %v369, %v581
      %v583 = vpop.f32.mrb[0].mxu0
      %v584 = vpop.f32.mrb[0].mxu0
      %v585 = vadd.f32 %v369, %v584
      %v586 = vpop.f32.mrb[0].mxu0
      %587 = vmatprep.mubr.bf16.mxu0 0
      %588 = vmatmul.mubr.bf16.gmra.mrb[0].mxu0 %v440
      %v589 = vpop.f32.mrb[0].mxu0
      %v590 = vadd.f32 %v369, %v589
      %v591 = vpop.f32.mrb[0].mxu0
      %v592 = vpop.f32.mrb[0].mxu0
      %v593 = vadd.f32 %v369, %v592
      %v594 = vpop.f32.mrb[0].mxu0
      %595 = vmatprep.mubr.bf16.mxu0 0
      %596 = vmatmul.mubr.bf16.gmra.mrb[0].mxu0 %v441
      %v597 = vpop.f32.mrb[0].mxu0
      %v598 = vadd.f32 %v369, %v597
      %v599 = vpop.f32.mrb[0].mxu0
      %v600 = vpop.f32.mrb[0].mxu0
      %v601 = vadd.f32 %v369, %v600
      %v602 = vpop.f32.mrb[0].mxu0
      %603 = vmatprep.mubr.bf16.mxu0 0
      %604 = vmatmul.mubr.bf16.gmra.mrb[0].mxu0 %v442
      %v605 = vpop.f32.mrb[0].mxu0
      %v606 = vadd.f32 %v369, %v605
      %v607 = vpop.f32.mrb[0].mxu0
      %v608 = vpop.f32.mrb[0].mxu0
      %v609 = vadd.f32 %v369, %v608
      %v610 = vpop.f32.mrb[0].mxu0
      %611 = vmatprep.mubr.bf16.mxu0 0
      %612 = vmatmul.mubr.bf16.gmra.mrb[0].mxu0 %v443
      %v613 = vpop.f32.mrb[0].mxu0
      %v614 = vadd.f32 %v369, %v613
      %v615 = vpop.f32.mrb[0].mxu0
      %v616 = vpop.f32.mrb[0].mxu0
      %v617 = vadd.f32 %v369, %v616
      %v618 = vpop.f32.mrb[0].mxu0
      %619 = vmatprep.mubr.bf16.mxu0 0
      %620 = vmatmul.mubr.bf16.gmra.mrb[0].mxu0 %v444
      %v621 = vpop.f32.mrb[0].mxu0
      %v622 = vadd.f32 %v369, %v621
      %v623 = vpop.f32.mrb[0].mxu0
      %v624 = vpop.f32.mrb[0].mxu0
      %v625 = vadd.f32 %v369, %v624
      %v626 = vpop.f32.mrb[0].mxu0
      %627 = vmatprep.mubr.bf16.mxu0 0
      %628 = vmatmul.mubr.bf16.gmra.mrb[0].mxu0 %v445
      %v629 = vpop.f32.mrb[0].mxu0
      %v630 = vadd.f32 %v369, %v629
      %v631 = vpop.f32.mrb[0].mxu0
      %v632 = vpop.f32.mrb[0].mxu0
      %v633 = vadd.f32 %v369, %v632
      %v634 = vpop.f32.mrb[0].mxu0
      %635 = vmatprep.mubr.bf16.mxu0 0
      %636 = vmatmul.mubr.bf16.gmra.mrb[0].mxu0 %v446
      %v637 = vpop.f32.mrb[0].mxu0
      %v638 = vadd.f32 %v369, %v637
      %v639 = vpop.f32.mrb[0].mxu0
      %v640 = vpop.f32.mrb[0].mxu0
      %v641 = vadd.f32 %v369, %v640
      %v642 = vpop.f32.mrb[0].mxu0
      %643 = vmatprep.mubr.bf16.mxu0 0
      %644 = vmatmul.mubr.bf16.gmra.mrb[0].mxu0 %v447
      %v645 = vpop.f32.mrb[0].mxu0
      %v646 = vadd.f32 %v369, %v645
      %v647 = vpop.f32.mrb[0].mxu0
      %v648 = vpop.f32.mrb[0].mxu0
      %v649 = vadd.f32 %v369, %v648
      %v650 = vpop.f32.mrb[0].mxu0
      %651 = vmatprep.mubr.bf16.mxu0 0
      %652 = vmatmul.mubr.bf16.gmra.mrb[0].mxu0 %v448
      %v653 = vpop.f32.mrb[0].mxu0
      %v654 = vadd.f32 %v369, %v653
      %v655 = vpop.f32.mrb[0].mxu0
      %v656 = vpop.f32.mrb[0].mxu0
      %v657 = vadd.f32 %v369, %v656
      %v658 = vpop.f32.mrb[0].mxu0
      %659 = vmatprep.mubr.bf16.mxu0 0
      %660 = vmatmul.mubr.bf16.gmra.mrb[0].mxu0 %v449
      %v661 = vpop.f32.mrb[0].mxu0
      %v662 = vadd.f32 %v369, %v661
      %v663 = vpop.f32.mrb[0].mxu0
      %v664 = vpop.f32.mrb[0].mxu0
      %v665 = vadd.f32 %v369, %v664
      %v666 = vpop.f32.mrb[0].mxu0
      %667 = vmatprep.mubr.bf16.mxu0 0
      %668 = vmatmul.mubr.bf16.gmra.mrb[0].mxu0 %v450
      %v669 = vpop.f32.mrb[0].mxu0
      %v670 = vadd.f32 %v369, %v669
      %v671 = vpop.f32.mrb[0].mxu0
      %v672 = vpop.f32.mrb[0].mxu0
      %v673 = vadd.f32 %v369, %v672
      %v674 = vpop.f32.mrb[0].mxu0
      %675 = vdwg.mxu0
      %v676 = vpack.c.bf16 %v553, %v550
      %v677 = vpack.c.bf16 %v561, %v558
      %v678 = vpack.c.bf16 %v569, %v566
      %v679 = vpack.c.bf16 %v577, %v574
      %v680 = vpack.c.bf16 %v585, %v582
      %v681 = vpack.c.bf16 %v593, %v590
      %v682 = vpack.c.bf16 %v601, %v598
      %v683 = vpack.c.bf16 %v609, %v606
      %v684 = vpack.c.bf16 %v617, %v614
      %v685 = vpack.c.bf16 %v625, %v622
      %v686 = vpack.c.bf16 %v633, %v630
      %v687 = vpack.c.bf16 %v641, %v638
      %v688 = vpack.c.bf16 %v649, %v646
      %v689 = vpack.c.bf16 %v657, %v654
      %v690 = vpack.c.bf16 %v665, %v662
      %v691 = vpack.c.bf16 %v673, %v670
      %v692 = vld [vmem:[%s2] sm:$0xf]
      %v693 = vld [vmem:[%s2 + $0x4] sm:$0xf]
      %v694 = vld [vmem:[%s2 + $0x8] sm:$0xf]
      %v695 = vld [vmem:[%s2 + $0xc] sm:$0xf]
      %v696 = vld [vmem:[%s2 + $0x10] sm:$0xf]
      %v697 = vld [vmem:[%s2 + $0x14] sm:$0xf]
      %v698 = vld [vmem:[%s2 + $0x18] sm:$0xf]
      %v699 = vld [vmem:[%s2 + $0x1c] sm:$0xf]
      %v700 = vld [vmem:[%s2 + $0x20] sm:$0xf]
      %v701 = vld [vmem:[%s2 + $0x24] sm:$0xf]
      %v702 = vld [vmem:[%s2 + $0x28] sm:$0xf]
      %v703 = vld [vmem:[%s2 + $0x2c] sm:$0xf]
      %v704 = vld [vmem:[%s2 + $0x30] sm:$0xf]
      %v705 = vld [vmem:[%s2 + $0x34] sm:$0xf]
      %v706 = vld [vmem:[%s2 + $0x38] sm:$0xf]
      %v707 = vld [vmem:[%s2 + $0x3c] sm:$0xf]
      %v708 = vld [vmem:[%s5] sm:$0x1]
      %v710 = vlaneseq
      %v711 = vshrl.u32 %v710, 7
      %v712 = vsub.s32 0, %v711
      %v713 = vrot.slane %v708, %v712
      %v731 = vunpack.c.l.b16 %v692
      %v732 = vunpack.c.l.b16 %v693
      %v733 = vunpack.c.l.b16 %v694
      %v734 = vunpack.c.l.b16 %v695
      %v735 = vunpack.c.l.b16 %v696
      %v736 = vunpack.c.l.b16 %v697
      %v737 = vunpack.c.l.b16 %v698
      %v738 = vunpack.c.l.b16 %v699
      %v739 = vunpack.c.l.b16 %v700
      %v740 = vunpack.c.l.b16 %v701
      %v741 = vunpack.c.l.b16 %v702
      %v742 = vunpack.c.l.b16 %v703
      %v743 = vunpack.c.l.b16 %v704
      %v744 = vunpack.c.l.b16 %v705
      %v745 = vunpack.c.l.b16 %v706
      %v746 = vunpack.c.l.b16 %v707
      %v747 = vpack.c.b16 %v732, %v731
      %v748 = vpack.c.b16 %v734, %v733
      %v749 = vpack.c.b16 %v736, %v735
      %v750 = vpack.c.b16 %v738, %v737
      %v751 = vpack.c.b16 %v740, %v739
      %v752 = vpack.c.b16 %v742, %v741
      %v753 = vpack.c.b16 %v744, %v743
      %v754 = vpack.c.b16 %v746, %v745
      %763 = vmatprep.subr.bf16.mxu0 0
      %764 = vmatpush1.bf16.msra.mxu0 %v747
      %765 = vmatprep.subr.bf16.mxu0 0
      %766 = vmatpush1.bf16.msra.mxu0 %v748
      %767 = vmatprep.subr.bf16.mxu0 0
      %768 = vmatpush1.bf16.msra.mxu0 %v749
      %769 = vmatprep.subr.bf16.mxu0 0
      %770 = vmatpush1.bf16.msra.mxu0 %v750
      %771 = vmatprep.subr.bf16.mxu0 0
      %772 = vmatpush1.bf16.msra.mxu0 %v751
      %773 = vmatprep.subr.bf16.mxu0 0
      %774 = vmatpush1.bf16.msra.mxu0 %v752
      %775 = vmatprep.subr.bf16.mxu0 0
      %776 = vmatpush1.bf16.msra.mxu0 %v753
      %777 = vmatprep.subr.bf16.mxu0 0
      %778 = vmatpush1.bf16.msra.mxu0 %v754
      %779 = vmatprep.subr.bf16.mxu0 0
      %780 = vmatpush1.bf16.msra.mxu0 0
      %781 = vmatprep.subr.bf16.mxu0 0
      %782 = vmatpush1.bf16.msra.mxu0 0
      %783 = vmatprep.subr.bf16.mxu0 0
      %784 = vmatpush1.bf16.msra.mxu0 0
      %785 = vmatprep.subr.bf16.mxu0 0
      %786 = vmatpush1.bf16.msra.mxu0 0
      %787 = vmatprep.subr.bf16.mxu0 0
      %788 = vmatpush1.bf16.msra.mxu0 0
      %789 = vmatprep.subr.bf16.mxu0 0
      %790 = vmatpush1.bf16.msra.mxu0 0
      %791 = vmatprep.subr.bf16.mxu0 0
      %792 = vmatpush1.bf16.msra.mxu0 0
      %793 = vmatprep.subr.bf16.mxu0 0
      %794 = vmatpush1.bf16.msra.mxu0 0
      %795 = vmatprep.mubr.bf16.mxu0 0
      %796 = vmatmul.mubr.bf16.gmra.mrb[0].mxu0 %v435
      %v797 = vpop.f32.mrb[0].mxu0
      %v798 = vadd.f32 %v713, %v797
      %v799 = vpop.f32.mrb[0].mxu0
      %v800 = vpop.f32.mrb[0].mxu0
      %v801 = vadd.f32 %v713, %v800
      %v802 = vpop.f32.mrb[0].mxu0
      %803 = vmatprep.mubr.bf16.mxu0 0
      %804 = vmatmul.mubr.bf16.gmra.mrb[0].mxu0 %v436
      %v805 = vpop.f32.mrb[0].mxu0
      %v806 = vadd.f32 %v713, %v805
      %v807 = vpop.f32.mrb[0].mxu0
      %v808 = vpop.f32.mrb[0].mxu0
      %v809 = vadd.f32 %v713, %v808
      %v810 = vpop.f32.mrb[0].mxu0
      %811 = vmatprep.mubr.bf16.mxu0 0
      %812 = vmatmul.mubr.bf16.gmra.mrb[0].mxu0 %v437
      %v813 = vpop.f32.mrb[0].mxu0
      %v814 = vadd.f32 %v713, %v813
      %v815 = vpop.f32.mrb[0].mxu0
      %v816 = vpop.f32.mrb[0].mxu0
      %v817 = vadd.f32 %v713, %v816
      %v818 = vpop.f32.mrb[0].mxu0
      %819 = vmatprep.mubr.bf16.mxu0 0
      %820 = vmatmul.mubr.bf16.gmra.mrb[0].mxu0 %v438
      %v821 = vpop.f32.mrb[0].mxu0
      %v822 = vadd.f32 %v713, %v821
      %v823 = vpop.f32.mrb[0].mxu0
      %v824 = vpop.f32.mrb[0].mxu0
      %v825 = vadd.f32 %v713, %v824
      %v826 = vpop.f32.mrb[0].mxu0
      %827 = vmatprep.mubr.bf16.mxu0 0
      %828 = vmatmul.mubr.bf16.gmra.mrb[0].mxu0 %v439
      %v829 = vpop.f32.mrb[0].mxu0
      %v830 = vadd.f32 %v713, %v829
      %v831 = vpop.f32.mrb[0].mxu0
      %v832 = vpop.f32.mrb[0].mxu0
      %v833 = vadd.f32 %v713, %v832
      %v834 = vpop.f32.mrb[0].mxu0
      %835 = vmatprep.mubr.bf16.mxu0 0
      %836 = vmatmul.mubr.bf16.gmra.mrb[0].mxu0 %v440
      %v837 = vpop.f32.mrb[0].mxu0
      %v838 = vadd.f32 %v713, %v837
      %v839 = vpop.f32.mrb[0].mxu0
      %v840 = vpop.f32.mrb[0].mxu0
      %v841 = vadd.f32 %v713, %v840
      %v842 = vpop.f32.mrb[0].mxu0
      %843 = vmatprep.mubr.bf16.mxu0 0
      %844 = vmatmul.mubr.bf16.gmra.mrb[0].mxu0 %v441
      %v845 = vpop.f32.mrb[0].mxu0
      %v846 = vadd.f32 %v713, %v845
      %v847 = vpop.f32.mrb[0].mxu0
      %v848 = vpop.f32.mrb[0].mxu0
      %v849 = vadd.f32 %v713, %v848
      %v850 = vpop.f32.mrb[0].mxu0
      %851 = vmatprep.mubr.bf16.mxu0 0
      %852 = vmatmul.mubr.bf16.gmra.mrb[0].mxu0 %v442
      %v853 = vpop.f32.mrb[0].mxu0
      %v854 = vadd.f32 %v713, %v853
      %v855 = vpop.f32.mrb[0].mxu0
      %v856 = vpop.f32.mrb[0].mxu0
      %v857 = vadd.f32 %v713, %v856
      %v858 = vpop.f32.mrb[0].mxu0
      %859 = vmatprep.mubr.bf16.mxu0 0
      %860 = vmatmul.mubr.bf16.gmra.mrb[0].mxu0 %v443
      %v861 = vpop.f32.mrb[0].mxu0
      %v862 = vadd.f32 %v713, %v861
      %v863 = vpop.f32.mrb[0].mxu0
      %v864 = vpop.f32.mrb[0].mxu0
      %v865 = vadd.f32 %v713, %v864
      %v866 = vpop.f32.mrb[0].mxu0
      %867 = vmatprep.mubr.bf16.mxu0 0
      %868 = vmatmul.mubr.bf16.gmra.mrb[0].mxu0 %v444
      %v869 = vpop.f32.mrb[0].mxu0
      %v870 = vadd.f32 %v713, %v869
      %v871 = vpop.f32.mrb[0].mxu0
      %v872 = vpop.f32.mrb[0].mxu0
      %v873 = vadd.f32 %v713, %v872
      %v874 = vpop.f32.mrb[0].mxu0
      %875 = vmatprep.mubr.bf16.mxu0 0
      %876 = vmatmul.mubr.bf16.gmra.mrb[0].mxu0 %v445
      %v877 = vpop.f32.mrb[0].mxu0
      %v878 = vadd.f32 %v713, %v877
      %v879 = vpop.f32.mrb[0].mxu0
      %v880 = vpop.f32.mrb[0].mxu0
      %v881 = vadd.f32 %v713, %v880
      %v882 = vpop.f32.mrb[0].mxu0
      %883 = vmatprep.mubr.bf16.mxu0 0
      %884 = vmatmul.mubr.bf16.gmra.mrb[0].mxu0 %v446
      %v885 = vpop.f32.mrb[0].mxu0
      %v886 = vadd.f32 %v713, %v885
      %v887 = vpop.f32.mrb[0].mxu0
      %v888 = vpop.f32.mrb[0].mxu0
      %v889 = vadd.f32 %v713, %v888
      %v890 = vpop.f32.mrb[0].mxu0
      %891 = vmatprep.mubr.bf16.mxu0 0
      %892 = vmatmul.mubr.bf16.gmra.mrb[0].mxu0 %v447
      %v893 = vpop.f32.mrb[0].mxu0
      %v894 = vadd.f32 %v713, %v893
      %v895 = vpop.f32.mrb[0].mxu0
      %v896 = vpop.f32.mrb[0].mxu0
      %v897 = vadd.f32 %v713, %v896
      %v898 = vpop.f32.mrb[0].mxu0
      %899 = vmatprep.mubr.bf16.mxu0 0
      %900 = vmatmul.mubr.bf16.gmra.mrb[0].mxu0 %v448
      %v901 = vpop.f32.mrb[0].mxu0
      %v902 = vadd.f32 %v713, %v901
      %v903 = vpop.f32.mrb[0].mxu0
      %v904 = vpop.f32.mrb[0].mxu0
      %v905 = vadd.f32 %v713, %v904
      %v906 = vpop.f32.mrb[0].mxu0
      %907 = vmatprep.mubr.bf16.mxu0 0
      %908 = vmatmul.mubr.bf16.gmra.mrb[0].mxu0 %v449
      %v909 = vpop.f32.mrb[0].mxu0
      %v910 = vadd.f32 %v713, %v909
      %v911 = vpop.f32.mrb[0].mxu0
      %v912 = vpop.f32.mrb[0].mxu0
      %v913 = vadd.f32 %v713, %v912
      %v914 = vpop.f32.mrb[0].mxu0
      %915 = vmatprep.mubr.bf16.mxu0 0
      %916 = vmatmul.mubr.bf16.gmra.mrb[0].mxu0 %v450
      %v917 = vpop.f32.mrb[0].mxu0
      %v918 = vadd.f32 %v713, %v917
      %v919 = vpop.f32.mrb[0].mxu0
      %v920 = vpop.f32.mrb[0].mxu0
      %v921 = vadd.f32 %v713, %v920
      %v922 = vpop.f32.mrb[0].mxu0
      %923 = vdwg.mxu0
      %v924 = vpack.c.bf16 %v801, %v798
      %v925 = vpack.c.bf16 %v809, %v806
      %v926 = vpack.c.bf16 %v817, %v814
      %v927 = vpack.c.bf16 %v825, %v822
      %v928 = vpack.c.bf16 %v833, %v830
      %v929 = vpack.c.bf16 %v841, %v838
      %v930 = vpack.c.bf16 %v849, %v846
      %v931 = vpack.c.bf16 %v857, %v854
      %v932 = vpack.c.bf16 %v865, %v862
      %v933 = vpack.c.bf16 %v873, %v870
      %v934 = vpack.c.bf16 %v881, %v878
      %v935 = vpack.c.bf16 %v889, %v886
      %v936 = vpack.c.bf16 %v897, %v894
      %v937 = vpack.c.bf16 %v905, %v902
      %v938 = vpack.c.bf16 %v913, %v910
      %v939 = vpack.c.bf16 %v921, %v918
      %v940 = vld [vmem:[%s3] sm:$0xf]
      %v941 = vld [vmem:[%s3 + $0x4] sm:$0xf]
      %v942 = vld [vmem:[%s3 + $0x8] sm:$0xf]
      %v943 = vld [vmem:[%s3 + $0xc] sm:$0xf]
      %v944 = vld [vmem:[%s3 + $0x10] sm:$0xf]
      %v945 = vld [vmem:[%s3 + $0x14] sm:$0xf]
      %v946 = vld [vmem:[%s3 + $0x18] sm:$0xf]
      %v947 = vld [vmem:[%s3 + $0x1c] sm:$0xf]
      %v948 = vld [vmem:[%s3 + $0x20] sm:$0xf]
      %v949 = vld [vmem:[%s3 + $0x24] sm:$0xf]
      %v950 = vld [vmem:[%s3 + $0x28] sm:$0xf]
      %v951 = vld [vmem:[%s3 + $0x2c] sm:$0xf]
      %v952 = vld [vmem:[%s3 + $0x30] sm:$0xf]
      %v953 = vld [vmem:[%s3 + $0x34] sm:$0xf]
      %v954 = vld [vmem:[%s3 + $0x38] sm:$0xf]
      %v955 = vld [vmem:[%s3 + $0x3c] sm:$0xf]
      %v956 = vld [vmem:[%s6] sm:$0x1]
      %v958 = vlaneseq
      %v959 = vshrl.u32 %v958, 7
      %v960 = vsub.s32 0, %v959
      %v961 = vrot.slane %v956, %v960
      %v979 = vunpack.c.l.b16 %v940
      %v980 = vunpack.c.l.b16 %v941
      %v981 = vunpack.c.l.b16 %v942
      %v982 = vunpack.c.l.b16 %v943
      %v983 = vunpack.c.l.b16 %v944
      %v984 = vunpack.c.l.b16 %v945
      %v985 = vunpack.c.l.b16 %v946
      %v986 = vunpack.c.l.b16 %v947
      %v987 = vunpack.c.l.b16 %v948
      %v988 = vunpack.c.l.b16 %v949
      %v989 = vunpack.c.l.b16 %v950
      %v990 = vunpack.c.l.b16 %v951
      %v991 = vunpack.c.l.b16 %v952
      %v992 = vunpack.c.l.b16 %v953
      %v993 = vunpack.c.l.b16 %v954
      %v994 = vunpack.c.l.b16 %v955
      %v995 = vpack.c.b16 %v980, %v979
      %v996 = vpack.c.b16 %v982, %v981
      %v997 = vpack.c.b16 %v984, %v983
      %v998 = vpack.c.b16 %v986, %v985
      %v999 = vpack.c.b16 %v988, %v987
      %v1000 = vpack.c.b16 %v990, %v989
      %v1001 = vpack.c.b16 %v992, %v991
      %v1002 = vpack.c.b16 %v994, %v993
      %1011 = vmatprep.subr.bf16.mxu0 0
      %1012 = vmatpush1.bf16.msra.mxu0 %v995
      %1013 = vmatprep.subr.bf16.mxu0 0
      %1014 = vmatpush1.bf16.msra.mxu0 %v996
      %1015 = vmatprep.subr.bf16.mxu0 0
      %1016 = vmatpush1.bf16.msra.mxu0 %v997
      %1017 = vmatprep.subr.bf16.mxu0 0
      %1018 = vmatpush1.bf16.msra.mxu0 %v998
      %1019 = vmatprep.subr.bf16.mxu0 0
      %1020 = vmatpush1.bf16.msra.mxu0 %v999
      %1021 = vmatprep.subr.bf16.mxu0 0
      %1022 = vmatpush1.bf16.msra.mxu0 %v1000
      %1023 = vmatprep.subr.bf16.mxu0 0
      %1024 = vmatpush1.bf16.msra.mxu0 %v1001
      %1025 = vmatprep.subr.bf16.mxu0 0
      %1026 = vmatpush1.bf16.msra.mxu0 %v1002
      %1027 = vmatprep.subr.bf16.mxu0 0
      %1028 = vmatpush1.bf16.msra.mxu0 0
      %1029 = vmatprep.subr.bf16.mxu0 0
      %1030 = vmatpush1.bf16.msra.mxu0 0
      %1031 = vmatprep.subr.bf16.mxu0 0
      %1032 = vmatpush1.bf16.msra.mxu0 0
      %1033 = vmatprep.subr.bf16.mxu0 0
      %1034 = vmatpush1.bf16.msra.mxu0 0
      %1035 = vmatprep.subr.bf16.mxu0 0
      %1036 = vmatpush1.bf16.msra.mxu0 0
      %1037 = vmatprep.subr.bf16.mxu0 0
      %1038 = vmatpush1.bf16.msra.mxu0 0
      %1039 = vmatprep.subr.bf16.mxu0 0
      %1040 = vmatpush1.bf16.msra.mxu0 0
      %1041 = vmatprep.subr.bf16.mxu0 0
      %1042 = vmatpush1.bf16.msra.mxu0 0
      %1043 = vmatprep.mubr.bf16.mxu0 0
      %1044 = vmatmul.mubr.bf16.gmra.mrb[0].mxu0 %v435
      %v1045 = vpop.f32.mrb[0].mxu0
      %v1046 = vadd.f32 %v961, %v1045
      %v1047 = vpop.f32.mrb[0].mxu0
      %v1048 = vpop.f32.mrb[0].mxu0
      %v1049 = vadd.f32 %v961, %v1048
      %v1050 = vpop.f32.mrb[0].mxu0
      %1051 = vmatprep.mubr.bf16.mxu0 0
      %1052 = vmatmul.mubr.bf16.gmra.mrb[0].mxu0 %v436
      %v1053 = vpop.f32.mrb[0].mxu0
      %v1054 = vadd.f32 %v961, %v1053
      %v1055 = vpop.f32.mrb[0].mxu0
      %v1056 = vpop.f32.mrb[0].mxu0
      %v1057 = vadd.f32 %v961, %v1056
      %v1058 = vpop.f32.mrb[0].mxu0
      %1059 = vmatprep.mubr.bf16.mxu0 0
      %1060 = vmatmul.mubr.bf16.gmra.mrb[0].mxu0 %v437
      %v1061 = vpop.f32.mrb[0].mxu0
      %v1062 = vadd.f32 %v961, %v1061
      %v1063 = vpop.f32.mrb[0].mxu0
      %v1064 = vpop.f32.mrb[0].mxu0
      %v1065 = vadd.f32 %v961, %v1064
      %v1066 = vpop.f32.mrb[0].mxu0
      %1067 = vmatprep.mubr.bf16.mxu0 0
      %1068 = vmatmul.mubr.bf16.gmra.mrb[0].mxu0 %v438
      %v1069 = vpop.f32.mrb[0].mxu0
      %v1070 = vadd.f32 %v961, %v1069
      %v1071 = vpop.f32.mrb[0].mxu0
      %v1072 = vpop.f32.mrb[0].mxu0
      %v1073 = vadd.f32 %v961, %v1072
      %v1074 = vpop.f32.mrb[0].mxu0
      %1075 = vmatprep.mubr.bf16.mxu0 0
      %1076 = vmatmul.mubr.bf16.gmra.mrb[0].mxu0 %v439
      %v1077 = vpop.f32.mrb[0].mxu0
      %v1078 = vadd.f32 %v961, %v1077
      %v1079 = vpop.f32.mrb[0].mxu0
      %v1080 = vpop.f32.mrb[0].mxu0
      %v1081 = vadd.f32 %v961, %v1080
      %v1082 = vpop.f32.mrb[0].mxu0
      %1083 = vmatprep.mubr.bf16.mxu0 0
      %1084 = vmatmul.mubr.bf16.gmra.mrb[0].mxu0 %v440
      %v1085 = vpop.f32.mrb[0].mxu0
      %v1086 = vadd.f32 %v961, %v1085
      %v1087 = vpop.f32.mrb[0].mxu0
      %v1088 = vpop.f32.mrb[0].mxu0
      %v1089 = vadd.f32 %v961, %v1088
      %v1090 = vpop.f32.mrb[0].mxu0
      %1091 = vmatprep.mubr.bf16.mxu0 0
      %1092 = vmatmul.mubr.bf16.gmra.mrb[0].mxu0 %v441
      %v1093 = vpop.f32.mrb[0].mxu0
      %v1094 = vadd.f32 %v961, %v1093
      %v1095 = vpop.f32.mrb[0].mxu0
      %v1096 = vpop.f32.mrb[0].mxu0
      %v1097 = vadd.f32 %v961, %v1096
      %v1098 = vpop.f32.mrb[0].mxu0
      %1099 = vmatprep.mubr.bf16.mxu0 0
      %1100 = vmatmul.mubr.bf16.gmra.mrb[0].mxu0 %v442
      %v1101 = vpop.f32.mrb[0].mxu0
      %v1102 = vadd.f32 %v961, %v1101
      %v1103 = vpop.f32.mrb[0].mxu0
      %v1104 = vpop.f32.mrb[0].mxu0
      %v1105 = vadd.f32 %v961, %v1104
      %v1106 = vpop.f32.mrb[0].mxu0
      %1107 = vmatprep.mubr.bf16.mxu0 0
      %1108 = vmatmul.mubr.bf16.gmra.mrb[0].mxu0 %v443
      %v1109 = vpop.f32.mrb[0].mxu0
      %v1110 = vadd.f32 %v961, %v1109
      %v1111 = vpop.f32.mrb[0].mxu0
      %v1112 = vpop.f32.mrb[0].mxu0
      %v1113 = vadd.f32 %v961, %v1112
      %v1114 = vpop.f32.mrb[0].mxu0
      %1115 = vmatprep.mubr.bf16.mxu0 0
      %1116 = vmatmul.mubr.bf16.gmra.mrb[0].mxu0 %v444
      %v1117 = vpop.f32.mrb[0].mxu0
      %v1118 = vadd.f32 %v961, %v1117
      %v1119 = vpop.f32.mrb[0].mxu0
      %v1120 = vpop.f32.mrb[0].mxu0
      %v1121 = vadd.f32 %v961, %v1120
      %v1122 = vpop.f32.mrb[0].mxu0
      %1123 = vmatprep.mubr.bf16.mxu0 0
      %1124 = vmatmul.mubr.bf16.gmra.mrb[0].mxu0 %v445
      %v1125 = vpop.f32.mrb[0].mxu0
      %v1126 = vadd.f32 %v961, %v1125
      %v1127 = vpop.f32.mrb[0].mxu0
      %v1128 = vpop.f32.mrb[0].mxu0
      %v1129 = vadd.f32 %v961, %v1128
      %v1130 = vpop.f32.mrb[0].mxu0
      %1131 = vmatprep.mubr.bf16.mxu0 0
      %1132 = vmatmul.mubr.bf16.gmra.mrb[0].mxu0 %v446
      %v1133 = vpop.f32.mrb[0].mxu0
      %v1134 = vadd.f32 %v961, %v1133
      %v1135 = vpop.f32.mrb[0].mxu0
      %v1136 = vpop.f32.mrb[0].mxu0
      %v1137 = vadd.f32 %v961, %v1136
      %v1138 = vpop.f32.mrb[0].mxu0
      %1139 = vmatprep.mubr.bf16.mxu0 0
      %1140 = vmatmul.mubr.bf16.gmra.mrb[0].mxu0 %v447
      %v1141 = vpop.f32.mrb[0].mxu0
      %v1142 = vadd.f32 %v961, %v1141
      %v1143 = vpop.f32.mrb[0].mxu0
      %v1144 = vpop.f32.mrb[0].mxu0
      %v1145 = vadd.f32 %v961, %v1144
      %v1146 = vpop.f32.mrb[0].mxu0
      %1147 = vmatprep.mubr.bf16.mxu0 0
      %1148 = vmatmul.mubr.bf16.gmra.mrb[0].mxu0 %v448
      %v1149 = vpop.f32.mrb[0].mxu0
      %v1150 = vadd.f32 %v961, %v1149
      %v1151 = vpop.f32.mrb[0].mxu0
      %v1152 = vpop.f32.mrb[0].mxu0
      %v1153 = vadd.f32 %v961, %v1152
      %v1154 = vpop.f32.mrb[0].mxu0
      %1155 = vmatprep.mubr.bf16.mxu0 0
      %1156 = vmatmul.mubr.bf16.gmra.mrb[0].mxu0 %v449
      %v1157 = vpop.f32.mrb[0].mxu0
      %v1158 = vadd.f32 %v961, %v1157
      %v1159 = vpop.f32.mrb[0].mxu0
      %v1160 = vpop.f32.mrb[0].mxu0
      %v1161 = vadd.f32 %v961, %v1160
      %v1162 = vpop.f32.mrb[0].mxu0
      %1163 = vmatprep.mubr.bf16.mxu0 0
      %1164 = vmatmul.mubr.bf16.gmra.mrb[0].mxu0 %v450
      %v1165 = vpop.f32.mrb[0].mxu0
      %v1166 = vadd.f32 %v961, %v1165
      %v1167 = vpop.f32.mrb[0].mxu0
      %v1168 = vpop.f32.mrb[0].mxu0
      %v1169 = vadd.f32 %v961, %v1168
      %v1170 = vpop.f32.mrb[0].mxu0
      %1171 = vdwg.mxu0
      %v1172 = vpack.c.bf16 %v1049, %v1046
      %v1173 = vpack.c.bf16 %v1057, %v1054
      %v1174 = vpack.c.bf16 %v1065, %v1062
      %v1175 = vpack.c.bf16 %v1073, %v1070
      %v1176 = vpack.c.bf16 %v1081, %v1078
      %v1177 = vpack.c.bf16 %v1089, %v1086
      %v1178 = vpack.c.bf16 %v1097, %v1094
      %v1179 = vpack.c.bf16 %v1105, %v1102
      %v1180 = vpack.c.bf16 %v1113, %v1110
      %v1181 = vpack.c.bf16 %v1121, %v1118
      %v1182 = vpack.c.bf16 %v1129, %v1126
      %v1183 = vpack.c.bf16 %v1137, %v1134
      %v1184 = vpack.c.bf16 %v1145, %v1142
      %v1185 = vpack.c.bf16 %v1153, %v1150
      %v1186 = vpack.c.bf16 %v1161, %v1158
      %v1187 = vpack.c.bf16 %v1169, %v1166
      %1188 = vmatprep.subr.bf16.mxu0 0
      %1189 = vmatpush1.bf16.xpose.msra.mxu0 %v924
      %1190 = vmatprep.subr.bf16.mxu0 0
      %1191 = vmatpush1.bf16.xpose.msra.mxu0 0
      %1192 = vmatprep.subr.bf16.mxu0 0
      %1193 = vmatpush1.bf16.xpose.msra.mxu0 0
      %1194 = vmatprep.subr.bf16.mxu0 0
      %1195 = vmatpush1.bf16.xpose.msra.mxu0 0
      %1196 = vmatprep.subr.bf16.mxu0 0
      %1197 = vmatpush1.bf16.xpose.msra.mxu0 0
      %1198 = vmatprep.subr.bf16.mxu0 0
      %1199 = vmatpush1.bf16.xpose.msra.mxu0 0
      %1200 = vmatprep.subr.bf16.mxu0 0
      %1201 = vmatpush1.bf16.xpose.msra.mxu0 0
      %1202 = vmatprep.subr.bf16.mxu0 0
      %1203 = vmatpush1.bf16.xpose.msra.mxu0 0
      %1204 = vmatprep.subr.bf16.mxu0 0
      %1205 = vmatpush1.bf16.xpose.msra.mxu0 0
      %1206 = vmatprep.subr.bf16.mxu0 0
      %1207 = vmatpush1.bf16.xpose.msra.mxu0 0
      %1208 = vmatprep.subr.bf16.mxu0 0
      %1209 = vmatpush1.bf16.xpose.msra.mxu0 0
      %1210 = vmatprep.subr.bf16.mxu0 0
      %1211 = vmatpush1.bf16.xpose.msra.mxu0 0
      %1212 = vmatprep.subr.bf16.mxu0 0
      %1213 = vmatpush1.bf16.xpose.msra.mxu0 0
      %1214 = vmatprep.subr.bf16.mxu0 0
      %1215 = vmatpush1.bf16.xpose.msra.mxu0 0
      %1216 = vmatprep.subr.bf16.mxu0 0
      %1217 = vmatpush1.bf16.xpose.msra.mxu0 0
      %1218 = vmatprep.subr.bf16.mxu0 0
      %1219 = vmatpush1.bf16.xpose.msra.mxu0 0
      %1220 = vmatprep.mubr.bf16.mxu0 0
      %1221 = vmatmul.mubr.bf16.gmra.mrb[0].mxu0 %v676
      %v1222 = vpop.f32.mrb[0].mxu0
      %v1223 = vadd.f32 0.0, %v1222
      %v1224 = vpop.f32.mrb[0].mxu0
      %v1225 = vpop.f32.mrb[0].mxu0
      %v1226 = vadd.f32 0.0, %v1225
      %v1227 = vpop.f32.mrb[0].mxu0
      %1228 = vdwg.mxu0
      %1229 = vmatprep.subr.bf16.mxu0 0
      %1230 = vmatpush1.bf16.xpose.msra.mxu0 %v925
      %1231 = vmatprep.subr.bf16.mxu0 0
      %1232 = vmatpush1.bf16.xpose.msra.mxu0 0
      %1233 = vmatprep.subr.bf16.mxu0 0
      %1234 = vmatpush1.bf16.xpose.msra.mxu0 0
      %1235 = vmatprep.subr.bf16.mxu0 0
      %1236 = vmatpush1.bf16.xpose.msra.mxu0 0
      %1237 = vmatprep.subr.bf16.mxu0 0
      %1238 = vmatpush1.bf16.xpose.msra.mxu0 0
      %1239 = vmatprep.subr.bf16.mxu0 0
      %1240 = vmatpush1.bf16.xpose.msra.mxu0 0
      %1241 = vmatprep.subr.bf16.mxu0 0
      %1242 = vmatpush1.bf16.xpose.msra.mxu0 0
      %1243 = vmatprep.subr.bf16.mxu0 0
      %1244 = vmatpush1.bf16.xpose.msra.mxu0 0
      %1245 = vmatprep.subr.bf16.mxu0 0
      %1246 = vmatpush1.bf16.xpose.msra.mxu0 0
      %1247 = vmatprep.subr.bf16.mxu0 0
      %1248 = vmatpush1.bf16.xpose.msra.mxu0 0
      %1249 = vmatprep.subr.bf16.mxu0 0
      %1250 = vmatpush1.bf16.xpose.msra.mxu0 0
      %1251 = vmatprep.subr.bf16.mxu0 0
      %1252 = vmatpush1.bf16.xpose.msra.mxu0 0
      %1253 = vmatprep.subr.bf16.mxu0 0
      %1254 = vmatpush1.bf16.xpose.msra.mxu0 0
      %1255 = vmatprep.subr.bf16.mxu0 0
      %1256 = vmatpush1.bf16.xpose.msra.mxu0 0
      %1257 = vmatprep.subr.bf16.mxu0 0
      %1258 = vmatpush1.bf16.xpose.msra.mxu0 0
      %1259 = vmatprep.subr.bf16.mxu0 0
      %1260 = vmatpush1.bf16.xpose.msra.mxu0 0
      %1261 = vmatprep.mubr.bf16.mxu0 0
      %1262 = vmatmul.mubr.bf16.gmra.mrb[0].mxu0 %v677
      %v1263 = vpop.f32.mrb[0].mxu0
      %v1264 = vadd.f32 0.0, %v1263
      %v1265 = vpop.f32.mrb[0].mxu0
      %v1266 = vpop.f32.mrb[0].mxu0
      %v1267 = vadd.f32 0.0, %v1266
      %v1268 = vpop.f32.mrb[0].mxu0
      %1269 = vdwg.mxu0
      %1270 = vmatprep.subr.bf16.mxu0 0
      %1271 = vmatpush1.bf16.xpose.msra.mxu0 %v926
      %1272 = vmatprep.subr.bf16.mxu0 0
      %1273 = vmatpush1.bf16.xpose.msra.mxu0 0
      %1274 = vmatprep.subr.bf16.mxu0 0
      %1275 = vmatpush1.bf16.xpose.msra.mxu0 0
      %1276 = vmatprep.subr.bf16.mxu0 0
      %1277 = vmatpush1.bf16.xpose.msra.mxu0 0
      %1278 = vmatprep.subr.bf16.mxu0 0
      %1279 = vmatpush1.bf16.xpose.msra.mxu0 0
      %1280 = vmatprep.subr.bf16.mxu0 0
      %1281 = vmatpush1.bf16.xpose.msra.mxu0 0
      %1282 = vmatprep.subr.bf16.mxu0 0
      %1283 = vmatpush1.bf16.xpose.msra.mxu0 0
      %1284 = vmatprep.subr.bf16.mxu0 0
      %1285 = vmatpush1.bf16.xpose.msra.mxu0 0
      %1286 = vmatprep.subr.bf16.mxu0 0
      %1287 = vmatpush1.bf16.xpose.msra.mxu0 0
      %1288 = vmatprep.subr.bf16.mxu0 0
      %1289 = vmatpush1.bf16.xpose.msra.mxu0 0
      %1290 = vmatprep.subr.bf16.mxu0 0
      %1291 = vmatpush1.bf16.xpose.msra.mxu0 0
      %1292 = vmatprep.subr.bf16.mxu0 0
      %1293 = vmatpush1.bf16.xpose.msra.mxu0 0
      %1294 = vmatprep.subr.bf16.mxu0 0
      %1295 = vmatpush1.bf16.xpose.msra.mxu0 0
      %1296 = vmatprep.subr.bf16.mxu0 0
      %1297 = vmatpush1.bf16.xpose.msra.mxu0 0
      %1298 = vmatprep.subr.bf16.mxu0 0
      %1299 = vmatpush1.bf16.xpose.msra.mxu0 0
      %1300 = vmatprep.subr.bf16.mxu0 0
      %1301 = vmatpush1.bf16.xpose.msra.mxu0 0
      %1302 = vmatprep.mubr.bf16.mxu0 0
      %1303 = vmatmul.mubr.bf16.gmra.mrb[0].mxu0 %v678
      %v1304 = vpop.f32.mrb[0].mxu0
      %v1305 = vadd.f32 0.0, %v1304
      %v1306 = vpop.f32.mrb[0].mxu0
      %v1307 = vpop.f32.mrb[0].mxu0
      %v1308 = vadd.f32 0.0, %v1307
      %v1309 = vpop.f32.mrb[0].mxu0
      %1310 = vdwg.mxu0
      %1311 = vmatprep.subr.bf16.mxu0 0
      %1312 = vmatpush1.bf16.xpose.msra.mxu0 %v927
      %1313 = vmatprep.subr.bf16.mxu0 0
      %1314 = vmatpush1.bf16.xpose.msra.mxu0 0
      %1315 = vmatprep.subr.bf16.mxu0 0
      %1316 = vmatpush1.bf16.xpose.msra.mxu0 0
      %1317 = vmatprep.subr.bf16.mxu0 0
      %1318 = vmatpush1.bf16.xpose.msra.mxu0 0
      %1319 = vmatprep.subr.bf16.mxu0 0
      %1320 = vmatpush1.bf16.xpose.msra.mxu0 0
      %1321 = vmatprep.subr.bf16.mxu0 0
      %1322 = vmatpush1.bf16.xpose.msra.mxu0 0
      %1323 = vmatprep.subr.bf16.mxu0 0
      %1324 = vmatpush1.bf16.xpose.msra.mxu0 0
      %1325 = vmatprep.subr.bf16.mxu0 0
      %1326 = vmatpush1.bf16.xpose.msra.mxu0 0
      %1327 = vmatprep.subr.bf16.mxu0 0
      %1328 = vmatpush1.bf16.xpose.msra.mxu0 0
      %1329 = vmatprep.subr.bf16.mxu0 0
      %1330 = vmatpush1.bf16.xpose.msra.mxu0 0
      %1331 = vmatprep.subr.bf16.mxu0 0
      %1332 = vmatpush1.bf16.xpose.msra.mxu0 0
      %1333 = vmatprep.subr.bf16.mxu0 0
      %1334 = vmatpush1.bf16.xpose.msra.mxu0 0
      %1335 = vmatprep.subr.bf16.mxu0 0
      %1336 = vmatpush1.bf16.xpose.msra.mxu0 0
      %1337 = vmatprep.subr.bf16.mxu0 0
      %1338 = vmatpush1.bf16.xpose.msra.mxu0 0
      %1339 = vmatprep.subr.bf16.mxu0 0
      %1340 = vmatpush1.bf16.xpose.msra.mxu0 0
      %1341 = vmatprep.subr.bf16.mxu0 0
      %1342 = vmatpush1.bf16.xpose.msra.mxu0 0
      %1343 = vmatprep.mubr.bf16.mxu0 0
      %1344 = vmatmul.mubr.bf16.gmra.mrb[0].mxu0 %v679
      %v1345 = vpop.f32.mrb[0].mxu0
      %v1346 = vadd.f32 0.0, %v1345
      %v1347 = vpop.f32.mrb[0].mxu0
      %v1348 = vpop.f32.mrb[0].mxu0
      %v1349 = vadd.f32 0.0, %v1348
      %v1350 = vpop.f32.mrb[0].mxu0
      %1351 = vdwg.mxu0
      %1352 = vmatprep.subr.bf16.mxu0 0
      %1353 = vmatpush1.bf16.xpose.msra.mxu0 %v928
      %1354 = vmatprep.subr.bf16.mxu0 0
      %1355 = vmatpush1.bf16.xpose.msra.mxu0 0
      %1356 = vmatprep.subr.bf16.mxu0 0
      %1357 = vmatpush1.bf16.xpose.msra.mxu0 0
      %1358 = vmatprep.subr.bf16.mxu0 0
      %1359 = vmatpush1.bf16.xpose.msra.mxu0 0
      %1360 = vmatprep.subr.bf16.mxu0 0
      %1361 = vmatpush1.bf16.xpose.msra.mxu0 0
      %1362 = vmatprep.subr.bf16.mxu0 0
      %1363 = vmatpush1.bf16.xpose.msra.mxu0 0
      %1364 = vmatprep.subr.bf16.mxu0 0
      %1365 = vmatpush1.bf16.xpose.msra.mxu0 0
      %1366 = vmatprep.subr.bf16.mxu0 0
      %1367 = vmatpush1.bf16.xpose.msra.mxu0 0
      %1368 = vmatprep.subr.bf16.mxu0 0
      %1369 = vmatpush1.bf16.xpose.msra.mxu0 0
      %1370 = vmatprep.subr.bf16.mxu0 0
      %1371 = vmatpush1.bf16.xpose.msra.mxu0 0
      %1372 = vmatprep.subr.bf16.mxu0 0
      %1373 = vmatpush1.bf16.xpose.msra.mxu0 0
      %1374 = vmatprep.subr.bf16.mxu0 0
      %1375 = vmatpush1.bf16.xpose.msra.mxu0 0
      %1376 = vmatprep.subr.bf16.mxu0 0
      %1377 = vmatpush1.bf16.xpose.msra.mxu0 0
      %1378 = vmatprep.subr.bf16.mxu0 0
      %1379 = vmatpush1.bf16.xpose.msra.mxu0 0
      %1380 = vmatprep.subr.bf16.mxu0 0
      %1381 = vmatpush1.bf16.xpose.msra.mxu0 0
      %1382 = vmatprep.subr.bf16.mxu0 0
      %1383 = vmatpush1.bf16.xpose.msra.mxu0 0
      %1384 = vmatprep.mubr.bf16.mxu0 0
      %1385 = vmatmul.mubr.bf16.gmra.mrb[0].mxu0 %v680
      %v1386 = vpop.f32.mrb[0].mxu0
      %v1387 = vadd.f32 0.0, %v1386
      %v1388 = vpop.f32.mrb[0].mxu0
      %v1389 = vpop.f32.mrb[0].mxu0
      %v1390 = vadd.f32 0.0, %v1389
      %v1391 = vpop.f32.mrb[0].mxu0
      %1392 = vdwg.mxu0
      %1393 = vmatprep.subr.bf16.mxu0 0
      %1394 = vmatpush1.bf16.xpose.msra.mxu0 %v929
      %1395 = vmatprep.subr.bf16.mxu0 0
      %1396 = vmatpush1.bf16.xpose.msra.mxu0 0
      %1397 = vmatprep.subr.bf16.mxu0 0
      %1398 = vmatpush1.bf16.xpose.msra.mxu0 0
      %1399 = vmatprep.subr.bf16.mxu0 0
      %1400 = vmatpush1.bf16.xpose.msra.mxu0 0
      %1401 = vmatprep.subr.bf16.mxu0 0
      %1402 = vmatpush1.bf16.xpose.msra.mxu0 0
      %1403 = vmatprep.subr.bf16.mxu0 0
      %1404 = vmatpush1.bf16.xpose.msra.mxu0 0
      %1405 = vmatprep.subr.bf16.mxu0 0
      %1406 = vmatpush1.bf16.xpose.msra.mxu0 0
      %1407 = vmatprep.subr.bf16.mxu0 0
      %1408 = vmatpush1.bf16.xpose.msra.mxu0 0
      %1409 = vmatprep.subr.bf16.mxu0 0
      %1410 = vmatpush1.bf16.xpose.msra.mxu0 0
      %1411 = vmatprep.subr.bf16.mxu0 0
      %1412 = vmatpush1.bf16.xpose.msra.mxu0 0
      %1413 = vmatprep.subr.bf16.mxu0 0
      %1414 = vmatpush1.bf16.xpose.msra.mxu0 0
      %1415 = vmatprep.subr.bf16.mxu0 0
      %1416 = vmatpush1.bf16.xpose.msra.mxu0 0
      %1417 = vmatprep.subr.bf16.mxu0 0
      %1418 = vmatpush1.bf16.xpose.msra.mxu0 0
      %1419 = vmatprep.subr.bf16.mxu0 0
      %1420 = vmatpush1.bf16.xpose.msra.mxu0 0
      %1421 = vmatprep.subr.bf16.mxu0 0
      %1422 = vmatpush1.bf16.xpose.msra.mxu0 0
      %1423 = vmatprep.subr.bf16.mxu0 0
      %1424 = vmatpush1.bf16.xpose.msra.mxu0 0
      %1425 = vmatprep.mubr.bf16.mxu0 0
      %1426 = vmatmul.mubr.bf16.gmra.mrb[0].mxu0 %v681
      %v1427 = vpop.f32.mrb[0].mxu0
      %v1428 = vadd.f32 0.0, %v1427
      %v1429 = vpop.f32.mrb[0].mxu0
      %v1430 = vpop.f32.mrb[0].mxu0
      %v1431 = vadd.f32 0.0, %v1430
      %v1432 = vpop.f32.mrb[0].mxu0
      %1433 = vdwg.mxu0
      %1434 = vmatprep.subr.bf16.mxu0 0
      %1435 = vmatpush1.bf16.xpose.msra.mxu0 %v930
      %1436 = vmatprep.subr.bf16.mxu0 0
      %1437 = vmatpush1.bf16.xpose.msra.mxu0 0
      %1438 = vmatprep.subr.bf16.mxu0 0
      %1439 = vmatpush1.bf16.xpose.msra.mxu0 0
      %1440 = vmatprep.subr.bf16.mxu0 0
      %1441 = vmatpush1.bf16.xpose.msra.mxu0 0
      %1442 = vmatprep.subr.bf16.mxu0 0
      %1443 = vmatpush1.bf16.xpose.msra.mxu0 0
      %1444 = vmatprep.subr.bf16.mxu0 0
      %1445 = vmatpush1.bf16.xpose.msra.mxu0 0
      %1446 = vmatprep.subr.bf16.mxu0 0
      %1447 = vmatpush1.bf16.xpose.msra.mxu0 0
      %1448 = vmatprep.subr.bf16.mxu0 0
      %1449 = vmatpush1.bf16.xpose.msra.mxu0 0
      %1450 = vmatprep.subr.bf16.mxu0 0
      %1451 = vmatpush1.bf16.xpose.msra.mxu0 0
      %1452 = vmatprep.subr.bf16.mxu0 0
      %1453 = vmatpush1.bf16.xpose.msra.mxu0 0
      %1454 = vmatprep.subr.bf16.mxu0 0
      %1455 = vmatpush1.bf16.xpose.msra.mxu0 0
      %1456 = vmatprep.subr.bf16.mxu0 0
      %1457 = vmatpush1.bf16.xpose.msra.mxu0 0
      %1458 = vmatprep.subr.bf16.mxu0 0
      %1459 = vmatpush1.bf16.xpose.msra.mxu0 0
      %1460 = vmatprep.subr.bf16.mxu0 0
      %1461 = vmatpush1.bf16.xpose.msra.mxu0 0
      %1462 = vmatprep.subr.bf16.mxu0 0
      %1463 = vmatpush1.bf16.xpose.msra.mxu0 0
      %1464 = vmatprep.subr.bf16.mxu0 0
      %1465 = vmatpush1.bf16.xpose.msra.mxu0 0
      %1466 = vmatprep.mubr.bf16.mxu0 0
      %1467 = vmatmul.mubr.bf16.gmra.mrb[0].mxu0 %v682
      %v1468 = vpop.f32.mrb[0].mxu0
      %v1469 = vadd.f32 0.0, %v1468
      %v1470 = vpop.f32.mrb[0].mxu0
      %v1471 = vpop.f32.mrb[0].mxu0
      %v1472 = vadd.f32 0.0, %v1471
      %v1473 = vpop.f32.mrb[0].mxu0
      %1474 = vdwg.mxu0
      %1475 = vmatprep.subr.bf16.mxu0 0
      %1476 = vmatpush1.bf16.xpose.msra.mxu0 %v931
      %1477 = vmatprep.subr.bf16.mxu0 0
      %1478 = vmatpush1.bf16.xpose.msra.mxu0 0
      %1479 = vmatprep.subr.bf16.mxu0 0
      %1480 = vmatpush1.bf16.xpose.msra.mxu0 0
      %1481 = vmatprep.subr.bf16.mxu0 0
      %1482 = vmatpush1.bf16.xpose.msra.mxu0 0
      %1483 = vmatprep.subr.bf16.mxu0 0
      %1484 = vmatpush1.bf16.xpose.msra.mxu0 0
      %1485 = vmatprep.subr.bf16.mxu0 0
      %1486 = vmatpush1.bf16.xpose.msra.mxu0 0
      %1487 = vmatprep.subr.bf16.mxu0 0
      %1488 = vmatpush1.bf16.xpose.msra.mxu0 0
      %1489 = vmatprep.subr.bf16.mxu0 0
      %1490 = vmatpush1.bf16.xpose.msra.mxu0 0
      %1491 = vmatprep.subr.bf16.mxu0 0
      %1492 = vmatpush1.bf16.xpose.msra.mxu0 0
      %1493 = vmatprep.subr.bf16.mxu0 0
      %1494 = vmatpush1.bf16.xpose.msra.mxu0 0
      %1495 = vmatprep.subr.bf16.mxu0 0
      %1496 = vmatpush1.bf16.xpose.msra.mxu0 0
      %1497 = vmatprep.subr.bf16.mxu0 0
      %1498 = vmatpush1.bf16.xpose.msra.mxu0 0
      %1499 = vmatprep.subr.bf16.mxu0 0
      %1500 = vmatpush1.bf16.xpose.msra.mxu0 0
      %1501 = vmatprep.subr.bf16.mxu0 0
      %1502 = vmatpush1.bf16.xpose.msra.mxu0 0
      %1503 = vmatprep.subr.bf16.mxu0 0
      %1504 = vmatpush1.bf16.xpose.msra.mxu0 0
      %1505 = vmatprep.subr.bf16.mxu0 0
      %1506 = vmatpush1.bf16.xpose.msra.mxu0 0
      %1507 = vmatprep.mubr.bf16.mxu0 0
      %1508 = vmatmul.mubr.bf16.gmra.mrb[0].mxu0 %v683
      %v1509 = vpop.f32.mrb[0].mxu0
      %v1510 = vadd.f32 0.0, %v1509
      %v1511 = vpop.f32.mrb[0].mxu0
      %v1512 = vpop.f32.mrb[0].mxu0
      %v1513 = vadd.f32 0.0, %v1512
      %v1514 = vpop.f32.mrb[0].mxu0
      %1515 = vdwg.mxu0
      %1516 = vmatprep.subr.bf16.mxu0 0
      %1517 = vmatpush1.bf16.xpose.msra.mxu0 %v932
      %1518 = vmatprep.subr.bf16.mxu0 0
      %1519 = vmatpush1.bf16.xpose.msra.mxu0 0
      %1520 = vmatprep.subr.bf16.mxu0 0
      %1521 = vmatpush1.bf16.xpose.msra.mxu0 0
      %1522 = vmatprep.subr.bf16.mxu0 0
      %1523 = vmatpush1.bf16.xpose.msra.mxu0 0
      %1524 = vmatprep.subr.bf16.mxu0 0
      %1525 = vmatpush1.bf16.xpose.msra.mxu0 0
      %1526 = vmatprep.subr.bf16.mxu0 0
      %1527 = vmatpush1.bf16.xpose.msra.mxu0 0
      %1528 = vmatprep.subr.bf16.mxu0 0
      %1529 = vmatpush1.bf16.xpose.msra.mxu0 0
      %1530 = vmatprep.subr.bf16.mxu0 0
      %1531 = vmatpush1.bf16.xpose.msra.mxu0 0
      %1532 = vmatprep.subr.bf16.mxu0 0
      %1533 = vmatpush1.bf16.xpose.msra.mxu0 0
      %1534 = vmatprep.subr.bf16.mxu0 0
      %1535 = vmatpush1.bf16.xpose.msra.mxu0 0
      %1536 = vmatprep.subr.bf16.mxu0 0
      %1537 = vmatpush1.bf16.xpose.msra.mxu0 0
      %1538 = vmatprep.subr.bf16.mxu0 0
      %1539 = vmatpush1.bf16.xpose.msra.mxu0 0
      %1540 = vmatprep.subr.bf16.mxu0 0
      %1541 = vmatpush1.bf16.xpose.msra.mxu0 0
      %1542 = vmatprep.subr.bf16.mxu0 0
      %1543 = vmatpush1.bf16.xpose.msra.mxu0 0
      %1544 = vmatprep.subr.bf16.mxu0 0
      %1545 = vmatpush1.bf16.xpose.msra.mxu0 0
      %1546 = vmatprep.subr.bf16.mxu0 0
      %1547 = vmatpush1.bf16.xpose.msra.mxu0 0
      %1548 = vmatprep.mubr.bf16.mxu0 0
      %1549 = vmatmul.mubr.bf16.gmra.mrb[0].mxu0 %v684
      %v1550 = vpop.f32.mrb[0].mxu0
      %v1551 = vadd.f32 0.0, %v1550
      %v1552 = vpop.f32.mrb[0].mxu0
      %v1553 = vpop.f32.mrb[0].mxu0
      %v1554 = vadd.f32 0.0, %v1553
      %v1555 = vpop.f32.mrb[0].mxu0
      %1556 = vdwg.mxu0
      %1557 = vmatprep.subr.bf16.mxu0 0
      %1558 = vmatpush1.bf16.xpose.msra.mxu0 %v933
      %1559 = vmatprep.subr.bf16.mxu0 0
      %1560 = vmatpush1.bf16.xpose.msra.mxu0 0
      %1561 = vmatprep.subr.bf16.mxu0 0
      %1562 = vmatpush1.bf16.xpose.msra.mxu0 0
      %1563 = vmatprep.subr.bf16.mxu0 0
      %1564 = vmatpush1.bf16.xpose.msra.mxu0 0
      %1565 = vmatprep.subr.bf16.mxu0 0
      %1566 = vmatpush1.bf16.xpose.msra.mxu0 0
      %1567 = vmatprep.subr.bf16.mxu0 0
      %1568 = vmatpush1.bf16.xpose.msra.mxu0 0
      %1569 = vmatprep.subr.bf16.mxu0 0
      %1570 = vmatpush1.bf16.xpose.msra.mxu0 0
      %1571 = vmatprep.subr.bf16.mxu0 0
      %1572 = vmatpush1.bf16.xpose.msra.mxu0 0
      %1573 = vmatprep.subr.bf16.mxu0 0
      %1574 = vmatpush1.bf16.xpose.msra.mxu0 0
      %1575 = vmatprep.subr.bf16.mxu0 0
      %1576 = vmatpush1.bf16.xpose.msra.mxu0 0
      %1577 = vmatprep.subr.bf16.mxu0 0
      %1578 = vmatpush1.bf16.xpose.msra.mxu0 0
      %1579 = vmatprep.subr.bf16.mxu0 0
      %1580 = vmatpush1.bf16.xpose.msra.mxu0 0
      %1581 = vmatprep.subr.bf16.mxu0 0
      %1582 = vmatpush1.bf16.xpose.msra.mxu0 0
      %1583 = vmatprep.subr.bf16.mxu0 0
      %1584 = vmatpush1.bf16.xpose.msra.mxu0 0
      %1585 = vmatprep.subr.bf16.mxu0 0
      %1586 = vmatpush1.bf16.xpose.msra.mxu0 0
      %1587 = vmatprep.subr.bf16.mxu0 0
      %1588 = vmatpush1.bf16.xpose.msra.mxu0 0
      %1589 = vmatprep.mubr.bf16.mxu0 0
      %1590 = vmatmul.mubr.bf16.gmra.mrb[0].mxu0 %v685
      %v1591 = vpop.f32.mrb[0].mxu0
      %v1592 = vadd.f32 0.0, %v1591
      %v1593 = vpop.f32.mrb[0].mxu0
      %v1594 = vpop.f32.mrb[0].mxu0
      %v1595 = vadd.f32 0.0, %v1594
      %v1596 = vpop.f32.mrb[0].mxu0
      %1597 = vdwg.mxu0
      %1598 = vmatprep.subr.bf16.mxu0 0
      %1599 = vmatpush1.bf16.xpose.msra.mxu0 %v934
      %1600 = vmatprep.subr.bf16.mxu0 0
      %1601 = vmatpush1.bf16.xpose.msra.mxu0 0
      %1602 = vmatprep.subr.bf16.mxu0 0
      %1603 = vmatpush1.bf16.xpose.msra.mxu0 0
      %1604 = vmatprep.subr.bf16.mxu0 0
      %1605 = vmatpush1.bf16.xpose.msra.mxu0 0
      %1606 = vmatprep.subr.bf16.mxu0 0
      %1607 = vmatpush1.bf16.xpose.msra.mxu0 0
      %1608 = vmatprep.subr.bf16.mxu0 0
      %1609 = vmatpush1.bf16.xpose.msra.mxu0 0
      %1610 = vmatprep.subr.bf16.mxu0 0
      %1611 = vmatpush1.bf16.xpose.msra.mxu0 0
      %1612 = vmatprep.subr.bf16.mxu0 0
      %1613 = vmatpush1.bf16.xpose.msra.mxu0 0
      %1614 = vmatprep.subr.bf16.mxu0 0
      %1615 = vmatpush1.bf16.xpose.msra.mxu0 0
      %1616 = vmatprep.subr.bf16.mxu0 0
      %1617 = vmatpush1.bf16.xpose.msra.mxu0 0
      %1618 = vmatprep.subr.bf16.mxu0 0
      %1619 = vmatpush1.bf16.xpose.msra.mxu0 0
      %1620 = vmatprep.subr.bf16.mxu0 0
      %1621 = vmatpush1.bf16.xpose.msra.mxu0 0
      %1622 = vmatprep.subr.bf16.mxu0 0
      %1623 = vmatpush1.bf16.xpose.msra.mxu0 0
      %1624 = vmatprep.subr.bf16.mxu0 0
      %1625 = vmatpush1.bf16.xpose.msra.mxu0 0
      %1626 = vmatprep.subr.bf16.mxu0 0
      %1627 = vmatpush1.bf16.xpose.msra.mxu0 0
      %1628 = vmatprep.subr.bf16.mxu0 0
      %1629 = vmatpush1.bf16.xpose.msra.mxu0 0
      %1630 = vmatprep.mubr.bf16.mxu0 0
      %1631 = vmatmul.mubr.bf16.gmra.mrb[0].mxu0 %v686
      %v1632 = vpop.f32.mrb[0].mxu0
      %v1633 = vadd.f32 0.0, %v1632
      %v1634 = vpop.f32.mrb[0].mxu0
      %v1635 = vpop.f32.mrb[0].mxu0
      %v1636 = vadd.f32 0.0, %v1635
      %v1637 = vpop.f32.mrb[0].mxu0
      %1638 = vdwg.mxu0
      %1639 = vmatprep.subr.bf16.mxu0 0
      %1640 = vmatpush1.bf16.xpose.msra.mxu0 %v935
      %1641 = vmatprep.subr.bf16.mxu0 0
      %1642 = vmatpush1.bf16.xpose.msra.mxu0 0
      %1643 = vmatprep.subr.bf16.mxu0 0
      %1644 = vmatpush1.bf16.xpose.msra.mxu0 0
      %1645 = vmatprep.subr.bf16.mxu0 0
      %1646 = vmatpush1.bf16.xpose.msra.mxu0 0
      %1647 = vmatprep.subr.bf16.mxu0 0
      %1648 = vmatpush1.bf16.xpose.msra.mxu0 0
      %1649 = vmatprep.subr.bf16.mxu0 0
      %1650 = vmatpush1.bf16.xpose.msra.mxu0 0
      %1651 = vmatprep.subr.bf16.mxu0 0
      %1652 = vmatpush1.bf16.xpose.msra.mxu0 0
      %1653 = vmatprep.subr.bf16.mxu0 0
      %1654 = vmatpush1.bf16.xpose.msra.mxu0 0
      %1655 = vmatprep.subr.bf16.mxu0 0
      %1656 = vmatpush1.bf16.xpose.msra.mxu0 0
      %1657 = vmatprep.subr.bf16.mxu0 0
      %1658 = vmatpush1.bf16.xpose.msra.mxu0 0
      %1659 = vmatprep.subr.bf16.mxu0 0
      %1660 = vmatpush1.bf16.xpose.msra.mxu0 0
      %1661 = vmatprep.subr.bf16.mxu0 0
      %1662 = vmatpush1.bf16.xpose.msra.mxu0 0
      %1663 = vmatprep.subr.bf16.mxu0 0
      %1664 = vmatpush1.bf16.xpose.msra.mxu0 0
      %1665 = vmatprep.subr.bf16.mxu0 0
      %1666 = vmatpush1.bf16.xpose.msra.mxu0 0
      %1667 = vmatprep.subr.bf16.mxu0 0
      %1668 = vmatpush1.bf16.xpose.msra.mxu0 0
      %1669 = vmatprep.subr.bf16.mxu0 0
      %1670 = vmatpush1.bf16.xpose.msra.mxu0 0
      %1671 = vmatprep.mubr.bf16.mxu0 0
      %1672 = vmatmul.mubr.bf16.gmra.mrb[0].mxu0 %v687
      %v1673 = vpop.f32.mrb[0].mxu0
      %v1674 = vadd.f32 0.0, %v1673
      %v1675 = vpop.f32.mrb[0].mxu0
      %v1676 = vpop.f32.mrb[0].mxu0
      %v1677 = vadd.f32 0.0, %v1676
      %v1678 = vpop.f32.mrb[0].mxu0
      %1679 = vdwg.mxu0
      %1680 = vmatprep.subr.bf16.mxu0 0
      %1681 = vmatpush1.bf16.xpose.msra.mxu0 %v936
      %1682 = vmatprep.subr.bf16.mxu0 0
      %1683 = vmatpush1.bf16.xpose.msra.mxu0 0
      %1684 = vmatprep.subr.bf16.mxu0 0
      %1685 = vmatpush1.bf16.xpose.msra.mxu0 0
      %1686 = vmatprep.subr.bf16.mxu0 0
      %1687 = vmatpush1.bf16.xpose.msra.mxu0 0
      %1688 = vmatprep.subr.bf16.mxu0 0
      %1689 = vmatpush1.bf16.xpose.msra.mxu0 0
      %1690 = vmatprep.subr.bf16.mxu0 0
      %1691 = vmatpush1.bf16.xpose.msra.mxu0 0
      %1692 = vmatprep.subr.bf16.mxu0 0
      %1693 = vmatpush1.bf16.xpose.msra.mxu0 0
      %1694 = vmatprep.subr.bf16.mxu0 0
      %1695 = vmatpush1.bf16.xpose.msra.mxu0 0
      %1696 = vmatprep.subr.bf16.mxu0 0
      %1697 = vmatpush1.bf16.xpose.msra.mxu0 0
      %1698 = vmatprep.subr.bf16.mxu0 0
      %1699 = vmatpush1.bf16.xpose.msra.mxu0 0
      %1700 = vmatprep.subr.bf16.mxu0 0
      %1701 = vmatpush1.bf16.xpose.msra.mxu0 0
      %1702 = vmatprep.subr.bf16.mxu0 0
      %1703 = vmatpush1.bf16.xpose.msra.mxu0 0
      %1704 = vmatprep.subr.bf16.mxu0 0
      %1705 = vmatpush1.bf16.xpose.msra.mxu0 0
      %1706 = vmatprep.subr.bf16.mxu0 0
      %1707 = vmatpush1.bf16.xpose.msra.mxu0 0
      %1708 = vmatprep.subr.bf16.mxu0 0
      %1709 = vmatpush1.bf16.xpose.msra.mxu0 0
      %1710 = vmatprep.subr.bf16.mxu0 0
      %1711 = vmatpush1.bf16.xpose.msra.mxu0 0
      %1712 = vmatprep.mubr.bf16.mxu0 0
      %1713 = vmatmul.mubr.bf16.gmra.mrb[0].mxu0 %v688
      %v1714 = vpop.f32.mrb[0].mxu0
      %v1715 = vadd.f32 0.0, %v1714
      %v1716 = vpop.f32.mrb[0].mxu0
      %v1717 = vpop.f32.mrb[0].mxu0
      %v1718 = vadd.f32 0.0, %v1717
      %v1719 = vpop.f32.mrb[0].mxu0
      %1720 = vdwg.mxu0
      %1721 = vmatprep.subr.bf16.mxu0 0
      %1722 = vmatpush1.bf16.xpose.msra.mxu0 %v937
      %1723 = vmatprep.subr.bf16.mxu0 0
      %1724 = vmatpush1.bf16.xpose.msra.mxu0 0
      %1725 = vmatprep.subr.bf16.mxu0 0
      %1726 = vmatpush1.bf16.xpose.msra.mxu0 0
      %1727 = vmatprep.subr.bf16.mxu0 0
      %1728 = vmatpush1.bf16.xpose.msra.mxu0 0
      %1729 = vmatprep.subr.bf16.mxu0 0
      %1730 = vmatpush1.bf16.xpose.msra.mxu0 0
      %1731 = vmatprep.subr.bf16.mxu0 0
      %1732 = vmatpush1.bf16.xpose.msra.mxu0 0
      %1733 = vmatprep.subr.bf16.mxu0 0
      %1734 = vmatpush1.bf16.xpose.msra.mxu0 0
      %1735 = vmatprep.subr.bf16.mxu0 0
      %1736 = vmatpush1.bf16.xpose.msra.mxu0 0
      %1737 = vmatprep.subr.bf16.mxu0 0
      %1738 = vmatpush1.bf16.xpose.msra.mxu0 0
      %1739 = vmatprep.subr.bf16.mxu0 0
      %1740 = vmatpush1.bf16.xpose.msra.mxu0 0
      %1741 = vmatprep.subr.bf16.mxu0 0
      %1742 = vmatpush1.bf16.xpose.msra.mxu0 0
      %1743 = vmatprep.subr.bf16.mxu0 0
      %1744 = vmatpush1.bf16.xpose.msra.mxu0 0
      %1745 = vmatprep.subr.bf16.mxu0 0
      %1746 = vmatpush1.bf16.xpose.msra.mxu0 0
      %1747 = vmatprep.subr.bf16.mxu0 0
      %1748 = vmatpush1.bf16.xpose.msra.mxu0 0
      %1749 = vmatprep.subr.bf16.mxu0 0
      %1750 = vmatpush1.bf16.xpose.msra.mxu0 0
      %1751 = vmatprep.subr.bf16.mxu0 0
      %1752 = vmatpush1.bf16.xpose.msra.mxu0 0
      %1753 = vmatprep.mubr.bf16.mxu0 0
      %1754 = vmatmul.mubr.bf16.gmra.mrb[0].mxu0 %v689
      %v1755 = vpop.f32.mrb[0].mxu0
      %v1756 = vadd.f32 0.0, %v1755
      %v1757 = vpop.f32.mrb[0].mxu0
      %v1758 = vpop.f32.mrb[0].mxu0
      %v1759 = vadd.f32 0.0, %v1758
      %v1760 = vpop.f32.mrb[0].mxu0
      %1761 = vdwg.mxu0
      %1762 = vmatprep.subr.bf16.mxu0 0
      %1763 = vmatpush1.bf16.xpose.msra.mxu0 %v938
      %1764 = vmatprep.subr.bf16.mxu0 0
      %1765 = vmatpush1.bf16.xpose.msra.mxu0 0
      %1766 = vmatprep.subr.bf16.mxu0 0
      %1767 = vmatpush1.bf16.xpose.msra.mxu0 0
      %1768 = vmatprep.subr.bf16.mxu0 0
      %1769 = vmatpush1.bf16.xpose.msra.mxu0 0
      %1770 = vmatprep.subr.bf16.mxu0 0
      %1771 = vmatpush1.bf16.xpose.msra.mxu0 0
      %1772 = vmatprep.subr.bf16.mxu0 0
      %1773 = vmatpush1.bf16.xpose.msra.mxu0 0
      %1774 = vmatprep.subr.bf16.mxu0 0
      %1775 = vmatpush1.bf16.xpose.msra.mxu0 0
      %1776 = vmatprep.subr.bf16.mxu0 0
      %1777 = vmatpush1.bf16.xpose.msra.mxu0 0
      %1778 = vmatprep.subr.bf16.mxu0 0
      %1779 = vmatpush1.bf16.xpose.msra.mxu0 0
      %1780 = vmatprep.subr.bf16.mxu0 0
      %1781 = vmatpush1.bf16.xpose.msra.mxu0 0
      %1782 = vmatprep.subr.bf16.mxu0 0
      %1783 = vmatpush1.bf16.xpose.msra.mxu0 0
      %1784 = vmatprep.subr.bf16.mxu0 0
      %1785 = vmatpush1.bf16.xpose.msra.mxu0 0
      %1786 = vmatprep.subr.bf16.mxu0 0
      %1787 = vmatpush1.bf16.xpose.msra.mxu0 0
      %1788 = vmatprep.subr.bf16.mxu0 0
      %1789 = vmatpush1.bf16.xpose.msra.mxu0 0
      %1790 = vmatprep.subr.bf16.mxu0 0
      %1791 = vmatpush1.bf16.xpose.msra.mxu0 0
      %1792 = vmatprep.subr.bf16.mxu0 0
      %1793 = vmatpush1.bf16.xpose.msra.mxu0 0
      %1794 = vmatprep.mubr.bf16.mxu0 0
      %1795 = vmatmul.mubr.bf16.gmra.mrb[0].mxu0 %v690
      %v1796 = vpop.f32.mrb[0].mxu0
      %v1797 = vadd.f32 0.0, %v1796
      %v1798 = vpop.f32.mrb[0].mxu0
      %v1799 = vpop.f32.mrb[0].mxu0
      %v1800 = vadd.f32 0.0, %v1799
      %v1801 = vpop.f32.mrb[0].mxu0
      %1802 = vdwg.mxu0
      %1803 = vmatprep.subr.bf16.mxu0 0
      %1804 = vmatpush1.bf16.xpose.msra.mxu0 %v939
      %1805 = vmatprep.subr.bf16.mxu0 0
      %1806 = vmatpush1.bf16.xpose.msra.mxu0 0
      %1807 = vmatprep.subr.bf16.mxu0 0
      %1808 = vmatpush1.bf16.xpose.msra.mxu0 0
      %1809 = vmatprep.subr.bf16.mxu0 0
      %1810 = vmatpush1.bf16.xpose.msra.mxu0 0
      %1811 = vmatprep.subr.bf16.mxu0 0
      %1812 = vmatpush1.bf16.xpose.msra.mxu0 0
      %1813 = vmatprep.subr.bf16.mxu0 0
      %1814 = vmatpush1.bf16.xpose.msra.mxu0 0
      %1815 = vmatprep.subr.bf16.mxu0 0
      %1816 = vmatpush1.bf16.xpose.msra.mxu0 0
      %1817 = vmatprep.subr.bf16.mxu0 0
      %1818 = vmatpush1.bf16.xpose.msra.mxu0 0
      %1819 = vmatprep.subr.bf16.mxu0 0
      %1820 = vmatpush1.bf16.xpose.msra.mxu0 0
      %1821 = vmatprep.subr.bf16.mxu0 0
      %1822 = vmatpush1.bf16.xpose.msra.mxu0 0
      %1823 = vmatprep.subr.bf16.mxu0 0
      %1824 = vmatpush1.bf16.xpose.msra.mxu0 0
      %1825 = vmatprep.subr.bf16.mxu0 0
      %1826 = vmatpush1.bf16.xpose.msra.mxu0 0
      %1827 = vmatprep.subr.bf16.mxu0 0
      %1828 = vmatpush1.bf16.xpose.msra.mxu0 0
      %1829 = vmatprep.subr.bf16.mxu0 0
      %1830 = vmatpush1.bf16.xpose.msra.mxu0 0
      %1831 = vmatprep.subr.bf16.mxu0 0
      %1832 = vmatpush1.bf16.xpose.msra.mxu0 0
      %1833 = vmatprep.subr.bf16.mxu0 0
      %1834 = vmatpush1.bf16.xpose.msra.mxu0 0
      %1835 = vmatprep.mubr.bf16.mxu0 0
      %1836 = vmatmul.mubr.bf16.gmra.mrb[0].mxu0 %v691
      %v1837 = vpop.f32.mrb[0].mxu0
      %v1838 = vadd.f32 0.0, %v1837
      %v1839 = vpop.f32.mrb[0].mxu0
      %v1840 = vpop.f32.mrb[0].mxu0
      %v1841 = vadd.f32 0.0, %v1840
      %v1842 = vpop.f32.mrb[0].mxu0
      %1843 = vdwg.mxu0
      %vm1844 = vcmask 130048
      %v1845 = vsel %vm1844, %v1223, -inf
      %1846 = vmax.xlane.f32.xlu0 %v1845
      %v1847 = vpop.xlane.xlu0 %1846
      %v1848 = vsel %vm1844, %v1226, -inf
      %1849 = vmax.xlane.f32.xlu0 %v1848
      %v1850 = vpop.xlane.xlu0 %1849
      %v1851 = vsel %vm1844, %v1264, -inf
      %1852 = vmax.xlane.f32.xlu0 %v1851
      %v1853 = vpop.xlane.xlu0 %1852
      %v1854 = vsel %vm1844, %v1267, -inf
      %1855 = vmax.xlane.f32.xlu0 %v1854
      %v1856 = vpop.xlane.xlu0 %1855
      %v1857 = vsel %vm1844, %v1305, -inf
      %1858 = vmax.xlane.f32.xlu0 %v1857
      %v1859 = vpop.xlane.xlu0 %1858
      %v1860 = vsel %vm1844, %v1308, -inf
      %1861 = vmax.xlane.f32.xlu0 %v1860
      %v1862 = vpop.xlane.xlu0 %1861
      %v1863 = vsel %vm1844, %v1346, -inf
      %1864 = vmax.xlane.f32.xlu0 %v1863
      %v1865 = vpop.xlane.xlu0 %1864
      %v1866 = vsel %vm1844, %v1349, -inf
      %1867 = vmax.xlane.f32.xlu0 %v1866
      %v1868 = vpop.xlane.xlu0 %1867
      %v1869 = vsel %vm1844, %v1387, -inf
      %1870 = vmax.xlane.f32.xlu0 %v1869
      %v1871 = vpop.xlane.xlu0 %1870
      %v1872 = vsel %vm1844, %v1390, -inf
      %1873 = vmax.xlane.f32.xlu0 %v1872
      %v1874 = vpop.xlane.xlu0 %1873
      %v1875 = vsel %vm1844, %v1428, -inf
      %1876 = vmax.xlane.f32.xlu0 %v1875
      %v1877 = vpop.xlane.xlu0 %1876
      %v1878 = vsel %vm1844, %v1431, -inf
      %1879 = vmax.xlane.f32.xlu0 %v1878
      %v1880 = vpop.xlane.xlu0 %1879
      %v1881 = vsel %vm1844, %v1469, -inf
      %1882 = vmax.xlane.f32.xlu0 %v1881
      %v1883 = vpop.xlane.xlu0 %1882
      %v1884 = vsel %vm1844, %v1472, -inf
      %1885 = vmax.xlane.f32.xlu0 %v1884
      %v1886 = vpop.xlane.xlu0 %1885
      %v1887 = vsel %vm1844, %v1510, -inf
      %1888 = vmax.xlane.f32.xlu0 %v1887
      %v1889 = vpop.xlane.xlu0 %1888
      %v1890 = vsel %vm1844, %v1513, -inf
      %1891 = vmax.xlane.f32.xlu0 %v1890
      %v1892 = vpop.xlane.xlu0 %1891
      %v1893 = vsel %vm1844, %v1551, -inf
      %1894 = vmax.xlane.f32.xlu0 %v1893
      %v1895 = vpop.xlane.xlu0 %1894
      %v1896 = vsel %vm1844, %v1554, -inf
      %1897 = vmax.xlane.f32.xlu0 %v1896
      %v1898 = vpop.xlane.xlu0 %1897
      %v1899 = vsel %vm1844, %v1592, -inf
      %1900 = vmax.xlane.f32.xlu0 %v1899
      %v1901 = vpop.xlane.xlu0 %1900
      %v1902 = vsel %vm1844, %v1595, -inf
      %1903 = vmax.xlane.f32.xlu0 %v1902
      %v1904 = vpop.xlane.xlu0 %1903
      %v1905 = vsel %vm1844, %v1633, -inf
      %1906 = vmax.xlane.f32.xlu0 %v1905
      %v1907 = vpop.xlane.xlu0 %1906
      %v1908 = vsel %vm1844, %v1636, -inf
      %1909 = vmax.xlane.f32.xlu0 %v1908
      %v1910 = vpop.xlane.xlu0 %1909
      %v1911 = vsel %vm1844, %v1674, -inf
      %1912 = vmax.xlane.f32.xlu0 %v1911
      %v1913 = vpop.xlane.xlu0 %1912
      %v1914 = vsel %vm1844, %v1677, -inf
      %1915 = vmax.xlane.f32.xlu0 %v1914
      %v1916 = vpop.xlane.xlu0 %1915
      %v1917 = vsel %vm1844, %v1715, -inf
      %1918 = vmax.xlane.f32.xlu0 %v1917
      %v1919 = vpop.xlane.xlu0 %1918
      %v1920 = vsel %vm1844, %v1718, -inf
      %1921 = vmax.xlane.f32.xlu0 %v1920
      %v1922 = vpop.xlane.xlu0 %1921
      %v1923 = vsel %vm1844, %v1756, -inf
      %1924 = vmax.xlane.f32.xlu0 %v1923
      %v1925 = vpop.xlane.xlu0 %1924
      %v1926 = vsel %vm1844, %v1759, -inf
      %1927 = vmax.xlane.f32.xlu0 %v1926
      %v1928 = vpop.xlane.xlu0 %1927
      %v1929 = vsel %vm1844, %v1797, -inf
      %1930 = vmax.xlane.f32.xlu0 %v1929
      %v1931 = vpop.xlane.xlu0 %1930
      %v1932 = vsel %vm1844, %v1800, -inf
      %1933 = vmax.xlane.f32.xlu0 %v1932
      %v1934 = vpop.xlane.xlu0 %1933
      %v1935 = vsel %vm1844, %v1838, -inf
      %1936 = vmax.xlane.f32.xlu0 %v1935
      %v1937 = vpop.xlane.xlu0 %1936
      %v1938 = vsel %vm1844, %v1841, -inf
      %1939 = vmax.xlane.f32.xlu0 %v1938
      %v1940 = vpop.xlane.xlu0 %1939
      %v1941 = vsub.f32 %v1223, %v1847
      %v1942 = vsub.f32 %v1226, %v1850
      %v1943 = vsub.f32 %v1264, %v1853
      %v1944 = vsub.f32 %v1267, %v1856
      %v1945 = vsub.f32 %v1305, %v1859
      %v1946 = vsub.f32 %v1308, %v1862
      %v1947 = vsub.f32 %v1346, %v1865
      %v1948 = vsub.f32 %v1349, %v1868
      %v1949 = vsub.f32 %v1387, %v1871
      %v1950 = vsub.f32 %v1390, %v1874
      %v1951 = vsub.f32 %v1428, %v1877
      %v1952 = vsub.f32 %v1431, %v1880
      %v1953 = vsub.f32 %v1469, %v1883
      %v1954 = vsub.f32 %v1472, %v1886
      %v1955 = vsub.f32 %v1510, %v1889
      %v1956 = vsub.f32 %v1513, %v1892
      %v1957 = vsub.f32 %v1551, %v1895
      %v1958 = vsub.f32 %v1554, %v1898
      %v1959 = vsub.f32 %v1592, %v1901
      %v1960 = vsub.f32 %v1595, %v1904
      %v1961 = vsub.f32 %v1633, %v1907
      %v1962 = vsub.f32 %v1636, %v1910
      %v1963 = vsub.f32 %v1674, %v1913
      %v1964 = vsub.f32 %v1677, %v1916
      %v1965 = vsub.f32 %v1715, %v1919
      %v1966 = vsub.f32 %v1718, %v1922
      %v1967 = vsub.f32 %v1756, %v1925
      %v1968 = vsub.f32 %v1759, %v1928
      %v1969 = vsub.f32 %v1797, %v1931
      %v1970 = vsub.f32 %v1800, %v1934
      %v1971 = vsub.f32 %v1838, %v1937
      %v1972 = vsub.f32 %v1841, %v1940
      %v1973 = vmul.f32 %v1941, 1.442695
      %v1974 = vpow.pop %v1973
      %v1975 = vmul.f32 %v1942, 1.442695
      %v1976 = vpow.pop %v1975
      %v1977 = vmul.f32 %v1943, 1.442695
      %v1978 = vpow.pop %v1977
      %v1979 = vmul.f32 %v1944, 1.442695
      %v1980 = vpow.pop %v1979
      %v1981 = vmul.f32 %v1945, 1.442695
      %v1982 = vpow.pop %v1981
      %v1983 = vmul.f32 %v1946, 1.442695
      %v1984 = vpow.pop %v1983
      %v1985 = vmul.f32 %v1947, 1.442695
      %v1986 = vpow.pop %v1985
      %v1987 = vmul.f32 %v1948, 1.442695
      %v1988 = vpow.pop %v1987
      %v1989 = vmul.f32 %v1949, 1.442695
      %v1990 = vpow.pop %v1989
      %v1991 = vmul.f32 %v1950, 1.442695
      %v1992 = vpow.pop %v1991
      %v1993 = vmul.f32 %v1951, 1.442695
      %v1994 = vpow.pop %v1993
      %v1995 = vmul.f32 %v1952, 1.442695
      %v1996 = vpow.pop %v1995
      %v1997 = vmul.f32 %v1953, 1.442695
      %v1998 = vpow.pop %v1997
      %v1999 = vmul.f32 %v1954, 1.442695
      %v2000 = vpow.pop %v1999
      %v2001 = vmul.f32 %v1955, 1.442695
      %v2002 = vpow.pop %v2001
      %v2003 = vmul.f32 %v1956, 1.442695
      %v2004 = vpow.pop %v2003
      %v2005 = vmul.f32 %v1957, 1.442695
      %v2006 = vpow.pop %v2005
      %v2007 = vmul.f32 %v1958, 1.442695
      %v2008 = vpow.pop %v2007
      %v2009 = vmul.f32 %v1959, 1.442695
      %v2010 = vpow.pop %v2009
      %v2011 = vmul.f32 %v1960, 1.442695
      %v2012 = vpow.pop %v2011
      %v2013 = vmul.f32 %v1961, 1.442695
      %v2014 = vpow.pop %v2013
      %v2015 = vmul.f32 %v1962, 1.442695
      %v2016 = vpow.pop %v2015
      %v2017 = vmul.f32 %v1963, 1.442695
      %v2018 = vpow.pop %v2017
      %v2019 = vmul.f32 %v1964, 1.442695
      %v2020 = vpow.pop %v2019
      %v2021 = vmul.f32 %v1965, 1.442695
      %v2022 = vpow.pop %v2021
      %v2023 = vmul.f32 %v1966, 1.442695
      %v2024 = vpow.pop %v2023
      %v2025 = vmul.f32 %v1967, 1.442695
      %v2026 = vpow.pop %v2025
      %v2027 = vmul.f32 %v1968, 1.442695
      %v2028 = vpow.pop %v2027
      %v2029 = vmul.f32 %v1969, 1.442695
      %v2030 = vpow.pop %v2029
      %v2031 = vmul.f32 %v1970, 1.442695
      %v2032 = vpow.pop %v2031
      %v2033 = vmul.f32 %v1971, 1.442695
      %v2034 = vpow.pop %v2033
      %v2035 = vmul.f32 %v1972, 1.442695
      %v2036 = vpow.pop %v2035
      %v2037 = vsel %vm1844, %v1974, 0.0
      %2038 = vadd.xlane.f32.xlu0 %v2037
      %v2039 = vpop.xlane.xlu0 %2038
      %v2040 = vsel %vm1844, %v1976, 0.0
      %2041 = vadd.xlane.f32.xlu0 %v2040
      %v2042 = vpop.xlane.xlu0 %2041
      %v2043 = vsel %vm1844, %v1978, 0.0
      %2044 = vadd.xlane.f32.xlu0 %v2043
      %v2045 = vpop.xlane.xlu0 %2044
      %v2046 = vsel %vm1844, %v1980, 0.0
      %2047 = vadd.xlane.f32.xlu0 %v2046
      %v2048 = vpop.xlane.xlu0 %2047
      %v2049 = vsel %vm1844, %v1982, 0.0
      %2050 = vadd.xlane.f32.xlu0 %v2049
      %v2051 = vpop.xlane.xlu0 %2050
      %v2052 = vsel %vm1844, %v1984, 0.0
      %2053 = vadd.xlane.f32.xlu0 %v2052
      %v2054 = vpop.xlane.xlu0 %2053
      %v2055 = vsel %vm1844, %v1986, 0.0
      %2056 = vadd.xlane.f32.xlu0 %v2055
      %v2057 = vpop.xlane.xlu0 %2056
      %v2058 = vsel %vm1844, %v1988, 0.0
      %2059 = vadd.xlane.f32.xlu0 %v2058
      %v2060 = vpop.xlane.xlu0 %2059
      %v2061 = vsel %vm1844, %v1990, 0.0
      %2062 = vadd.xlane.f32.xlu0 %v2061
      %v2063 = vpop.xlane.xlu0 %2062
      %v2064 = vsel %vm1844, %v1992, 0.0
      %2065 = vadd.xlane.f32.xlu0 %v2064
      %v2066 = vpop.xlane.xlu0 %2065
      %v2067 = vsel %vm1844, %v1994, 0.0
      %2068 = vadd.xlane.f32.xlu0 %v2067
      %v2069 = vpop.xlane.xlu0 %2068
      %v2070 = vsel %vm1844, %v1996, 0.0
      %2071 = vadd.xlane.f32.xlu0 %v2070
      %v2072 = vpop.xlane.xlu0 %2071
      %v2073 = vsel %vm1844, %v1998, 0.0
      %2074 = vadd.xlane.f32.xlu0 %v2073
      %v2075 = vpop.xlane.xlu0 %2074
      %v2076 = vsel %vm1844, %v2000, 0.0
      %2077 = vadd.xlane.f32.xlu0 %v2076
      %v2078 = vpop.xlane.xlu0 %2077
      %v2079 = vsel %vm1844, %v2002, 0.0
      %2080 = vadd.xlane.f32.xlu0 %v2079
      %v2081 = vpop.xlane.xlu0 %2080
      %v2082 = vsel %vm1844, %v2004, 0.0
      %2083 = vadd.xlane.f32.xlu0 %v2082
      %v2084 = vpop.xlane.xlu0 %2083
      %v2085 = vsel %vm1844, %v2006, 0.0
      %2086 = vadd.xlane.f32.xlu0 %v2085
      %v2087 = vpop.xlane.xlu0 %2086
      %v2088 = vsel %vm1844, %v2008, 0.0
      %2089 = vadd.xlane.f32.xlu0 %v2088
      %v2090 = vpop.xlane.xlu0 %2089
      %v2091 = vsel %vm1844, %v2010, 0.0
      %2092 = vadd.xlane.f32.xlu0 %v2091
      %v2093 = vpop.xlane.xlu0 %2092
      %v2094 = vsel %vm1844, %v2012, 0.0
      %2095 = vadd.xlane.f32.xlu0 %v2094
      %v2096 = vpop.xlane.xlu0 %2095
      %v2097 = vsel %vm1844, %v2014, 0.0
      %2098 = vadd.xlane.f32.xlu0 %v2097
      %v2099 = vpop.xlane.xlu0 %2098
      %v2100 = vsel %vm1844, %v2016, 0.0
      %2101 = vadd.xlane.f32.xlu0 %v2100
      %v2102 = vpop.xlane.xlu0 %2101
      %v2103 = vsel %vm1844, %v2018, 0.0
      %2104 = vadd.xlane.f32.xlu0 %v2103
      %v2105 = vpop.xlane.xlu0 %2104
      %v2106 = vsel %vm1844, %v2020, 0.0
      %2107 = vadd.xlane.f32.xlu0 %v2106
      %v2108 = vpop.xlane.xlu0 %2107
      %v2109 = vsel %vm1844, %v2022, 0.0
      %2110 = vadd.xlane.f32.xlu0 %v2109
      %v2111 = vpop.xlane.xlu0 %2110
      %v2112 = vsel %vm1844, %v2024, 0.0
      %2113 = vadd.xlane.f32.xlu0 %v2112
      %v2114 = vpop.xlane.xlu0 %2113
      %v2115 = vsel %vm1844, %v2026, 0.0
      %2116 = vadd.xlane.f32.xlu0 %v2115
      %v2117 = vpop.xlane.xlu0 %2116
      %v2118 = vsel %vm1844, %v2028, 0.0
      %2119 = vadd.xlane.f32.xlu0 %v2118
      %v2120 = vpop.xlane.xlu0 %2119
      %v2121 = vsel %vm1844, %v2030, 0.0
      %2122 = vadd.xlane.f32.xlu0 %v2121
      %v2123 = vpop.xlane.xlu0 %2122
      %v2124 = vsel %vm1844, %v2032, 0.0
      %2125 = vadd.xlane.f32.xlu0 %v2124
      %v2126 = vpop.xlane.xlu0 %2125
      %v2127 = vsel %vm1844, %v2034, 0.0
      %2128 = vadd.xlane.f32.xlu0 %v2127
      %v2129 = vpop.xlane.xlu0 %2128
      %v2130 = vsel %vm1844, %v2036, 0.0
      %2131 = vadd.xlane.f32.xlu0 %v2130
      %v2132 = vpop.xlane.xlu0 %2131
      %v2133 = vrcp.pop %v2039
      %v2134 = vrcp.pop %v2042
      %v2135 = vrcp.pop %v2045
      %v2136 = vrcp.pop %v2048
      %v2137 = vrcp.pop %v2051
      %v2138 = vrcp.pop %v2054
      %v2139 = vrcp.pop %v2057
      %v2140 = vrcp.pop %v2060
      %v2141 = vrcp.pop %v2063
      %v2142 = vrcp.pop %v2066
      %v2143 = vrcp.pop %v2069
      %v2144 = vrcp.pop %v2072
      %v2145 = vrcp.pop %v2075
      %v2146 = vrcp.pop %v2078
      %v2147 = vrcp.pop %v2081
      %v2148 = vrcp.pop %v2084
      %v2149 = vrcp.pop %v2087
      %v2150 = vrcp.pop %v2090
      %v2151 = vrcp.pop %v2093
      %v2152 = vrcp.pop %v2096
      %v2153 = vrcp.pop %v2099
      %v2154 = vrcp.pop %v2102
      %v2155 = vrcp.pop %v2105
      %v2156 = vrcp.pop %v2108
      %v2157 = vrcp.pop %v2111
      %v2158 = vrcp.pop %v2114
      %v2159 = vrcp.pop %v2117
      %v2160 = vrcp.pop %v2120
      %v2161 = vrcp.pop %v2123
      %v2162 = vrcp.pop %v2126
      %v2163 = vrcp.pop %v2129
      %v2164 = vrcp.pop %v2132
      %v2165 = vpack.c.bf16 %v1976, %v1974
      %v2166 = vpack.c.bf16 %v1980, %v1978
      %v2167 = vpack.c.bf16 %v1984, %v1982
      %v2168 = vpack.c.bf16 %v1988, %v1986
      %v2169 = vpack.c.bf16 %v1992, %v1990
      %v2170 = vpack.c.bf16 %v1996, %v1994
      %v2171 = vpack.c.bf16 %v2000, %v1998
      %v2172 = vpack.c.bf16 %v2004, %v2002
      %v2173 = vpack.c.bf16 %v2008, %v2006
      %v2174 = vpack.c.bf16 %v2012, %v2010
      %v2175 = vpack.c.bf16 %v2016, %v2014
      %v2176 = vpack.c.bf16 %v2020, %v2018
      %v2177 = vpack.c.bf16 %v2024, %v2022
      %v2178 = vpack.c.bf16 %v2028, %v2026
      %v2179 = vpack.c.bf16 %v2032, %v2030
      %v2180 = vpack.c.bf16 %v2036, %v2034
      %v2182 = vsel %vm1844, %v2165, 0
      %2184 = vmatprep.subr.bf16.mxu0 0
      %2185 = vmatpush1.bf16.msra.mxu0 %v1172
      %2186 = vmatprep.subr.bf16.mxu0 0
      %2187 = vmatpush1.bf16.msra.mxu0 0
      %2188 = vmatprep.subr.bf16.mxu0 0
      %2189 = vmatpush1.bf16.msra.mxu0 0
      %2190 = vmatprep.subr.bf16.mxu0 0
      %2191 = vmatpush1.bf16.msra.mxu0 0
      %2192 = vmatprep.subr.bf16.mxu0 0
      %2193 = vmatpush1.bf16.msra.mxu0 0
      %2194 = vmatprep.subr.bf16.mxu0 0
      %2195 = vmatpush1.bf16.msra.mxu0 0
      %2196 = vmatprep.subr.bf16.mxu0 0
      %2197 = vmatpush1.bf16.msra.mxu0 0
      %2198 = vmatprep.subr.bf16.mxu0 0
      %2199 = vmatpush1.bf16.msra.mxu0 0
      %2200 = vmatprep.subr.bf16.mxu0 0
      %2201 = vmatpush1.bf16.msra.mxu0 0
      %2202 = vmatprep.subr.bf16.mxu0 0
      %2203 = vmatpush1.bf16.msra.mxu0 0
      %2204 = vmatprep.subr.bf16.mxu0 0
      %2205 = vmatpush1.bf16.msra.mxu0 0
      %2206 = vmatprep.subr.bf16.mxu0 0
      %2207 = vmatpush1.bf16.msra.mxu0 0
      %2208 = vmatprep.subr.bf16.mxu0 0
      %2209 = vmatpush1.bf16.msra.mxu0 0
      %2210 = vmatprep.subr.bf16.mxu0 0
      %2211 = vmatpush1.bf16.msra.mxu0 0
      %2212 = vmatprep.subr.bf16.mxu0 0
      %2213 = vmatpush1.bf16.msra.mxu0 0
      %2214 = vmatprep.subr.bf16.mxu0 0
      %2215 = vmatpush1.bf16.msra.mxu0 0
      %2216 = vmatprep.mubr.bf16.mxu0 0
      %2217 = vmatmul.mubr.bf16.gmra.mrb[0].mxu0 %v2182
      %v2218 = vpop.f32.mrb[0].mxu0
      %v2219 = vadd.f32 0.0, %v2218
      %v2220 = vpop.f32.mrb[0].mxu0
      %v2221 = vpop.f32.mrb[0].mxu0
      %v2222 = vadd.f32 0.0, %v2221
      %v2223 = vpop.f32.mrb[0].mxu0
      %2224 = vdwg.mxu0
      %v2226 = vsel %vm1844, %v2166, 0
      %2228 = vmatprep.subr.bf16.mxu0 0
      %2229 = vmatpush1.bf16.msra.mxu0 %v1173
      %2230 = vmatprep.subr.bf16.mxu0 0
      %2231 = vmatpush1.bf16.msra.mxu0 0
      %2232 = vmatprep.subr.bf16.mxu0 0
      %2233 = vmatpush1.bf16.msra.mxu0 0
      %2234 = vmatprep.subr.bf16.mxu0 0
      %2235 = vmatpush1.bf16.msra.mxu0 0
      %2236 = vmatprep.subr.bf16.mxu0 0
      %2237 = vmatpush1.bf16.msra.mxu0 0
      %2238 = vmatprep.subr.bf16.mxu0 0
      %2239 = vmatpush1.bf16.msra.mxu0 0
      %2240 = vmatprep.subr.bf16.mxu0 0
      %2241 = vmatpush1.bf16.msra.mxu0 0
      %2242 = vmatprep.subr.bf16.mxu0 0
      %2243 = vmatpush1.bf16.msra.mxu0 0
      %2244 = vmatprep.subr.bf16.mxu0 0
      %2245 = vmatpush1.bf16.msra.mxu0 0
      %2246 = vmatprep.subr.bf16.mxu0 0
      %2247 = vmatpush1.bf16.msra.mxu0 0
      %2248 = vmatprep.subr.bf16.mxu0 0
      %2249 = vmatpush1.bf16.msra.mxu0 0
      %2250 = vmatprep.subr.bf16.mxu0 0
      %2251 = vmatpush1.bf16.msra.mxu0 0
      %2252 = vmatprep.subr.bf16.mxu0 0
      %2253 = vmatpush1.bf16.msra.mxu0 0
      %2254 = vmatprep.subr.bf16.mxu0 0
      %2255 = vmatpush1.bf16.msra.mxu0 0
      %2256 = vmatprep.subr.bf16.mxu0 0
      %2257 = vmatpush1.bf16.msra.mxu0 0
      %2258 = vmatprep.subr.bf16.mxu0 0
      %2259 = vmatpush1.bf16.msra.mxu0 0
      %2260 = vmatprep.mubr.bf16.mxu0 0
      %2261 = vmatmul.mubr.bf16.gmra.mrb[0].mxu0 %v2226
      %v2262 = vpop.f32.mrb[0].mxu0
      %v2263 = vadd.f32 0.0, %v2262
      %v2264 = vpop.f32.mrb[0].mxu0
      %v2265 = vpop.f32.mrb[0].mxu0
      %v2266 = vadd.f32 0.0, %v2265
      %v2267 = vpop.f32.mrb[0].mxu0
      %2268 = vdwg.mxu0
      %v2270 = vsel %vm1844, %v2167, 0
      %2272 = vmatprep.subr.bf16.mxu0 0
      %2273 = vmatpush1.bf16.msra.mxu0 %v1174
      %2274 = vmatprep.subr.bf16.mxu0 0
      %2275 = vmatpush1.bf16.msra.mxu0 0
      %2276 = vmatprep.subr.bf16.mxu0 0
      %2277 = vmatpush1.bf16.msra.mxu0 0
      %2278 = vmatprep.subr.bf16.mxu0 0
      %2279 = vmatpush1.bf16.msra.mxu0 0
      %2280 = vmatprep.subr.bf16.mxu0 0
      %2281 = vmatpush1.bf16.msra.mxu0 0
      %2282 = vmatprep.subr.bf16.mxu0 0
      %2283 = vmatpush1.bf16.msra.mxu0 0
      %2284 = vmatprep.subr.bf16.mxu0 0
      %2285 = vmatpush1.bf16.msra.mxu0 0
      %2286 = vmatprep.subr.bf16.mxu0 0
      %2287 = vmatpush1.bf16.msra.mxu0 0
      %2288 = vmatprep.subr.bf16.mxu0 0
      %2289 = vmatpush1.bf16.msra.mxu0 0
      %2290 = vmatprep.subr.bf16.mxu0 0
      %2291 = vmatpush1.bf16.msra.mxu0 0
      %2292 = vmatprep.subr.bf16.mxu0 0
      %2293 = vmatpush1.bf16.msra.mxu0 0
      %2294 = vmatprep.subr.bf16.mxu0 0
      %2295 = vmatpush1.bf16.msra.mxu0 0
      %2296 = vmatprep.subr.bf16.mxu0 0
      %2297 = vmatpush1.bf16.msra.mxu0 0
      %2298 = vmatprep.subr.bf16.mxu0 0
      %2299 = vmatpush1.bf16.msra.mxu0 0
      %2300 = vmatprep.subr.bf16.mxu0 0
      %2301 = vmatpush1.bf16.msra.mxu0 0
      %2302 = vmatprep.subr.bf16.mxu0 0
      %2303 = vmatpush1.bf16.msra.mxu0 0
      %2304 = vmatprep.mubr.bf16.mxu0 0
      %2305 = vmatmul.mubr.bf16.gmra.mrb[0].mxu0 %v2270
      %v2306 = vpop.f32.mrb[0].mxu0
      %v2307 = vadd.f32 0.0, %v2306
      %v2308 = vpop.f32.mrb[0].mxu0
      %v2309 = vpop.f32.mrb[0].mxu0
      %v2310 = vadd.f32 0.0, %v2309
      %v2311 = vpop.f32.mrb[0].mxu0
      %2312 = vdwg.mxu0
      %v2314 = vsel %vm1844, %v2168, 0
      %2316 = vmatprep.subr.bf16.mxu0 0
      %2317 = vmatpush1.bf16.msra.mxu0 %v1175
      %2318 = vmatprep.subr.bf16.mxu0 0
      %2319 = vmatpush1.bf16.msra.mxu0 0
      %2320 = vmatprep.subr.bf16.mxu0 0
      %2321 = vmatpush1.bf16.msra.mxu0 0
      %2322 = vmatprep.subr.bf16.mxu0 0
      %2323 = vmatpush1.bf16.msra.mxu0 0
      %2324 = vmatprep.subr.bf16.mxu0 0
      %2325 = vmatpush1.bf16.msra.mxu0 0
      %2326 = vmatprep.subr.bf16.mxu0 0
      %2327 = vmatpush1.bf16.msra.mxu0 0
      %2328 = vmatprep.subr.bf16.mxu0 0
      %2329 = vmatpush1.bf16.msra.mxu0 0
      %2330 = vmatprep.subr.bf16.mxu0 0
      %2331 = vmatpush1.bf16.msra.mxu0 0
      %2332 = vmatprep.subr.bf16.mxu0 0
      %2333 = vmatpush1.bf16.msra.mxu0 0
      %2334 = vmatprep.subr.bf16.mxu0 0
      %2335 = vmatpush1.bf16.msra.mxu0 0
      %2336 = vmatprep.subr.bf16.mxu0 0
      %2337 = vmatpush1.bf16.msra.mxu0 0
      %2338 = vmatprep.subr.bf16.mxu0 0
      %2339 = vmatpush1.bf16.msra.mxu0 0
      %2340 = vmatprep.subr.bf16.mxu0 0
      %2341 = vmatpush1.bf16.msra.mxu0 0
      %2342 = vmatprep.subr.bf16.mxu0 0
      %2343 = vmatpush1.bf16.msra.mxu0 0
      %2344 = vmatprep.subr.bf16.mxu0 0
      %2345 = vmatpush1.bf16.msra.mxu0 0
      %2346 = vmatprep.subr.bf16.mxu0 0
      %2347 = vmatpush1.bf16.msra.mxu0 0
      %2348 = vmatprep.mubr.bf16.mxu0 0
      %2349 = vmatmul.mubr.bf16.gmra.mrb[0].mxu0 %v2314
      %v2350 = vpop.f32.mrb[0].mxu0
      %v2351 = vadd.f32 0.0, %v2350
      %v2352 = vpop.f32.mrb[0].mxu0
      %v2353 = vpop.f32.mrb[0].mxu0
      %v2354 = vadd.f32 0.0, %v2353
      %v2355 = vpop.f32.mrb[0].mxu0
      %2356 = vdwg.mxu0
      %v2358 = vsel %vm1844, %v2169, 0
      %2360 = vmatprep.subr.bf16.mxu0 0
      %2361 = vmatpush1.bf16.msra.mxu0 %v1176
      %2362 = vmatprep.subr.bf16.mxu0 0
      %2363 = vmatpush1.bf16.msra.mxu0 0
      %2364 = vmatprep.subr.bf16.mxu0 0
      %2365 = vmatpush1.bf16.msra.mxu0 0
      %2366 = vmatprep.subr.bf16.mxu0 0
      %2367 = vmatpush1.bf16.msra.mxu0 0
      %2368 = vmatprep.subr.bf16.mxu0 0
      %2369 = vmatpush1.bf16.msra.mxu0 0
      %2370 = vmatprep.subr.bf16.mxu0 0
      %2371 = vmatpush1.bf16.msra.mxu0 0
      %2372 = vmatprep.subr.bf16.mxu0 0
      %2373 = vmatpush1.bf16.msra.mxu0 0
      %2374 = vmatprep.subr.bf16.mxu0 0
      %2375 = vmatpush1.bf16.msra.mxu0 0
      %2376 = vmatprep.subr.bf16.mxu0 0
      %2377 = vmatpush1.bf16.msra.mxu0 0
      %2378 = vmatprep.subr.bf16.mxu0 0
      %2379 = vmatpush1.bf16.msra.mxu0 0
      %2380 = vmatprep.subr.bf16.mxu0 0
      %2381 = vmatpush1.bf16.msra.mxu0 0
      %2382 = vmatprep.subr.bf16.mxu0 0
      %2383 = vmatpush1.bf16.msra.mxu0 0
      %2384 = vmatprep.subr.bf16.mxu0 0
      %2385 = vmatpush1.bf16.msra.mxu0 0
      %2386 = vmatprep.subr.bf16.mxu0 0
      %2387 = vmatpush1.bf16.msra.mxu0 0
      %2388 = vmatprep.subr.bf16.mxu0 0
      %2389 = vmatpush1.bf16.msra.mxu0 0
      %2390 = vmatprep.subr.bf16.mxu0 0
      %2391 = vmatpush1.bf16.msra.mxu0 0
      %2392 = vmatprep.mubr.bf16.mxu0 0
      %2393 = vmatmul.mubr.bf16.gmra.mrb[0].mxu0 %v2358
      %v2394 = vpop.f32.mrb[0].mxu0
      %v2395 = vadd.f32 0.0, %v2394
      %v2396 = vpop.f32.mrb[0].mxu0
      %v2397 = vpop.f32.mrb[0].mxu0
      %v2398 = vadd.f32 0.0, %v2397
      %v2399 = vpop.f32.mrb[0].mxu0
      %2400 = vdwg.mxu0
      %v2402 = vsel %vm1844, %v2170, 0
      %2404 = vmatprep.subr.bf16.mxu0 0
      %2405 = vmatpush1.bf16.msra.mxu0 %v1177
      %2406 = vmatprep.subr.bf16.mxu0 0
      %2407 = vmatpush1.bf16.msra.mxu0 0
      %2408 = vmatprep.subr.bf16.mxu0 0
      %2409 = vmatpush1.bf16.msra.mxu0 0
      %2410 = vmatprep.subr.bf16.mxu0 0
      %2411 = vmatpush1.bf16.msra.mxu0 0
      %2412 = vmatprep.subr.bf16.mxu0 0
      %2413 = vmatpush1.bf16.msra.mxu0 0
      %2414 = vmatprep.subr.bf16.mxu0 0
      %2415 = vmatpush1.bf16.msra.mxu0 0
      %2416 = vmatprep.subr.bf16.mxu0 0
      %2417 = vmatpush1.bf16.msra.mxu0 0
      %2418 = vmatprep.subr.bf16.mxu0 0
      %2419 = vmatpush1.bf16.msra.mxu0 0
      %2420 = vmatprep.subr.bf16.mxu0 0
      %2421 = vmatpush1.bf16.msra.mxu0 0
      %2422 = vmatprep.subr.bf16.mxu0 0
      %2423 = vmatpush1.bf16.msra.mxu0 0
      %2424 = vmatprep.subr.bf16.mxu0 0
      %2425 = vmatpush1.bf16.msra.mxu0 0
      %2426 = vmatprep.subr.bf16.mxu0 0
      %2427 = vmatpush1.bf16.msra.mxu0 0
      %2428 = vmatprep.subr.bf16.mxu0 0
      %2429 = vmatpush1.bf16.msra.mxu0 0
      %2430 = vmatprep.subr.bf16.mxu0 0
      %2431 = vmatpush1.bf16.msra.mxu0 0
      %2432 = vmatprep.subr.bf16.mxu0 0
      %2433 = vmatpush1.bf16.msra.mxu0 0
      %2434 = vmatprep.subr.bf16.mxu0 0
      %2435 = vmatpush1.bf16.msra.mxu0 0
      %2436 = vmatprep.mubr.bf16.mxu0 0
      %2437 = vmatmul.mubr.bf16.gmra.mrb[0].mxu0 %v2402
      %v2438 = vpop.f32.mrb[0].mxu0
      %v2439 = vadd.f32 0.0, %v2438
      %v2440 = vpop.f32.mrb[0].mxu0
      %v2441 = vpop.f32.mrb[0].mxu0
      %v2442 = vadd.f32 0.0, %v2441
      %v2443 = vpop.f32.mrb[0].mxu0
      %2444 = vdwg.mxu0
      %v2446 = vsel %vm1844, %v2171, 0
      %2448 = vmatprep.subr.bf16.mxu0 0
      %2449 = vmatpush1.bf16.msra.mxu0 %v1178
      %2450 = vmatprep.subr.bf16.mxu0 0
      %2451 = vmatpush1.bf16.msra.mxu0 0
      %2452 = vmatprep.subr.bf16.mxu0 0
      %2453 = vmatpush1.bf16.msra.mxu0 0
      %2454 = vmatprep.subr.bf16.mxu0 0
      %2455 = vmatpush1.bf16.msra.mxu0 0
      %2456 = vmatprep.subr.bf16.mxu0 0
      %2457 = vmatpush1.bf16.msra.mxu0 0
      %2458 = vmatprep.subr.bf16.mxu0 0
      %2459 = vmatpush1.bf16.msra.mxu0 0
      %2460 = vmatprep.subr.bf16.mxu0 0
      %2461 = vmatpush1.bf16.msra.mxu0 0
      %2462 = vmatprep.subr.bf16.mxu0 0
      %2463 = vmatpush1.bf16.msra.mxu0 0
      %2464 = vmatprep.subr.bf16.mxu0 0
      %2465 = vmatpush1.bf16.msra.mxu0 0
      %2466 = vmatprep.subr.bf16.mxu0 0
      %2467 = vmatpush1.bf16.msra.mxu0 0
      %2468 = vmatprep.subr.bf16.mxu0 0
      %2469 = vmatpush1.bf16.msra.mxu0 0
      %2470 = vmatprep.subr.bf16.mxu0 0
      %2471 = vmatpush1.bf16.msra.mxu0 0
      %2472 = vmatprep.subr.bf16.mxu0 0
      %2473 = vmatpush1.bf16.msra.mxu0 0
      %2474 = vmatprep.subr.bf16.mxu0 0
      %2475 = vmatpush1.bf16.msra.mxu0 0
      %2476 = vmatprep.subr.bf16.mxu0 0
      %2477 = vmatpush1.bf16.msra.mxu0 0
      %2478 = vmatprep.subr.bf16.mxu0 0
      %2479 = vmatpush1.bf16.msra.mxu0 0
      %2480 = vmatprep.mubr.bf16.mxu0 0
      %2481 = vmatmul.mubr.bf16.gmra.mrb[0].mxu0 %v2446
      %v2482 = vpop.f32.mrb[0].mxu0
      %v2483 = vadd.f32 0.0, %v2482
      %v2484 = vpop.f32.mrb[0].mxu0
      %v2485 = vpop.f32.mrb[0].mxu0
      %v2486 = vadd.f32 0.0, %v2485
      %v2487 = vpop.f32.mrb[0].mxu0
      %2488 = vdwg.mxu0
      %v2490 = vsel %vm1844, %v2172, 0
      %2492 = vmatprep.subr.bf16.mxu0 0
      %2493 = vmatpush1.bf16.msra.mxu0 %v1179
      %2494 = vmatprep.subr.bf16.mxu0 0
      %2495 = vmatpush1.bf16.msra.mxu0 0
      %2496 = vmatprep.subr.bf16.mxu0 0
      %2497 = vmatpush1.bf16.msra.mxu0 0
      %2498 = vmatprep.subr.bf16.mxu0 0
      %2499 = vmatpush1.bf16.msra.mxu0 0
      %2500 = vmatprep.subr.bf16.mxu0 0
      %2501 = vmatpush1.bf16.msra.mxu0 0
      %2502 = vmatprep.subr.bf16.mxu0 0
      %2503 = vmatpush1.bf16.msra.mxu0 0
      %2504 = vmatprep.subr.bf16.mxu0 0
      %2505 = vmatpush1.bf16.msra.mxu0 0
      %2506 = vmatprep.subr.bf16.mxu0 0
      %2507 = vmatpush1.bf16.msra.mxu0 0
      %2508 = vmatprep.subr.bf16.mxu0 0
      %2509 = vmatpush1.bf16.msra.mxu0 0
      %2510 = vmatprep.subr.bf16.mxu0 0
      %2511 = vmatpush1.bf16.msra.mxu0 0
      %2512 = vmatprep.subr.bf16.mxu0 0
      %2513 = vmatpush1.bf16.msra.mxu0 0
      %2514 = vmatprep.subr.bf16.mxu0 0
      %2515 = vmatpush1.bf16.msra.mxu0 0
      %2516 = vmatprep.subr.bf16.mxu0 0
      %2517 = vmatpush1.bf16.msra.mxu0 0
      %2518 = vmatprep.subr.bf16.mxu0 0
      %2519 = vmatpush1.bf16.msra.mxu0 0
      %2520 = vmatprep.subr.bf16.mxu0 0
      %2521 = vmatpush1.bf16.msra.mxu0 0
      %2522 = vmatprep.subr.bf16.mxu0 0
      %2523 = vmatpush1.bf16.msra.mxu0 0
      %2524 = vmatprep.mubr.bf16.mxu0 0
      %2525 = vmatmul.mubr.bf16.gmra.mrb[0].mxu0 %v2490
      %v2526 = vpop.f32.mrb[0].mxu0
      %v2527 = vadd.f32 0.0, %v2526
      %v2528 = vpop.f32.mrb[0].mxu0
      %v2529 = vpop.f32.mrb[0].mxu0
      %v2530 = vadd.f32 0.0, %v2529
      %v2531 = vpop.f32.mrb[0].mxu0
      %2532 = vdwg.mxu0
      %v2534 = vsel %vm1844, %v2173, 0
      %2536 = vmatprep.subr.bf16.mxu0 0
      %2537 = vmatpush1.bf16.msra.mxu0 %v1180
      %2538 = vmatprep.subr.bf16.mxu0 0
      %2539 = vmatpush1.bf16.msra.mxu0 0
      %2540 = vmatprep.subr.bf16.mxu0 0
      %2541 = vmatpush1.bf16.msra.mxu0 0
      %2542 = vmatprep.subr.bf16.mxu0 0
      %2543 = vmatpush1.bf16.msra.mxu0 0
      %2544 = vmatprep.subr.bf16.mxu0 0
      %2545 = vmatpush1.bf16.msra.mxu0 0
      %2546 = vmatprep.subr.bf16.mxu0 0
      %2547 = vmatpush1.bf16.msra.mxu0 0
      %2548 = vmatprep.subr.bf16.mxu0 0
      %2549 = vmatpush1.bf16.msra.mxu0 0
      %2550 = vmatprep.subr.bf16.mxu0 0
      %2551 = vmatpush1.bf16.msra.mxu0 0
      %2552 = vmatprep.subr.bf16.mxu0 0
      %2553 = vmatpush1.bf16.msra.mxu0 0
      %2554 = vmatprep.subr.bf16.mxu0 0
      %2555 = vmatpush1.bf16.msra.mxu0 0
      %2556 = vmatprep.subr.bf16.mxu0 0
      %2557 = vmatpush1.bf16.msra.mxu0 0
      %2558 = vmatprep.subr.bf16.mxu0 0
      %2559 = vmatpush1.bf16.msra.mxu0 0
      %2560 = vmatprep.subr.bf16.mxu0 0
      %2561 = vmatpush1.bf16.msra.mxu0 0
      %2562 = vmatprep.subr.bf16.mxu0 0
      %2563 = vmatpush1.bf16.msra.mxu0 0
      %2564 = vmatprep.subr.bf16.mxu0 0
      %2565 = vmatpush1.bf16.msra.mxu0 0
      %2566 = vmatprep.subr.bf16.mxu0 0
      %2567 = vmatpush1.bf16.msra.mxu0 0
      %2568 = vmatprep.mubr.bf16.mxu0 0
      %2569 = vmatmul.mubr.bf16.gmra.mrb[0].mxu0 %v2534
      %v2570 = vpop.f32.mrb[0].mxu0
      %v2571 = vadd.f32 0.0, %v2570
      %v2572 = vpop.f32.mrb[0].mxu0
      %v2573 = vpop.f32.mrb[0].mxu0
      %v2574 = vadd.f32 0.0, %v2573
      %v2575 = vpop.f32.mrb[0].mxu0
      %2576 = vdwg.mxu0
      %v2578 = vsel %vm1844, %v2174, 0
      %2580 = vmatprep.subr.bf16.mxu0 0
      %2581 = vmatpush1.bf16.msra.mxu0 %v1181
      %2582 = vmatprep.subr.bf16.mxu0 0
      %2583 = vmatpush1.bf16.msra.mxu0 0
      %2584 = vmatprep.subr.bf16.mxu0 0
      %2585 = vmatpush1.bf16.msra.mxu0 0
      %2586 = vmatprep.subr.bf16.mxu0 0
      %2587 = vmatpush1.bf16.msra.mxu0 0
      %2588 = vmatprep.subr.bf16.mxu0 0
      %2589 = vmatpush1.bf16.msra.mxu0 0
      %2590 = vmatprep.subr.bf16.mxu0 0
      %2591 = vmatpush1.bf16.msra.mxu0 0
      %2592 = vmatprep.subr.bf16.mxu0 0
      %2593 = vmatpush1.bf16.msra.mxu0 0
      %2594 = vmatprep.subr.bf16.mxu0 0
      %2595 = vmatpush1.bf16.msra.mxu0 0
      %2596 = vmatprep.subr.bf16.mxu0 0
      %2597 = vmatpush1.bf16.msra.mxu0 0
      %2598 = vmatprep.subr.bf16.mxu0 0
      %2599 = vmatpush1.bf16.msra.mxu0 0
      %2600 = vmatprep.subr.bf16.mxu0 0
      %2601 = vmatpush1.bf16.msra.mxu0 0
      %2602 = vmatprep.subr.bf16.mxu0 0
      %2603 = vmatpush1.bf16.msra.mxu0 0
      %2604 = vmatprep.subr.bf16.mxu0 0
      %2605 = vmatpush1.bf16.msra.mxu0 0
      %2606 = vmatprep.subr.bf16.mxu0 0
      %2607 = vmatpush1.bf16.msra.mxu0 0
      %2608 = vmatprep.subr.bf16.mxu0 0
      %2609 = vmatpush1.bf16.msra.mxu0 0
      %2610 = vmatprep.subr.bf16.mxu0 0
      %2611 = vmatpush1.bf16.msra.mxu0 0
      %2612 = vmatprep.mubr.bf16.mxu0 0
      %2613 = vmatmul.mubr.bf16.gmra.mrb[0].mxu0 %v2578
      %v2614 = vpop.f32.mrb[0].mxu0
      %v2615 = vadd.f32 0.0, %v2614
      %v2616 = vpop.f32.mrb[0].mxu0
      %v2617 = vpop.f32.mrb[0].mxu0
      %v2618 = vadd.f32 0.0, %v2617
      %v2619 = vpop.f32.mrb[0].mxu0
      %2620 = vdwg.mxu0
      %v2622 = vsel %vm1844, %v2175, 0
      %2624 = vmatprep.subr.bf16.mxu0 0
      %2625 = vmatpush1.bf16.msra.mxu0 %v1182
      %2626 = vmatprep.subr.bf16.mxu0 0
      %2627 = vmatpush1.bf16.msra.mxu0 0
      %2628 = vmatprep.subr.bf16.mxu0 0
      %2629 = vmatpush1.bf16.msra.mxu0 0
      %2630 = vmatprep.subr.bf16.mxu0 0
      %2631 = vmatpush1.bf16.msra.mxu0 0
      %2632 = vmatprep.subr.bf16.mxu0 0
      %2633 = vmatpush1.bf16.msra.mxu0 0
      %2634 = vmatprep.subr.bf16.mxu0 0
      %2635 = vmatpush1.bf16.msra.mxu0 0
      %2636 = vmatprep.subr.bf16.mxu0 0
      %2637 = vmatpush1.bf16.msra.mxu0 0
      %2638 = vmatprep.subr.bf16.mxu0 0
      %2639 = vmatpush1.bf16.msra.mxu0 0
      %2640 = vmatprep.subr.bf16.mxu0 0
      %2641 = vmatpush1.bf16.msra.mxu0 0
      %2642 = vmatprep.subr.bf16.mxu0 0
      %2643 = vmatpush1.bf16.msra.mxu0 0
      %2644 = vmatprep.subr.bf16.mxu0 0
      %2645 = vmatpush1.bf16.msra.mxu0 0
      %2646 = vmatprep.subr.bf16.mxu0 0
      %2647 = vmatpush1.bf16.msra.mxu0 0
      %2648 = vmatprep.subr.bf16.mxu0 0
      %2649 = vmatpush1.bf16.msra.mxu0 0
      %2650 = vmatprep.subr.bf16.mxu0 0
      %2651 = vmatpush1.bf16.msra.mxu0 0
      %2652 = vmatprep.subr.bf16.mxu0 0
      %2653 = vmatpush1.bf16.msra.mxu0 0
      %2654 = vmatprep.subr.bf16.mxu0 0
      %2655 = vmatpush1.bf16.msra.mxu0 0
      %2656 = vmatprep.mubr.bf16.mxu0 0
      %2657 = vmatmul.mubr.bf16.gmra.mrb[0].mxu0 %v2622
      %v2658 = vpop.f32.mrb[0].mxu0
      %v2659 = vadd.f32 0.0, %v2658
      %v2660 = vpop.f32.mrb[0].mxu0
      %v2661 = vpop.f32.mrb[0].mxu0
      %v2662 = vadd.f32 0.0, %v2661
      %v2663 = vpop.f32.mrb[0].mxu0
      %2664 = vdwg.mxu0
      %v2666 = vsel %vm1844, %v2176, 0
      %2668 = vmatprep.subr.bf16.mxu0 0
      %2669 = vmatpush1.bf16.msra.mxu0 %v1183
      %2670 = vmatprep.subr.bf16.mxu0 0
      %2671 = vmatpush1.bf16.msra.mxu0 0
      %2672 = vmatprep.subr.bf16.mxu0 0
      %2673 = vmatpush1.bf16.msra.mxu0 0
      %2674 = vmatprep.subr.bf16.mxu0 0
      %2675 = vmatpush1.bf16.msra.mxu0 0
      %2676 = vmatprep.subr.bf16.mxu0 0
      %2677 = vmatpush1.bf16.msra.mxu0 0
      %2678 = vmatprep.subr.bf16.mxu0 0
      %2679 = vmatpush1.bf16.msra.mxu0 0
      %2680 = vmatprep.subr.bf16.mxu0 0
      %2681 = vmatpush1.bf16.msra.mxu0 0
      %2682 = vmatprep.subr.bf16.mxu0 0
      %2683 = vmatpush1.bf16.msra.mxu0 0
      %2684 = vmatprep.subr.bf16.mxu0 0
      %2685 = vmatpush1.bf16.msra.mxu0 0
      %2686 = vmatprep.subr.bf16.mxu0 0
      %2687 = vmatpush1.bf16.msra.mxu0 0
      %2688 = vmatprep.subr.bf16.mxu0 0
      %2689 = vmatpush1.bf16.msra.mxu0 0
      %2690 = vmatprep.subr.bf16.mxu0 0
      %2691 = vmatpush1.bf16.msra.mxu0 0
      %2692 = vmatprep.subr.bf16.mxu0 0
      %2693 = vmatpush1.bf16.msra.mxu0 0
      %2694 = vmatprep.subr.bf16.mxu0 0
      %2695 = vmatpush1.bf16.msra.mxu0 0
      %2696 = vmatprep.subr.bf16.mxu0 0
      %2697 = vmatpush1.bf16.msra.mxu0 0
      %2698 = vmatprep.subr.bf16.mxu0 0
      %2699 = vmatpush1.bf16.msra.mxu0 0
      %2700 = vmatprep.mubr.bf16.mxu0 0
      %2701 = vmatmul.mubr.bf16.gmra.mrb[0].mxu0 %v2666
      %v2702 = vpop.f32.mrb[0].mxu0
      %v2703 = vadd.f32 0.0, %v2702
      %v2704 = vpop.f32.mrb[0].mxu0
      %v2705 = vpop.f32.mrb[0].mxu0
      %v2706 = vadd.f32 0.0, %v2705
      %v2707 = vpop.f32.mrb[0].mxu0
      %2708 = vdwg.mxu0
      %v2710 = vsel %vm1844, %v2177, 0
      %2712 = vmatprep.subr.bf16.mxu0 0
      %2713 = vmatpush1.bf16.msra.mxu0 %v1184
      %2714 = vmatprep.subr.bf16.mxu0 0
      %2715 = vmatpush1.bf16.msra.mxu0 0
      %2716 = vmatprep.subr.bf16.mxu0 0
      %2717 = vmatpush1.bf16.msra.mxu0 0
      %2718 = vmatprep.subr.bf16.mxu0 0
      %2719 = vmatpush1.bf16.msra.mxu0 0
      %2720 = vmatprep.subr.bf16.mxu0 0
      %2721 = vmatpush1.bf16.msra.mxu0 0
      %2722 = vmatprep.subr.bf16.mxu0 0
      %2723 = vmatpush1.bf16.msra.mxu0 0
      %2724 = vmatprep.subr.bf16.mxu0 0
      %2725 = vmatpush1.bf16.msra.mxu0 0
      %2726 = vmatprep.subr.bf16.mxu0 0
      %2727 = vmatpush1.bf16.msra.mxu0 0
      %2728 = vmatprep.subr.bf16.mxu0 0
      %2729 = vmatpush1.bf16.msra.mxu0 0
      %2730 = vmatprep.subr.bf16.mxu0 0
      %2731 = vmatpush1.bf16.msra.mxu0 0
      %2732 = vmatprep.subr.bf16.mxu0 0
      %2733 = vmatpush1.bf16.msra.mxu0 0
      %2734 = vmatprep.subr.bf16.mxu0 0
      %2735 = vmatpush1.bf16.msra.mxu0 0
      %2736 = vmatprep.subr.bf16.mxu0 0
      %2737 = vmatpush1.bf16.msra.mxu0 0
      %2738 = vmatprep.subr.bf16.mxu0 0
      %2739 = vmatpush1.bf16.msra.mxu0 0
      %2740 = vmatprep.subr.bf16.mxu0 0
      %2741 = vmatpush1.bf16.msra.mxu0 0
      %2742 = vmatprep.subr.bf16.mxu0 0
      %2743 = vmatpush1.bf16.msra.mxu0 0
      %2744 = vmatprep.mubr.bf16.mxu0 0
      %2745 = vmatmul.mubr.bf16.gmra.mrb[0].mxu0 %v2710
      %v2746 = vpop.f32.mrb[0].mxu0
      %v2747 = vadd.f32 0.0, %v2746
      %v2748 = vpop.f32.mrb[0].mxu0
      %v2749 = vpop.f32.mrb[0].mxu0
      %v2750 = vadd.f32 0.0, %v2749
      %v2751 = vpop.f32.mrb[0].mxu0
      %2752 = vdwg.mxu0
      %v2754 = vsel %vm1844, %v2178, 0
      %2756 = vmatprep.subr.bf16.mxu0 0
      %2757 = vmatpush1.bf16.msra.mxu0 %v1185
      %2758 = vmatprep.subr.bf16.mxu0 0
      %2759 = vmatpush1.bf16.msra.mxu0 0
      %2760 = vmatprep.subr.bf16.mxu0 0
      %2761 = vmatpush1.bf16.msra.mxu0 0
      %2762 = vmatprep.subr.bf16.mxu0 0
      %2763 = vmatpush1.bf16.msra.mxu0 0
      %2764 = vmatprep.subr.bf16.mxu0 0
      %2765 = vmatpush1.bf16.msra.mxu0 0
      %2766 = vmatprep.subr.bf16.mxu0 0
      %2767 = vmatpush1.bf16.msra.mxu0 0
      %2768 = vmatprep.subr.bf16.mxu0 0
      %2769 = vmatpush1.bf16.msra.mxu0 0
      %2770 = vmatprep.subr.bf16.mxu0 0
      %2771 = vmatpush1.bf16.msra.mxu0 0
      %2772 = vmatprep.subr.bf16.mxu0 0
      %2773 = vmatpush1.bf16.msra.mxu0 0
      %2774 = vmatprep.subr.bf16.mxu0 0
      %2775 = vmatpush1.bf16.msra.mxu0 0
      %2776 = vmatprep.subr.bf16.mxu0 0
      %2777 = vmatpush1.bf16.msra.mxu0 0
      %2778 = vmatprep.subr.bf16.mxu0 0
      %2779 = vmatpush1.bf16.msra.mxu0 0
      %2780 = vmatprep.subr.bf16.mxu0 0
      %2781 = vmatpush1.bf16.msra.mxu0 0
      %2782 = vmatprep.subr.bf16.mxu0 0
      %2783 = vmatpush1.bf16.msra.mxu0 0
      %2784 = vmatprep.subr.bf16.mxu0 0
      %2785 = vmatpush1.bf16.msra.mxu0 0
      %2786 = vmatprep.subr.bf16.mxu0 0
      %2787 = vmatpush1.bf16.msra.mxu0 0
      %2788 = vmatprep.mubr.bf16.mxu0 0
      %2789 = vmatmul.mubr.bf16.gmra.mrb[0].mxu0 %v2754
      %v2790 = vpop.f32.mrb[0].mxu0
      %v2791 = vadd.f32 0.0, %v2790
      %v2792 = vpop.f32.mrb[0].mxu0
      %v2793 = vpop.f32.mrb[0].mxu0
      %v2794 = vadd.f32 0.0, %v2793
      %v2795 = vpop.f32.mrb[0].mxu0
      %2796 = vdwg.mxu0
      %v2798 = vsel %vm1844, %v2179, 0
      %2800 = vmatprep.subr.bf16.mxu0 0
      %2801 = vmatpush1.bf16.msra.mxu0 %v1186
      %2802 = vmatprep.subr.bf16.mxu0 0
      %2803 = vmatpush1.bf16.msra.mxu0 0
      %2804 = vmatprep.subr.bf16.mxu0 0
      %2805 = vmatpush1.bf16.msra.mxu0 0
      %2806 = vmatprep.subr.bf16.mxu0 0
      %2807 = vmatpush1.bf16.msra.mxu0 0
      %2808 = vmatprep.subr.bf16.mxu0 0
      %2809 = vmatpush1.bf16.msra.mxu0 0
      %2810 = vmatprep.subr.bf16.mxu0 0
      %2811 = vmatpush1.bf16.msra.mxu0 0
      %2812 = vmatprep.subr.bf16.mxu0 0
      %2813 = vmatpush1.bf16.msra.mxu0 0
      %2814 = vmatprep.subr.bf16.mxu0 0
      %2815 = vmatpush1.bf16.msra.mxu0 0
      %2816 = vmatprep.subr.bf16.mxu0 0
      %2817 = vmatpush1.bf16.msra.mxu0 0
      %2818 = vmatprep.subr.bf16.mxu0 0
      %2819 = vmatpush1.bf16.msra.mxu0 0
      %2820 = vmatprep.subr.bf16.mxu0 0
      %2821 = vmatpush1.bf16.msra.mxu0 0
      %2822 = vmatprep.subr.bf16.mxu0 0
      %2823 = vmatpush1.bf16.msra.mxu0 0
      %2824 = vmatprep.subr.bf16.mxu0 0
      %2825 = vmatpush1.bf16.msra.mxu0 0
      %2826 = vmatprep.subr.bf16.mxu0 0
      %2827 = vmatpush1.bf16.msra.mxu0 0
      %2828 = vmatprep.subr.bf16.mxu0 0
      %2829 = vmatpush1.bf16.msra.mxu0 0
      %2830 = vmatprep.subr.bf16.mxu0 0
      %2831 = vmatpush1.bf16.msra.mxu0 0
      %2832 = vmatprep.mubr.bf16.mxu0 0
      %2833 = vmatmul.mubr.bf16.gmra.mrb[0].mxu0 %v2798
      %v2834 = vpop.f32.mrb[0].mxu0
      %v2835 = vadd.f32 0.0, %v2834
      %v2836 = vpop.f32.mrb[0].mxu0
      %v2837 = vpop.f32.mrb[0].mxu0
      %v2838 = vadd.f32 0.0, %v2837
      %v2839 = vpop.f32.mrb[0].mxu0
      %2840 = vdwg.mxu0
      %v2842 = vsel %vm1844, %v2180, 0
      %2844 = vmatprep.subr.bf16.mxu0 0
      %2845 = vmatpush1.bf16.msra.mxu0 %v1187
      %2846 = vmatprep.subr.bf16.mxu0 0
      %2847 = vmatpush1.bf16.msra.mxu0 0
      %2848 = vmatprep.subr.bf16.mxu0 0
      %2849 = vmatpush1.bf16.msra.mxu0 0
      %2850 = vmatprep.subr.bf16.mxu0 0
      %2851 = vmatpush1.bf16.msra.mxu0 0
      %2852 = vmatprep.subr.bf16.mxu0 0
      %2853 = vmatpush1.bf16.msra.mxu0 0
      %2854 = vmatprep.subr.bf16.mxu0 0
      %2855 = vmatpush1.bf16.msra.mxu0 0
      %2856 = vmatprep.subr.bf16.mxu0 0
      %2857 = vmatpush1.bf16.msra.mxu0 0
      %2858 = vmatprep.subr.bf16.mxu0 0
      %2859 = vmatpush1.bf16.msra.mxu0 0
      %2860 = vmatprep.subr.bf16.mxu0 0
      %2861 = vmatpush1.bf16.msra.mxu0 0
      %2862 = vmatprep.subr.bf16.mxu0 0
      %2863 = vmatpush1.bf16.msra.mxu0 0
      %2864 = vmatprep.subr.bf16.mxu0 0
      %2865 = vmatpush1.bf16.msra.mxu0 0
      %2866 = vmatprep.subr.bf16.mxu0 0
      %2867 = vmatpush1.bf16.msra.mxu0 0
      %2868 = vmatprep.subr.bf16.mxu0 0
      %2869 = vmatpush1.bf16.msra.mxu0 0
      %2870 = vmatprep.subr.bf16.mxu0 0
      %2871 = vmatpush1.bf16.msra.mxu0 0
      %2872 = vmatprep.subr.bf16.mxu0 0
      %2873 = vmatpush1.bf16.msra.mxu0 0
      %2874 = vmatprep.subr.bf16.mxu0 0
      %2875 = vmatpush1.bf16.msra.mxu0 0
      %2876 = vmatprep.mubr.bf16.mxu0 0
      %2877 = vmatmul.mubr.bf16.gmra.mrb[0].mxu0 %v2842
      %v2878 = vpop.f32.mrb[0].mxu0
      %v2879 = vadd.f32 0.0, %v2878
      %v2880 = vpop.f32.mrb[0].mxu0
      %v2881 = vpop.f32.mrb[0].mxu0
      %v2882 = vadd.f32 0.0, %v2881
      %v2883 = vpop.f32.mrb[0].mxu0
      %2884 = vdwg.mxu0
      %s2885 = sld [smem:[#allocation2]]
      %v2886 = vstv %s2885
      %v2887 = vmul.f32 %v2886, %v2133
      %v2888 = vmul.f32 %v2886, %v2134
      %v2889 = vmul.f32 %v2886, %v2135
      %v2890 = vmul.f32 %v2886, %v2136
      %v2891 = vmul.f32 %v2886, %v2137
      %v2892 = vmul.f32 %v2886, %v2138
      %v2893 = vmul.f32 %v2886, %v2139
      %v2894 = vmul.f32 %v2886, %v2140
      %v2895 = vmul.f32 %v2886, %v2141
      %v2896 = vmul.f32 %v2886, %v2142
      %v2897 = vmul.f32 %v2886, %v2143
      %v2898 = vmul.f32 %v2886, %v2144
      %v2899 = vmul.f32 %v2886, %v2145
      %v2900 = vmul.f32 %v2886, %v2146
      %v2901 = vmul.f32 %v2886, %v2147
      %v2902 = vmul.f32 %v2886, %v2148
      %v2903 = vmul.f32 %v2886, %v2149
      %v2904 = vmul.f32 %v2886, %v2150
      %v2905 = vmul.f32 %v2886, %v2151
      %v2906 = vmul.f32 %v2886, %v2152
      %v2907 = vmul.f32 %v2886, %v2153
      %v2908 = vmul.f32 %v2886, %v2154
      %v2909 = vmul.f32 %v2886, %v2155
      %v2910 = vmul.f32 %v2886, %v2156
      %v2911 = vmul.f32 %v2886, %v2157
      %v2912 = vmul.f32 %v2886, %v2158
      %v2913 = vmul.f32 %v2886, %v2159
      %v2914 = vmul.f32 %v2886, %v2160
      %v2915 = vmul.f32 %v2886, %v2161
      %v2916 = vmul.f32 %v2886, %v2162
      %v2917 = vmul.f32 %v2886, %v2163
      %v2918 = vmul.f32 %v2886, %v2164
      %v2919 = vmul.f32 %v2219, %v2887
      %v2920 = vmul.f32 %v2222, %v2888
      %v2921 = vmul.f32 %v2263, %v2889
      %v2922 = vmul.f32 %v2266, %v2890
      %v2923 = vmul.f32 %v2307, %v2891
      %v2924 = vmul.f32 %v2310, %v2892
      %v2925 = vmul.f32 %v2351, %v2893
      %v2926 = vmul.f32 %v2354, %v2894
      %v2927 = vmul.f32 %v2395, %v2895
      %v2928 = vmul.f32 %v2398, %v2896
      %v2929 = vmul.f32 %v2439, %v2897
      %v2930 = vmul.f32 %v2442, %v2898
      %v2931 = vmul.f32 %v2483, %v2899
      %v2932 = vmul.f32 %v2486, %v2900
      %v2933 = vmul.f32 %v2527, %v2901
      %v2934 = vmul.f32 %v2530, %v2902
      %v2935 = vmul.f32 %v2571, %v2903
      %v2936 = vmul.f32 %v2574, %v2904
      %v2937 = vmul.f32 %v2615, %v2905
      %v2938 = vmul.f32 %v2618, %v2906
      %v2939 = vmul.f32 %v2659, %v2907
      %v2940 = vmul.f32 %v2662, %v2908
      %v2941 = vmul.f32 %v2703, %v2909
      %v2942 = vmul.f32 %v2706, %v2910
      %v2943 = vmul.f32 %v2747, %v2911
      %v2944 = vmul.f32 %v2750, %v2912
      %v2945 = vmul.f32 %v2791, %v2913
      %v2946 = vmul.f32 %v2794, %v2914
      %v2947 = vmul.f32 %v2835, %v2915
      %v2948 = vmul.f32 %v2838, %v2916
      %v2949 = vmul.f32 %v2879, %v2917
      %v2950 = vmul.f32 %v2882, %v2918
      %v2951 = vunpack.c.l.bf16 %v316
      %v2952 = vunpack.c.l.bf16 %v317
      %v2953 = vunpack.c.l.bf16 %v318
      %v2954 = vunpack.c.l.bf16 %v319
      %v2955 = vunpack.c.l.bf16 %v320
      %v2956 = vunpack.c.l.bf16 %v321
      %v2957 = vunpack.c.l.bf16 %v322
      %v2958 = vunpack.c.l.bf16 %v323
      %v2959 = vunpack.c.l.bf16 %v324
      %v2960 = vunpack.c.l.bf16 %v325
      %v2961 = vunpack.c.l.bf16 %v326
      %v2962 = vunpack.c.l.bf16 %v327
      %v2963 = vunpack.c.l.bf16 %v328
      %v2964 = vunpack.c.l.bf16 %v329
      %v2965 = vunpack.c.l.bf16 %v330
      %v2966 = vunpack.c.l.bf16 %v331
      %v2967 = vunpack.c.l.bf16 %v332
      %v2968 = vunpack.c.l.bf16 %v333
      %v2969 = vunpack.c.l.bf16 %v334
      %v2970 = vunpack.c.l.bf16 %v335
      %v2971 = vunpack.c.l.bf16 %v336
      %v2972 = vunpack.c.l.bf16 %v337
      %v2973 = vunpack.c.l.bf16 %v338
      %v2974 = vunpack.c.l.bf16 %v339
      %v2975 = vunpack.c.l.bf16 %v340
      %v2976 = vunpack.c.l.bf16 %v341
      %v2977 = vunpack.c.l.bf16 %v342
      %v2978 = vunpack.c.l.bf16 %v343
      %v2979 = vunpack.c.l.bf16 %v344
      %v2980 = vunpack.c.l.bf16 %v345
      %v2981 = vunpack.c.l.bf16 %v346
      %v2982 = vunpack.c.l.bf16 %v347
      %v2983 = vadd.f32 %v2919, %v2951
      %v2984 = vadd.f32 %v2920, %v2952
      %v2985 = vadd.f32 %v2921, %v2953
      %v2986 = vadd.f32 %v2922, %v2954
      %v2987 = vadd.f32 %v2923, %v2955
      %v2988 = vadd.f32 %v2924, %v2956
      %v2989 = vadd.f32 %v2925, %v2957
      %v2990 = vadd.f32 %v2926, %v2958
      %v2991 = vadd.f32 %v2927, %v2959
      %v2992 = vadd.f32 %v2928, %v2960
      %v2993 = vadd.f32 %v2929, %v2961
      %v2994 = vadd.f32 %v2930, %v2962
      %v2995 = vadd.f32 %v2931, %v2963
      %v2996 = vadd.f32 %v2932, %v2964
      %v2997 = vadd.f32 %v2933, %v2965
      %v2998 = vadd.f32 %v2934, %v2966
      %v2999 = vadd.f32 %v2935, %v2967
      %v3000 = vadd.f32 %v2936, %v2968
      %v3001 = vadd.f32 %v2937, %v2969
      %v3002 = vadd.f32 %v2938, %v2970
      %v3003 = vadd.f32 %v2939, %v2971
      %v3004 = vadd.f32 %v2940, %v2972
      %v3005 = vadd.f32 %v2941, %v2973
      %v3006 = vadd.f32 %v2942, %v2974
      %v3007 = vadd.f32 %v2943, %v2975
      %v3008 = vadd.f32 %v2944, %v2976
      %v3009 = vadd.f32 %v2945, %v2977
      %v3010 = vadd.f32 %v2946, %v2978
      %v3011 = vadd.f32 %v2947, %v2979
      %v3012 = vadd.f32 %v2948, %v2980
      %v3013 = vadd.f32 %v2949, %v2981
      %v3014 = vadd.f32 %v2950, %v2982
      %v3015 = vpack.c.bf16 %v2984, %v2983
      %v3016 = vpack.c.bf16 %v2986, %v2985
      %v3017 = vpack.c.bf16 %v2988, %v2987
      %v3018 = vpack.c.bf16 %v2990, %v2989
      %v3019 = vpack.c.bf16 %v2992, %v2991
      %v3020 = vpack.c.bf16 %v2994, %v2993
      %v3021 = vpack.c.bf16 %v2996, %v2995
      %v3022 = vpack.c.bf16 %v2998, %v2997
      %v3023 = vpack.c.bf16 %v3000, %v2999
      %v3024 = vpack.c.bf16 %v3002, %v3001
      %v3025 = vpack.c.bf16 %v3004, %v3003
      %v3026 = vpack.c.bf16 %v3006, %v3005
      %v3027 = vpack.c.bf16 %v3008, %v3007
      %v3028 = vpack.c.bf16 %v3010, %v3009
      %v3029 = vpack.c.bf16 %v3012, %v3011
      %v3030 = vpack.c.bf16 %v3014, %v3013
      %v3047 = vunpack.c.l.b16 %v3015
      %v3048 = vunpack.c.h.b16 %v3015
      %v3049 = vunpack.c.l.b16 %v3016
      %v3050 = vunpack.c.h.b16 %v3016
      %v3051 = vunpack.c.l.b16 %v3017
      %v3052 = vunpack.c.h.b16 %v3017
      %v3053 = vunpack.c.l.b16 %v3018
      %v3054 = vunpack.c.h.b16 %v3018
      %v3055 = vunpack.c.l.b16 %v3019
      %v3056 = vunpack.c.h.b16 %v3019
      %v3057 = vunpack.c.l.b16 %v3020
      %v3058 = vunpack.c.h.b16 %v3020
      %v3059 = vunpack.c.l.b16 %v3021
      %v3060 = vunpack.c.h.b16 %v3021
      %v3061 = vunpack.c.l.b16 %v3022
      %v3062 = vunpack.c.h.b16 %v3022
      %v3063 = vunpack.c.l.b16 %v3023
      %v3064 = vunpack.c.h.b16 %v3023
      %v3065 = vunpack.c.l.b16 %v3024
      %v3066 = vunpack.c.h.b16 %v3024
      %v3067 = vunpack.c.l.b16 %v3025
      %v3068 = vunpack.c.h.b16 %v3025
      %v3069 = vunpack.c.l.b16 %v3026
      %v3070 = vunpack.c.h.b16 %v3026
      %v3071 = vunpack.c.l.b16 %v3027
      %v3072 = vunpack.c.h.b16 %v3027
      %v3073 = vunpack.c.l.b16 %v3028
      %v3074 = vunpack.c.h.b16 %v3028
      %v3075 = vunpack.c.l.b16 %v3029
      %v3076 = vunpack.c.h.b16 %v3029
      %v3077 = vunpack.c.l.b16 %v3030
      %v3078 = vunpack.c.h.b16 %v3030
      %v3079 = vpack.c.b16 %v3047, %v3047
      %v3080 = vpack.c.b16 %v3048, %v3048
      %v3081 = vpack.c.b16 %v3049, %v3049
      %v3082 = vpack.c.b16 %v3050, %v3050
      %v3083 = vpack.c.b16 %v3051, %v3051
      %v3084 = vpack.c.b16 %v3052, %v3052
      %v3085 = vpack.c.b16 %v3053, %v3053
      %v3086 = vpack.c.b16 %v3054, %v3054
      %v3087 = vpack.c.b16 %v3055, %v3055
      %v3088 = vpack.c.b16 %v3056, %v3056
      %v3089 = vpack.c.b16 %v3057, %v3057
      %v3090 = vpack.c.b16 %v3058, %v3058
      %v3091 = vpack.c.b16 %v3059, %v3059
      %v3092 = vpack.c.b16 %v3060, %v3060
      %v3093 = vpack.c.b16 %v3061, %v3061
      %v3094 = vpack.c.b16 %v3062, %v3062
      %v3095 = vpack.c.b16 %v3063, %v3063
      %v3096 = vpack.c.b16 %v3064, %v3064
      %v3097 = vpack.c.b16 %v3065, %v3065
      %v3098 = vpack.c.b16 %v3066, %v3066
      %v3099 = vpack.c.b16 %v3067, %v3067
      %v3100 = vpack.c.b16 %v3068, %v3068
      %v3101 = vpack.c.b16 %v3069, %v3069
      %v3102 = vpack.c.b16 %v3070, %v3070
      %v3103 = vpack.c.b16 %v3071, %v3071
      %v3104 = vpack.c.b16 %v3072, %v3072
      %v3105 = vpack.c.b16 %v3073, %v3073
      %v3106 = vpack.c.b16 %v3074, %v3074
      %v3107 = vpack.c.b16 %v3075, %v3075
      %v3108 = vpack.c.b16 %v3076, %v3076
      %v3109 = vpack.c.b16 %v3077, %v3077
      %v3110 = vpack.c.b16 %v3078, %v3078
      %3143 = vst [vmem:[%s313] sm:$0xf] %v3079
      %3144 = vst [vmem:[%s313 + $0x4] sm:$0xf] %v3080
      %3145 = vst [vmem:[%s313 + $0x8] sm:$0xf] %v3081
      %3146 = vst [vmem:[%s313 + $0xc] sm:$0xf] %v3082
      %3147 = vst [vmem:[%s313 + $0x10] sm:$0xf] %v3083
      %3148 = vst [vmem:[%s313 + $0x14] sm:$0xf] %v3084
      %3149 = vst [vmem:[%s313 + $0x18] sm:$0xf] %v3085
      %3150 = vst [vmem:[%s313 + $0x1c] sm:$0xf] %v3086
      %3151 = vst [vmem:[%s313 + $0x20] sm:$0xf] %v3087
      %3152 = vst [vmem:[%s313 + $0x24] sm:$0xf] %v3088
      %3153 = vst [vmem:[%s313 + $0x28] sm:$0xf] %v3089
      %3154 = vst [vmem:[%s313 + $0x2c] sm:$0xf] %v3090
      %3155 = vst [vmem:[%s313 + $0x30] sm:$0xf] %v3091
      %3156 = vst [vmem:[%s313 + $0x34] sm:$0xf] %v3092
      %3157 = vst [vmem:[%s313 + $0x38] sm:$0xf] %v3093
      %3158 = vst [vmem:[%s313 + $0x3c] sm:$0xf] %v3094
      %3159 = vst [vmem:[%s313 + $0x40] sm:$0xf] %v3095
      %3160 = vst [vmem:[%s313 + $0x44] sm:$0xf] %v3096
      %3161 = vst [vmem:[%s313 + $0x48] sm:$0xf] %v3097
      %3162 = vst [vmem:[%s313 + $0x4c] sm:$0xf] %v3098
      %3163 = vst [vmem:[%s313 + $0x50] sm:$0xf] %v3099
      %3164 = vst [vmem:[%s313 + $0x54] sm:$0xf] %v3100
      %3165 = vst [vmem:[%s313 + $0x58] sm:$0xf] %v3101
      %3166 = vst [vmem:[%s313 + $0x5c] sm:$0xf] %v3102
      %3167 = vst [vmem:[%s313 + $0x60] sm:$0xf] %v3103
      %3168 = vst [vmem:[%s313 + $0x64] sm:$0xf] %v3104
      %3169 = vst [vmem:[%s313 + $0x68] sm:$0xf] %v3105
      %3170 = vst [vmem:[%s313 + $0x6c] sm:$0xf] %v3106
      %3171 = vst [vmem:[%s313 + $0x70] sm:$0xf] %v3107
      %3172 = vst [vmem:[%s313 + $0x74] sm:$0xf] %v3108
      %3173 = vst [vmem:[%s313 + $0x78] sm:$0xf] %v3109
      %3174 = vst [vmem:[%s313 + $0x7c] sm:$0xf] %v3110
      %s3175 = smul.u32 16, %s20
      %p3176 = scmp.lt.s32.totalorder %s3175, 31
      %s3177 = scalar_select %p3176, %s3175, 31
      %s3178 = smul.addr %s3177, 2
      %s3179 = smul.addr %s3178, 4
      %s3180 = scalar_lea.vmem %s8, %s3179
      // Predicated region
      $region53: #{axial_block_forward.5} parent=51 // pred_check
        %p3181 = pneg %p211
      $region54: #{axial_block_forward.5} parent=51 // pred_check_branch
        %3183 = sbr.rel (%p3181) target = $region56
      $region55: #{axial_block_forward.5} parent=51 // pred_region
        %s3184 = smul.u32 16, %s20
      $region56: #{axial_block_forward.5} parent=51 // pred_fallthru
        _
    $region52: #{axial_block_forward.5} parent=5 // pred_fallthru
      _
    %p3185 = scmp.le.s32.totalorder 2, %s15
    // Predicated region
    $region57: #{axial_block_forward.5} parent=5 // pred_check
      %p3186 = pneg %p3185
    $region58: #{axial_block_forward.5} parent=5 // pred_check_branch
      %3188 = sbr.rel (%p3186) target = $region60
    $region59: #{axial_block_forward.5} parent=5 // pred_region
      %s3189 = ssub.s32 %s15, 2
      // Predicated region
      $region61: #{axial_block_forward.5} parent=59 // pred_check
        %p3190 = pneg %p217
      $region62: #{axial_block_forward.5} parent=59 // pred_check_branch
        %3192 = sbr.rel (%p3190) target = $region64
      $region63: #{axial_block_forward.5} parent=59 // pred_region
        %s3193 = smul.u32 16, %s21
        %p3194 = scmp.lt.s32.totalorder %s3193, 31
        %s3195 = scalar_select %p3194, %s3193, 31
        %s3196 = smul.addr %s3195, 2
        %s3197 = smul.addr %s3196, 4
        %s3198 = scalar_lea.vmem %s8, %s3197
      $region64: #{axial_block_forward.5} parent=59 // pred_fallthru
        _
    $region60: #{axial_block_forward.5} parent=5 // pred_fallthru
      _
  $region6: #{axial_block_forward.5} parent=0 // loop_footer
    %s19 = sadd.s32 1, %s15
  $region7: #{axial_block_forward.5} parent=0 // loop_footer_branch
    %14 = sbr.rel target = $region3
  $region8: #{axial_block_forward.5} parent=0 // loop_exit
    _

</llo_original>
